<compile_context>
chip_gen: v6e
topology: v6e:2x2x1
jax: 0.10.0
libtpu: 0.0.40
codegen_flags: <defaults>
</compile_context>

<pallas_src>
import jax
import jax.numpy as jnp
from jax.experimental import pallas as pl
from jax.experimental.pallas import tpu as pltpu


# ---------------------------------------------------------------------------
# Model dimensions (fixed by the PyTorch module: MNIST 1x28x28 input)
# ---------------------------------------------------------------------------
IMG = 28
K = 5
C1 = 20                      # conv1 out channels
C2 = 50                      # conv2 out channels
CONV1_OUT = IMG - K + 1      # 24
POOL1 = CONV1_OUT // 2       # 12
CONV2_OUT = POOL1 - K + 1    # 8
POOL2 = CONV2_OUT // 2       # 4
HIDDEN = 500
NCLASS = 10
FLAT = POOL2 * POOL2 * C2    # 800

LANE_PAD = 256               # one "spatial-parity half" of a conv output row
HID_PAD = 512                # fc1 hidden padded to lane multiple
OUT_PAD = 128                # class logits padded to one full lane tile
TILE_B = 128                 # images per grid step (review: 64-256; 128 is
                             # safe on v5e/v6e/v7x; keep >=2 grid steps on v7x)


# ---------------------------------------------------------------------------
# Fused forward kernel (one batch tile per grid step)
# ---------------------------------------------------------------------------
def _simplenet_kernel(x_ref, wband_ref, b1_ref, w2_ref, b2_ref,
                      wf1_ref, bf1_ref, wf2_ref, bf2_ref, o_ref, p1_ref):
    # x_ref    : (24, B, 140)  compute-dtype  height-im2col'd input rows
    # wband_ref: (140, 512)    conv1 banded weights, cols = jpar*256 + q*20 + c
    # b1_ref   : (1, 512) f32
    # w2_ref   : (1280, 512)   conv2 banded weights, rows = dp*256 + q*20 + ci
    # b2_ref   : (1, 512) f32
    # wf1_ref  : (1024, 512)   fc1 weights, rows = s*256 + t*50 + co (pads 0)
    # bf1_ref  : (1, 512) f32
    # wf2_ref  : (512, 128)
    # bf2_ref  : (1, 128) f32
    # o_ref    : (B, 128) f32  log_softmax (only first 10 lanes meaningful)
    # p1_ref   : scratch (12, B, 256) compute-dtype   pooled conv1
    tile_b = x_ref.shape[1]
    cdt = wband_ref.dtype

    # ---- conv1 + bias + ReLU: ONE wide-K MXU matmul ------------------------
    lhs1 = x_ref[...].reshape(CONV1_OUT * tile_b, K * IMG)       # rows (i, b)
    c1 = jnp.dot(lhs1, wband_ref[...], preferred_element_type=jnp.float32)
    c1 = jnp.maximum(c1 + b1_ref[...], 0.0)                      # (24B, 512) f32
    c1 = c1.reshape(CONV1_OUT, tile_b, 2 * LANE_PAD)             # plane = row i

    # ---- max_pool2d(2,2) #1: adjacent-plane max + aligned half max ---------
    # column layout is (jpar, q, c) with j = 2q + jpar, so the width pool is
    # just max of the two 256-lane halves (no lane compaction, no masked st).
    for p in range(POOL1):
        a = jnp.maximum(c1[2 * p], c1[2 * p + 1])                # (B, 512)
        p1_ref[p] = jnp.maximum(a[:, :LANE_PAD], a[:, LANE_PAD:]).astype(cdt)

    # ---- conv2 + bias + ReLU: ONE banded MXU matmul ------------------------
    # lhs = 5 height-shifted groups of 8 planes, each a 256-lane slab so the
    # concatenation is at 128-aligned lane offsets (shift-free).
    lhs2 = jnp.concatenate(
        [p1_ref[dp:dp + CONV2_OUT].reshape(CONV2_OUT * tile_b, LANE_PAD)
         for dp in range(K)],
        axis=1)                                                  # (8B, 1280)
    y2 = jnp.dot(lhs2, w2_ref[...], preferred_element_type=jnp.float32)
    y2 = jnp.maximum(y2 + b2_ref[...], 0.0)                      # (8B, 512) f32
    y2 = y2.reshape(CONV2_OUT, tile_b, 2 * LANE_PAD)             # plane = row u

    # ---- max_pool2d(2,2) #2 + flatten (in-register, aligned concat) --------
    flats = []
    for s in range(POOL2):
        a = jnp.maximum(y2[2 * s], y2[2 * s + 1])                # (B, 512)
        flats.append(jnp.maximum(a[:, :LANE_PAD], a[:, LANE_PAD:]).astype(cdt))
    flat = jnp.concatenate(flats, axis=1)                        # (B, 1024)

    # ---- fc1 + ReLU, fc2 + log_softmax (128-lane padded output) ------------
    h1 = jnp.dot(flat, wf1_ref[...], preferred_element_type=jnp.float32)
    h1 = jnp.maximum(h1 + bf1_ref[...], 0.0)                     # (B, 512) f32
    logits = jnp.dot(h1.astype(cdt), wf2_ref[...],
                     preferred_element_type=jnp.float32) + bf2_ref[...]
    lg = logits[:, :NCLASS]
    mx = jnp.max(lg, axis=-1, keepdims=True)
    lse = mx + jnp.log(jnp.sum(jnp.exp(lg - mx), axis=-1, keepdims=True))
    o_ref[...] = (logits - lse).astype(o_ref.dtype)


# ---------------------------------------------------------------------------
# Parameter init (PyTorch layouts) and one-time preprocessing
# ---------------------------------------------------------------------------
def init_params(key):
    ks = jax.random.split(key, 8)
    s = 0.1
    return {
        "w_conv1": s * jax.random.normal(ks[0], (C1, 1, K, K), jnp.float32),
        "b_conv1": s * jax.random.normal(ks[1], (C1,), jnp.float32),
        "w_conv2": s * jax.random.normal(ks[2], (C2, C1, K, K), jnp.float32),
        "b_conv2": s * jax.random.normal(ks[3], (C2,), jnp.float32),
        "w_fc1": s * jax.random.normal(ks[4], (HIDDEN, FLAT), jnp.float32),
        "b_fc1": s * jax.random.normal(ks[5], (HIDDEN,), jnp.float32),
        "w_fc2": s * jax.random.normal(ks[6], (NCLASS, HIDDEN), jnp.float32),
        "b_fc2": s * jax.random.normal(ks[7], (NCLASS,), jnp.float32),
    }


def prepare_params(p, compute_dtype=jnp.bfloat16):
    """Pre-transpose / band / pad weights ONCE into the kernel's layouts."""
    f32 = jnp.float32

    # conv1 banded weights: row = di*28 + w ; col = jpar*256 + q*20 + c,
    # with output width j = 2q + jpar (the pool-1 width interleave is absorbed
    # into the column order so pooling needs no compaction).
    w1 = p["w_conv1"].reshape(C1, K, K)                          # [c, di, dj]
    q = jnp.arange(POOL1)
    jpar = jnp.arange(2)
    w = jnp.arange(IMG)
    j = 2 * q[None, :] + jpar[:, None]                           # (2, 12)
    dj = w[:, None, None] - j[None, :, :]                        # (28, 2, 12)
    valid = ((dj >= 0) & (dj < K)).astype(f32)
    band = w1[:, :, jnp.clip(dj, 0, K - 1)]                      # (20,5,28,2,12)
    band = band * valid[None, None]
    band = jnp.transpose(band, (1, 2, 3, 4, 0))                  # [di,w,jpar,q,c]
    band = band.reshape(K, IMG, 2, POOL1 * C1)
    band = jnp.pad(band, ((0, 0), (0, 0), (0, 0), (0, LANE_PAD - POOL1 * C1)))
    wband = band.reshape(K * IMG, 2 * LANE_PAD)                  # (140, 512)

    b1half = jnp.pad(jnp.tile(p["b_conv1"], POOL1), (0, LANE_PAD - POOL1 * C1))
    b1 = jnp.concatenate([b1half, b1half]).reshape(1, 2 * LANE_PAD)

    # conv2 banded weights: row = dp*256 + q*20 + ci ; col = vpar*256 + t*50 + co,
    # with output width v = 2t + vpar.
    w2 = p["w_conv2"]                                            # [co,ci,dp,dq]
    t = jnp.arange(POOL2)
    vpar = jnp.arange(2)
    qq = jnp.arange(POOL1)
    v = 2 * t[None, :] + vpar[:, None]                           # (2, 4)
    dq = qq[:, None, None] - v[None, :, :]                       # (12, 2, 4)
    valid2 = ((dq >= 0) & (dq < K)).astype(f32)
    band2 = w2[:, :, :, jnp.clip(dq, 0, K - 1)]                  # (50,20,5,12,2,4)
    band2 = band2 * valid2[None, None, None]
    band2 = jnp.transpose(band2, (2, 3, 1, 4, 5, 0))             # [dp,q,ci,vpar,t,co]
    band2 = band2.reshape(K, POOL1 * C1, 2, POOL2 * C2)
    band2 = jnp.pad(band2, ((0, 0), (0, LANE_PAD - POOL1 * C1),
                            (0, 0), (0, LANE_PAD - POOL2 * C2)))
    w2band = band2.reshape(K * LANE_PAD, 2 * LANE_PAD)           # (1280, 512)

    b2half = jnp.pad(jnp.tile(p["b_conv2"], POOL2), (0, LANE_PAD - POOL2 * C2))
    b2 = jnp.concatenate([b2half, b2half]).reshape(1, 2 * LANE_PAD)

    # fc1: kernel flat column = s*256 + t*50 + co  <->  PyTorch co*16 + s*4 + t
    wf1 = p["w_fc1"].reshape(HIDDEN, C2, POOL2, POOL2)           # [h, co, s, t]
    wf1 = jnp.transpose(wf1, (2, 3, 1, 0))                       # [s, t, co, h]
    wf1 = wf1.reshape(POOL2, POOL2 * C2, HIDDEN)
    wf1 = jnp.pad(wf1, ((0, 0), (0, LANE_PAD - POOL2 * C2), (0, HID_PAD - HIDDEN)))
    wf1 = wf1.reshape(POOL2 * LANE_PAD, HID_PAD)                 # (1024, 512)
    bf1 = jnp.pad(p["b_fc1"], (0, HID_PAD - HIDDEN)).reshape(1, HID_PAD)

    # fc2 padded to 128 output lanes (pad weight cols / bias are zero; the
    # log-softmax only reduces over the first NCLASS lanes).
    wf2 = jnp.pad(jnp.transpose(p["w_fc2"]),
                  ((0, HID_PAD - HIDDEN), (0, OUT_PAD - NCLASS)))
    bf2 = jnp.pad(p["b_fc2"], (0, OUT_PAD - NCLASS)).reshape(1, OUT_PAD)

    return {
        "wband": wband.astype(compute_dtype),
        "b1": b1.astype(f32),
        "w2band": w2band.astype(compute_dtype),
        "b2": b2.astype(f32),
        "wf1": wf1.astype(compute_dtype),
        "bf1": bf1.astype(f32),
        "wf2": wf2.astype(compute_dtype),
        "bf2": bf2.astype(f32),
    }


# ---------------------------------------------------------------------------
# Forward wrapper: pre-layout input, one fused gridded pallas_call
# ---------------------------------------------------------------------------
@jax.jit
def simplenet_forward(x_nchw, params):
    n, c, h, w = x_nchw.shape
    assert (c, h, w) == (1, IMG, IMG), "Simplenet requires 1x28x28 inputs"
    cdt = params["wband"].dtype

    # clamp the tile for tiny batches (still a multiple of 8 sublanes)
    tile = min(TILE_B, pl.cdiv(n, 8) * 8)
    n_pad = pl.cdiv(n, tile) * tile

    # One-time input pre-layout (review: avoid per-di in-kernel sublane repack):
    #   [h, b, w] transpose + height-axis im2col -> (24, N, 140), kernel-dtype.
    xt = jnp.transpose(x_nchw.reshape(n, IMG, IMG).astype(cdt), (1, 0, 2))
    xcol = jnp.concatenate([xt[di:di + CONV1_OUT] for di in range(K)], axis=2)
    if n_pad != n:
        xcol = jnp.pad(xcol, ((0, 0), (0, n_pad - n), (0, 0)))

    const = lambda i: (0, 0)
    out = pl.pallas_call(
        _simplenet_kernel,
        out_shape=jax.ShapeDtypeStruct((n_pad, OUT_PAD), jnp.float32),
        grid=(n_pad // tile,),
        in_specs=[
            pl.BlockSpec((CONV1_OUT, tile, K * IMG), lambda i: (0, i, 0)),  # x
            pl.BlockSpec((K * IMG, 2 * LANE_PAD), const),        # wband (resident)
            pl.BlockSpec((1, 2 * LANE_PAD), const),              # b1
            pl.BlockSpec((K * LANE_PAD, 2 * LANE_PAD), const),   # w2band
            pl.BlockSpec((1, 2 * LANE_PAD), const),              # b2
            pl.BlockSpec((POOL2 * LANE_PAD, HID_PAD), const),    # wf1
            pl.BlockSpec((1, HID_PAD), const),                   # bf1
            pl.BlockSpec((HID_PAD, OUT_PAD), const),             # wf2
            pl.BlockSpec((1, OUT_PAD), const),                   # bf2
        ],
        out_specs=pl.BlockSpec((tile, OUT_PAD), lambda i: (i, 0)),
        scratch_shapes=[pltpu.VMEM((POOL1, tile, LANE_PAD), cdt)],
        compiler_params=pltpu.CompilerParams(
            dimension_semantics=("parallel",),
            vmem_limit_bytes=48 * 1024 * 1024,
        ),
    )(xcol, params["wband"], params["b1"], params["w2band"], params["b2"],
      params["wf1"], params["bf1"], params["wf2"], params["bf2"])
    return out[:n, :NCLASS]


# ---------------------------------------------------------------------------
# Pure-JAX reference (mirrors the PyTorch module, f32)
# ---------------------------------------------------------------------------
def _maxpool_nchw(y):
    n, c, h, w = y.shape
    return y.reshape(n, c, h // 2, 2, w // 2, 2).max(axis=(3, 5))


def reference_forward(x_nchw, p):
    x = x_nchw.astype(jnp.float32)
    dn = ("NCHW", "OIHW", "NCHW")
    y = jax.lax.conv_general_dilated(x, p["w_conv1"], (1, 1), "VALID",
                                     dimension_numbers=dn)
    y = jax.nn.relu(y + p["b_conv1"][None, :, None, None])
    y = _maxpool_nchw(y)
    y = jax.lax.conv_general_dilated(y, p["w_conv2"], (1, 1), "VALID",
                                     dimension_numbers=dn)
    y = jax.nn.relu(y + p["b_conv2"][None, :, None, None])
    y = _maxpool_nchw(y)
    y = y.reshape(y.shape[0], -1)
    y = jax.nn.relu(y @ p["w_fc1"].T + p["b_fc1"])
    y = y @ p["w_fc2"].T + p["b_fc2"]
    return jax.nn.log_softmax(y, axis=-1)


if __name__ == "__main__":
    key = jax.random.PRNGKey(0)
    k_x, k_p = jax.random.split(key)
    raw = init_params(k_p)

    # 1) Tight layout/permutation check: all-f32 weights, small batch.
    x_small = jax.random.normal(k_x, (2, 1, IMG, IMG), dtype=jnp.float32)
    params_f32 = prepare_params(raw, jnp.float32)
    out = jax.block_until_ready(simplenet_forward(x_small, params_f32))
    assert out.shape == (2, NCLASS)
    assert jnp.allclose(jnp.sum(jnp.exp(out), axis=1), 1.0, atol=1e-4)
    ref = reference_forward(x_small, raw)
    err = float(jnp.max(jnp.abs(out - ref)))
    assert err < 2e-3, f"f32 layout check failed, max err {err}"

    # 2) Fast bf16 path, large tile: batch 200 -> 2 grid steps of TILE_B=128
    #    (exercises batch padding and keeps both v7x TensorCores busy).
    x_big = jax.random.normal(k_x, (200, 1, IMG, IMG), dtype=jnp.float32)
    params_bf16 = prepare_params(raw, jnp.bfloat16)
    out_b = jax.block_until_ready(simplenet_forward(x_big, params_bf16))
    assert out_b.shape == (200, NCLASS)
    assert jnp.allclose(jnp.sum(jnp.exp(out_b), axis=1), 1.0, atol=1e-3)
    ref_b = reference_forward(x_big, raw)
    err_b = float(jnp.max(jnp.abs(out_b - ref_b)))
    assert err_b < 0.25, f"bf16 path check failed, max err {err_b}"

    print("KERNEL_OK")
</pallas_src>

<mosaic_0001>
module attributes {stable_mosaic.version = 11 : i64} {
  func.func @_simplenet_kernel(%arg0: i32, %arg1: memref<24x8x140xf32, #tpu.memory_space<vmem>>, %arg2: memref<140x512xf32, #tpu.memory_space<vmem>>, %arg3: memref<1x512xf32, #tpu.memory_space<vmem>>, %arg4: memref<1280x512xf32, #tpu.memory_space<vmem>>, %arg5: memref<1x512xf32, #tpu.memory_space<vmem>>, %arg6: memref<1024x512xf32, #tpu.memory_space<vmem>>, %arg7: memref<1x512xf32, #tpu.memory_space<vmem>>, %arg8: memref<512x128xf32, #tpu.memory_space<vmem>>, %arg9: memref<1x128xf32, #tpu.memory_space<vmem>>, %arg10: memref<8x128xf32, #tpu.memory_space<vmem>>, %arg11: memref<12x8x256xf32, #tpu.memory_space<vmem>>) attributes {dimension_semantics = [#tpu.dimension_semantics<parallel>], iteration_bounds = array<i64: 1>, scalar_prefetch = 0 : i64, scratch_operands = 1 : i64, tpu.core_type = #tpu.core_type<tc>, window_params = [{transform_indices = @transform_0, window_bounds = array<i64: 24, 8, 140>}, {pipeline_mode = #tpu.pipeline_mode<synchronous>, transform_indices = @transform_1, window_bounds = array<i64: 140, 512>}, {pipeline_mode = #tpu.pipeline_mode<synchronous>, transform_indices = @transform_2, window_bounds = array<i64: 1, 512>}, {pipeline_mode = #tpu.pipeline_mode<synchronous>, transform_indices = @transform_3, window_bounds = array<i64: 1280, 512>}, {pipeline_mode = #tpu.pipeline_mode<synchronous>, transform_indices = @transform_4, window_bounds = array<i64: 1, 512>}, {pipeline_mode = #tpu.pipeline_mode<synchronous>, transform_indices = @transform_5, window_bounds = array<i64: 1024, 512>}, {pipeline_mode = #tpu.pipeline_mode<synchronous>, transform_indices = @transform_6, window_bounds = array<i64: 1, 512>}, {pipeline_mode = #tpu.pipeline_mode<synchronous>, transform_indices = @transform_7, window_bounds = array<i64: 512, 128>}, {pipeline_mode = #tpu.pipeline_mode<synchronous>, transform_indices = @transform_8, window_bounds = array<i64: 1, 128>}, {transform_indices = @transform_9, window_bounds = array<i64: 8, 128>}]} {
    %c0 = arith.constant 0 : index
    %c0_0 = arith.constant 0 : index
    %c0_1 = arith.constant 0 : index
    %0 = vector.load %arg1[%c0, %c0_0, %c0_1] : memref<24x8x140xf32, #tpu.memory_space<vmem>>, vector<24x8x140xf32>
    %1 = vector.shape_cast %0 : vector<24x8x140xf32> to vector<192x140xf32>
    %c0_2 = arith.constant 0 : index
    %c0_3 = arith.constant 0 : index
    %2 = vector.load %arg2[%c0_2, %c0_3] : memref<140x512xf32, #tpu.memory_space<vmem>>, vector<140x512xf32>
    %cst = arith.constant dense<0.000000e+00> : vector<192x512xf32>
    %3 = tpu.matmul %1, %2, %cst {dimension_numbers = #tpu.dot_dimension_numbers<[1], [0], [0], [1], [0, 0, 1, 1], [], []>} : vector<192x140xf32>, vector<140x512xf32>, vector<192x512xf32> -> vector<192x512xf32>
    %c0_4 = arith.constant 0 : index
    %c0_5 = arith.constant 0 : index
    %4 = vector.load %arg3[%c0_4, %c0_5] : memref<1x512xf32, #tpu.memory_space<vmem>>, vector<1x512xf32>
    %5 = vector.broadcast %4 : vector<1x512xf32> to vector<192x512xf32>
    %6 = arith.addf %3, %5 : vector<192x512xf32>
    %cst_6 = arith.constant 0.000000e+00 : f32
    %7 = vector.broadcast %cst_6 : f32 to vector<192x512xf32>
    %8 = arith.maximumf %6, %7 : vector<192x512xf32>
    %9 = vector.shape_cast %8 : vector<192x512xf32> to vector<24x8x512xf32>
    %10 = vector.extract_strided_slice %9 {offsets = [0, 0, 0], sizes = [1, 8, 512], strides = [1, 1, 1]} : vector<24x8x512xf32> to vector<1x8x512xf32>
    %11 = vector.shape_cast %10 : vector<1x8x512xf32> to vector<8x512xf32>
    %12 = vector.extract_strided_slice %9 {offsets = [1, 0, 0], sizes = [1, 8, 512], strides = [1, 1, 1]} : vector<24x8x512xf32> to vector<1x8x512xf32>
    %13 = vector.shape_cast %12 : vector<1x8x512xf32> to vector<8x512xf32>
    %14 = arith.maximumf %11, %13 : vector<8x512xf32>
    %15 = vector.extract_strided_slice %14 {offsets = [0, 0], sizes = [8, 256], strides = [1, 1]} : vector<8x512xf32> to vector<8x256xf32>
    %16 = vector.extract_strided_slice %14 {offsets = [0, 256], sizes = [8, 256], strides = [1, 1]} : vector<8x512xf32> to vector<8x256xf32>
    %17 = arith.maximumf %15, %16 : vector<8x256xf32>
    %c0_7 = arith.constant 0 : index
    %c0_8 = arith.constant 0 : index
    %c0_9 = arith.constant 0 : index
    %18 = vector.load %arg11[%c0_7, %c0_8, %c0_9] : memref<12x8x256xf32, #tpu.memory_space<vmem>>, vector<1x8x256xf32>
    %19 = vector.shape_cast %18 : vector<1x8x256xf32> to vector<8x256xf32>
    %20 = vector.shape_cast %17 : vector<8x256xf32> to vector<1x8x256xf32>
    tpu.vector_store %arg11[%c0_7, %c0_8, %c0_9], %20 {strides = array<i32>} : memref<12x8x256xf32, #tpu.memory_space<vmem>>, vector<1x8x256xf32>,
    %21 = vector.extract_strided_slice %9 {offsets = [2, 0, 0], sizes = [1, 8, 512], strides = [1, 1, 1]} : vector<24x8x512xf32> to vector<1x8x512xf32>
    %22 = vector.shape_cast %21 : vector<1x8x512xf32> to vector<8x512xf32>
    %23 = vector.extract_strided_slice %9 {offsets = [3, 0, 0], sizes = [1, 8, 512], strides = [1, 1, 1]} : vector<24x8x512xf32> to vector<1x8x512xf32>
    %24 = vector.shape_cast %23 : vector<1x8x512xf32> to vector<8x512xf32>
    %25 = arith.maximumf %22, %24 : vector<8x512xf32>
    %26 = vector.extract_strided_slice %25 {offsets = [0, 0], sizes = [8, 256], strides = [1, 1]} : vector<8x512xf32> to vector<8x256xf32>
    %27 = vector.extract_strided_slice %25 {offsets = [0, 256], sizes = [8, 256], strides = [1, 1]} : vector<8x512xf32> to vector<8x256xf32>
    %28 = arith.maximumf %26, %27 : vector<8x256xf32>
    %c1 = arith.constant 1 : index
    %c0_10 = arith.constant 0 : index
    %c0_11 = arith.constant 0 : index
    %29 = vector.load %arg11[%c1, %c0_10, %c0_11] : memref<12x8x256xf32, #tpu.memory_space<vmem>>, vector<1x8x256xf32>
    %30 = vector.shape_cast %29 : vector<1x8x256xf32> to vector<8x256xf32>
    %31 = vector.shape_cast %28 : vector<8x256xf32> to vector<1x8x256xf32>
    tpu.vector_store %arg11[%c1, %c0_10, %c0_11], %31 {strides = array<i32>} : memref<12x8x256xf32, #tpu.memory_space<vmem>>, vector<1x8x256xf32>,
    %32 = vector.extract_strided_slice %9 {offsets = [4, 0, 0], sizes = [1, 8, 512], strides = [1, 1, 1]} : vector<24x8x512xf32> to vector<1x8x512xf32>
    %33 = vector.shape_cast %32 : vector<1x8x512xf32> to vector<8x512xf32>
    %34 = vector.extract_strided_slice %9 {offsets = [5, 0, 0], sizes = [1, 8, 512], strides = [1, 1, 1]} : vector<24x8x512xf32> to vector<1x8x512xf32>
    %35 = vector.shape_cast %34 : vector<1x8x512xf32> to vector<8x512xf32>
    %36 = arith.maximumf %33, %35 : vector<8x512xf32>
    %37 = vector.extract_strided_slice %36 {offsets = [0, 0], sizes = [8, 256], strides = [1, 1]} : vector<8x512xf32> to vector<8x256xf32>
    %38 = vector.extract_strided_slice %36 {offsets = [0, 256], sizes = [8, 256], strides = [1, 1]} : vector<8x512xf32> to vector<8x256xf32>
    %39 = arith.maximumf %37, %38 : vector<8x256xf32>
    %c2 = arith.constant 2 : index
    %c0_12 = arith.constant 0 : index
    %c0_13 = arith.constant 0 : index
    %40 = vector.load %arg11[%c2, %c0_12, %c0_13] : memref<12x8x256xf32, #tpu.memory_space<vmem>>, vector<1x8x256xf32>
    %41 = vector.shape_cast %40 : vector<1x8x256xf32> to vector<8x256xf32>
    %42 = vector.shape_cast %39 : vector<8x256xf32> to vector<1x8x256xf32>
    tpu.vector_store %arg11[%c2, %c0_12, %c0_13], %42 {strides = array<i32>} : memref<12x8x256xf32, #tpu.memory_space<vmem>>, vector<1x8x256xf32>,
    %43 = vector.extract_strided_slice %9 {offsets = [6, 0, 0], sizes = [1, 8, 512], strides = [1, 1, 1]} : vector<24x8x512xf32> to vector<1x8x512xf32>
    %44 = vector.shape_cast %43 : vector<1x8x512xf32> to vector<8x512xf32>
    %45 = vector.extract_strided_slice %9 {offsets = [7, 0, 0], sizes = [1, 8, 512], strides = [1, 1, 1]} : vector<24x8x512xf32> to vector<1x8x512xf32>
    %46 = vector.shape_cast %45 : vector<1x8x512xf32> to vector<8x512xf32>
    %47 = arith.maximumf %44, %46 : vector<8x512xf32>
    %48 = vector.extract_strided_slice %47 {offsets = [0, 0], sizes = [8, 256], strides = [1, 1]} : vector<8x512xf32> to vector<8x256xf32>
    %49 = vector.extract_strided_slice %47 {offsets = [0, 256], sizes = [8, 256], strides = [1, 1]} : vector<8x512xf32> to vector<8x256xf32>
    %50 = arith.maximumf %48, %49 : vector<8x256xf32>
    %c3 = arith.constant 3 : index
    %c0_14 = arith.constant 0 : index
    %c0_15 = arith.constant 0 : index
    %51 = vector.load %arg11[%c3, %c0_14, %c0_15] : memref<12x8x256xf32, #tpu.memory_space<vmem>>, vector<1x8x256xf32>
    %52 = vector.shape_cast %51 : vector<1x8x256xf32> to vector<8x256xf32>
    %53 = vector.shape_cast %50 : vector<8x256xf32> to vector<1x8x256xf32>
    tpu.vector_store %arg11[%c3, %c0_14, %c0_15], %53 {strides = array<i32>} : memref<12x8x256xf32, #tpu.memory_space<vmem>>, vector<1x8x256xf32>,
    %54 = vector.extract_strided_slice %9 {offsets = [8, 0, 0], sizes = [1, 8, 512], strides = [1, 1, 1]} : vector<24x8x512xf32> to vector<1x8x512xf32>
    %55 = vector.shape_cast %54 : vector<1x8x512xf32> to vector<8x512xf32>
    %56 = vector.extract_strided_slice %9 {offsets = [9, 0, 0], sizes = [1, 8, 512], strides = [1, 1, 1]} : vector<24x8x512xf32> to vector<1x8x512xf32>
    %57 = vector.shape_cast %56 : vector<1x8x512xf32> to vector<8x512xf32>
    %58 = arith.maximumf %55, %57 : vector<8x512xf32>
    %59 = vector.extract_strided_slice %58 {offsets = [0, 0], sizes = [8, 256], strides = [1, 1]} : vector<8x512xf32> to vector<8x256xf32>
    %60 = vector.extract_strided_slice %58 {offsets = [0, 256], sizes = [8, 256], strides = [1, 1]} : vector<8x512xf32> to vector<8x256xf32>
    %61 = arith.maximumf %59, %60 : vector<8x256xf32>
    %c4 = arith.constant 4 : index
    %c0_16 = arith.constant 0 : index
    %c0_17 = arith.constant 0 : index
    %62 = vector.load %arg11[%c4, %c0_16, %c0_17] : memref<12x8x256xf32, #tpu.memory_space<vmem>>, vector<1x8x256xf32>
    %63 = vector.shape_cast %62 : vector<1x8x256xf32> to vector<8x256xf32>
    %64 = vector.shape_cast %61 : vector<8x256xf32> to vector<1x8x256xf32>
    tpu.vector_store %arg11[%c4, %c0_16, %c0_17], %64 {strides = array<i32>} : memref<12x8x256xf32, #tpu.memory_space<vmem>>, vector<1x8x256xf32>,
    %65 = vector.extract_strided_slice %9 {offsets = [10, 0, 0], sizes = [1, 8, 512], strides = [1, 1, 1]} : vector<24x8x512xf32> to vector<1x8x512xf32>
    %66 = vector.shape_cast %65 : vector<1x8x512xf32> to vector<8x512xf32>
    %67 = vector.extract_strided_slice %9 {offsets = [11, 0, 0], sizes = [1, 8, 512], strides = [1, 1, 1]} : vector<24x8x512xf32> to vector<1x8x512xf32>
    %68 = vector.shape_cast %67 : vector<1x8x512xf32> to vector<8x512xf32>
    %69 = arith.maximumf %66, %68 : vector<8x512xf32>
    %70 = vector.extract_strided_slice %69 {offsets = [0, 0], sizes = [8, 256], strides = [1, 1]} : vector<8x512xf32> to vector<8x256xf32>
    %71 = vector.extract_strided_slice %69 {offsets = [0, 256], sizes = [8, 256], strides = [1, 1]} : vector<8x512xf32> to vector<8x256xf32>
    %72 = arith.maximumf %70, %71 : vector<8x256xf32>
    %c5 = arith.constant 5 : index
    %c0_18 = arith.constant 0 : index
    %c0_19 = arith.constant 0 : index
    %73 = vector.load %arg11[%c5, %c0_18, %c0_19] : memref<12x8x256xf32, #tpu.memory_space<vmem>>, vector<1x8x256xf32>
    %74 = vector.shape_cast %73 : vector<1x8x256xf32> to vector<8x256xf32>
    %75 = vector.shape_cast %72 : vector<8x256xf32> to vector<1x8x256xf32>
    tpu.vector_store %arg11[%c5, %c0_18, %c0_19], %75 {strides = array<i32>} : memref<12x8x256xf32, #tpu.memory_space<vmem>>, vector<1x8x256xf32>,
    %76 = vector.extract_strided_slice %9 {offsets = [12, 0, 0], sizes = [1, 8, 512], strides = [1, 1, 1]} : vector<24x8x512xf32> to vector<1x8x512xf32>
    %77 = vector.shape_cast %76 : vector<1x8x512xf32> to vector<8x512xf32>
    %78 = vector.extract_strided_slice %9 {offsets = [13, 0, 0], sizes = [1, 8, 512], strides = [1, 1, 1]} : vector<24x8x512xf32> to vector<1x8x512xf32>
    %79 = vector.shape_cast %78 : vector<1x8x512xf32> to vector<8x512xf32>
    %80 = arith.maximumf %77, %79 : vector<8x512xf32>
    %81 = vector.extract_strided_slice %80 {offsets = [0, 0], sizes = [8, 256], strides = [1, 1]} : vector<8x512xf32> to vector<8x256xf32>
    %82 = vector.extract_strided_slice %80 {offsets = [0, 256], sizes = [8, 256], strides = [1, 1]} : vector<8x512xf32> to vector<8x256xf32>
    %83 = arith.maximumf %81, %82 : vector<8x256xf32>
    %c6 = arith.constant 6 : index
    %c0_20 = arith.constant 0 : index
    %c0_21 = arith.constant 0 : index
    %84 = vector.load %arg11[%c6, %c0_20, %c0_21] : memref<12x8x256xf32, #tpu.memory_space<vmem>>, vector<1x8x256xf32>
    %85 = vector.shape_cast %84 : vector<1x8x256xf32> to vector<8x256xf32>
    %86 = vector.shape_cast %83 : vector<8x256xf32> to vector<1x8x256xf32>
    tpu.vector_store %arg11[%c6, %c0_20, %c0_21], %86 {strides = array<i32>} : memref<12x8x256xf32, #tpu.memory_space<vmem>>, vector<1x8x256xf32>,
    %87 = vector.extract_strided_slice %9 {offsets = [14, 0, 0], sizes = [1, 8, 512], strides = [1, 1, 1]} : vector<24x8x512xf32> to vector<1x8x512xf32>
    %88 = vector.shape_cast %87 : vector<1x8x512xf32> to vector<8x512xf32>
    %89 = vector.extract_strided_slice %9 {offsets = [15, 0, 0], sizes = [1, 8, 512], strides = [1, 1, 1]} : vector<24x8x512xf32> to vector<1x8x512xf32>
    %90 = vector.shape_cast %89 : vector<1x8x512xf32> to vector<8x512xf32>
    %91 = arith.maximumf %88, %90 : vector<8x512xf32>
    %92 = vector.extract_strided_slice %91 {offsets = [0, 0], sizes = [8, 256], strides = [1, 1]} : vector<8x512xf32> to vector<8x256xf32>
    %93 = vector.extract_strided_slice %91 {offsets = [0, 256], sizes = [8, 256], strides = [1, 1]} : vector<8x512xf32> to vector<8x256xf32>
    %94 = arith.maximumf %92, %93 : vector<8x256xf32>
    %c7 = arith.constant 7 : index
    %c0_22 = arith.constant 0 : index
    %c0_23 = arith.constant 0 : index
    %95 = vector.load %arg11[%c7, %c0_22, %c0_23] : memref<12x8x256xf32, #tpu.memory_space<vmem>>, vector<1x8x256xf32>
    %96 = vector.shape_cast %95 : vector<1x8x256xf32> to vector<8x256xf32>
    %97 = vector.shape_cast %94 : vector<8x256xf32> to vector<1x8x256xf32>
    tpu.vector_store %arg11[%c7, %c0_22, %c0_23], %97 {strides = array<i32>} : memref<12x8x256xf32, #tpu.memory_space<vmem>>, vector<1x8x256xf32>,
    %98 = vector.extract_strided_slice %9 {offsets = [16, 0, 0], sizes = [1, 8, 512], strides = [1, 1, 1]} : vector<24x8x512xf32> to vector<1x8x512xf32>
    %99 = vector.shape_cast %98 : vector<1x8x512xf32> to vector<8x512xf32>
    %100 = vector.extract_strided_slice %9 {offsets = [17, 0, 0], sizes = [1, 8, 512], strides = [1, 1, 1]} : vector<24x8x512xf32> to vector<1x8x512xf32>
    %101 = vector.shape_cast %100 : vector<1x8x512xf32> to vector<8x512xf32>
    %102 = arith.maximumf %99, %101 : vector<8x512xf32>
    %103 = vector.extract_strided_slice %102 {offsets = [0, 0], sizes = [8, 256], strides = [1, 1]} : vector<8x512xf32> to vector<8x256xf32>
    %104 = vector.extract_strided_slice %102 {offsets = [0, 256], sizes = [8, 256], strides = [1, 1]} : vector<8x512xf32> to vector<8x256xf32>
    %105 = arith.maximumf %103, %104 : vector<8x256xf32>
    %c8 = arith.constant 8 : index
    %c0_24 = arith.constant 0 : index
    %c0_25 = arith.constant 0 : index
    %106 = vector.load %arg11[%c8, %c0_24, %c0_25] : memref<12x8x256xf32, #tpu.memory_space<vmem>>, vector<1x8x256xf32>
    %107 = vector.shape_cast %106 : vector<1x8x256xf32> to vector<8x256xf32>
    %108 = vector.shape_cast %105 : vector<8x256xf32> to vector<1x8x256xf32>
    tpu.vector_store %arg11[%c8, %c0_24, %c0_25], %108 {strides = array<i32>} : memref<12x8x256xf32, #tpu.memory_space<vmem>>, vector<1x8x256xf32>,
    %109 = vector.extract_strided_slice %9 {offsets = [18, 0, 0], sizes = [1, 8, 512], strides = [1, 1, 1]} : vector<24x8x512xf32> to vector<1x8x512xf32>
    %110 = vector.shape_cast %109 : vector<1x8x512xf32> to vector<8x512xf32>
    %111 = vector.extract_strided_slice %9 {offsets = [19, 0, 0], sizes = [1, 8, 512], strides = [1, 1, 1]} : vector<24x8x512xf32> to vector<1x8x512xf32>
    %112 = vector.shape_cast %111 : vector<1x8x512xf32> to vector<8x512xf32>
    %113 = arith.maximumf %110, %112 : vector<8x512xf32>
    %114 = vector.extract_strided_slice %113 {offsets = [0, 0], sizes = [8, 256], strides = [1, 1]} : vector<8x512xf32> to vector<8x256xf32>
    %115 = vector.extract_strided_slice %113 {offsets = [0, 256], sizes = [8, 256], strides = [1, 1]} : vector<8x512xf32> to vector<8x256xf32>
    %116 = arith.maximumf %114, %115 : vector<8x256xf32>
    %c9 = arith.constant 9 : index
    %c0_26 = arith.constant 0 : index
    %c0_27 = arith.constant 0 : index
    %117 = vector.load %arg11[%c9, %c0_26, %c0_27] : memref<12x8x256xf32, #tpu.memory_space<vmem>>, vector<1x8x256xf32>
    %118 = vector.shape_cast %117 : vector<1x8x256xf32> to vector<8x256xf32>
    %119 = vector.shape_cast %116 : vector<8x256xf32> to vector<1x8x256xf32>
    tpu.vector_store %arg11[%c9, %c0_26, %c0_27], %119 {strides = array<i32>} : memref<12x8x256xf32, #tpu.memory_space<vmem>>, vector<1x8x256xf32>,
    %120 = vector.extract_strided_slice %9 {offsets = [20, 0, 0], sizes = [1, 8, 512], strides = [1, 1, 1]} : vector<24x8x512xf32> to vector<1x8x512xf32>
    %121 = vector.shape_cast %120 : vector<1x8x512xf32> to vector<8x512xf32>
    %122 = vector.extract_strided_slice %9 {offsets = [21, 0, 0], sizes = [1, 8, 512], strides = [1, 1, 1]} : vector<24x8x512xf32> to vector<1x8x512xf32>
    %123 = vector.shape_cast %122 : vector<1x8x512xf32> to vector<8x512xf32>
    %124 = arith.maximumf %121, %123 : vector<8x512xf32>
    %125 = vector.extract_strided_slice %124 {offsets = [0, 0], sizes = [8, 256], strides = [1, 1]} : vector<8x512xf32> to vector<8x256xf32>
    %126 = vector.extract_strided_slice %124 {offsets = [0, 256], sizes = [8, 256], strides = [1, 1]} : vector<8x512xf32> to vector<8x256xf32>
    %127 = arith.maximumf %125, %126 : vector<8x256xf32>
    %c10 = arith.constant 10 : index
    %c0_28 = arith.constant 0 : index
    %c0_29 = arith.constant 0 : index
    %128 = vector.load %arg11[%c10, %c0_28, %c0_29] : memref<12x8x256xf32, #tpu.memory_space<vmem>>, vector<1x8x256xf32>
    %129 = vector.shape_cast %128 : vector<1x8x256xf32> to vector<8x256xf32>
    %130 = vector.shape_cast %127 : vector<8x256xf32> to vector<1x8x256xf32>
    tpu.vector_store %arg11[%c10, %c0_28, %c0_29], %130 {strides = array<i32>} : memref<12x8x256xf32, #tpu.memory_space<vmem>>, vector<1x8x256xf32>,
    %131 = vector.extract_strided_slice %9 {offsets = [22, 0, 0], sizes = [1, 8, 512], strides = [1, 1, 1]} : vector<24x8x512xf32> to vector<1x8x512xf32>
    %132 = vector.shape_cast %131 : vector<1x8x512xf32> to vector<8x512xf32>
    %133 = vector.extract_strided_slice %9 {offsets = [23, 0, 0], sizes = [1, 8, 512], strides = [1, 1, 1]} : vector<24x8x512xf32> to vector<1x8x512xf32>
    %134 = vector.shape_cast %133 : vector<1x8x512xf32> to vector<8x512xf32>
    %135 = arith.maximumf %132, %134 : vector<8x512xf32>
    %136 = vector.extract_strided_slice %135 {offsets = [0, 0], sizes = [8, 256], strides = [1, 1]} : vector<8x512xf32> to vector<8x256xf32>
    %137 = vector.extract_strided_slice %135 {offsets = [0, 256], sizes = [8, 256], strides = [1, 1]} : vector<8x512xf32> to vector<8x256xf32>
    %138 = arith.maximumf %136, %137 : vector<8x256xf32>
    %c11 = arith.constant 11 : index
    %c0_30 = arith.constant 0 : index
    %c0_31 = arith.constant 0 : index
    %139 = vector.load %arg11[%c11, %c0_30, %c0_31] : memref<12x8x256xf32, #tpu.memory_space<vmem>>, vector<1x8x256xf32>
    %140 = vector.shape_cast %139 : vector<1x8x256xf32> to vector<8x256xf32>
    %141 = vector.shape_cast %138 : vector<8x256xf32> to vector<1x8x256xf32>
    tpu.vector_store %arg11[%c11, %c0_30, %c0_31], %141 {strides = array<i32>} : memref<12x8x256xf32, #tpu.memory_space<vmem>>, vector<1x8x256xf32>,
    %c0_32 = arith.constant 0 : index
    %c0_33 = arith.constant 0 : index
    %c0_34 = arith.constant 0 : index
    %142 = vector.load %arg11[%c0_32, %c0_33, %c0_34] : memref<12x8x256xf32, #tpu.memory_space<vmem>>, vector<8x8x256xf32>
    %143 = vector.shape_cast %142 : vector<8x8x256xf32> to vector<64x256xf32>
    %c1_35 = arith.constant 1 : index
    %c0_36 = arith.constant 0 : index
    %c0_37 = arith.constant 0 : index
    %144 = vector.load %arg11[%c1_35, %c0_36, %c0_37] : memref<12x8x256xf32, #tpu.memory_space<vmem>>, vector<8x8x256xf32>
    %145 = vector.shape_cast %144 : vector<8x8x256xf32> to vector<64x256xf32>
    %c2_38 = arith.constant 2 : index
    %c0_39 = arith.constant 0 : index
    %c0_40 = arith.constant 0 : index
    %146 = vector.load %arg11[%c2_38, %c0_39, %c0_40] : memref<12x8x256xf32, #tpu.memory_space<vmem>>, vector<8x8x256xf32>
    %147 = vector.shape_cast %146 : vector<8x8x256xf32> to vector<64x256xf32>
    %c3_41 = arith.constant 3 : index
    %c0_42 = arith.constant 0 : index
    %c0_43 = arith.constant 0 : index
    %148 = vector.load %arg11[%c3_41, %c0_42, %c0_43] : memref<12x8x256xf32, #tpu.memory_space<vmem>>, vector<8x8x256xf32>
    %149 = vector.shape_cast %148 : vector<8x8x256xf32> to vector<64x256xf32>
    %c4_44 = arith.constant 4 : index
    %c0_45 = arith.constant 0 : index
    %c0_46 = arith.constant 0 : index
    %150 = vector.load %arg11[%c4_44, %c0_45, %c0_46] : memref<12x8x256xf32, #tpu.memory_space<vmem>>, vector<8x8x256xf32>
    %151 = vector.shape_cast %150 : vector<8x8x256xf32> to vector<64x256xf32>
    %152 = tpu.concatenate %143, %145, %147, %149, %151 in 1 : vector<64x256xf32>, vector<64x256xf32>, vector<64x256xf32>, vector<64x256xf32>, vector<64x256xf32> -> vector<64x1280xf32>
    %c0_47 = arith.constant 0 : index
    %c0_48 = arith.constant 0 : index
    %153 = vector.load %arg4[%c0_47, %c0_48] : memref<1280x512xf32, #tpu.memory_space<vmem>>, vector<1280x512xf32>
    %cst_49 = arith.constant dense<0.000000e+00> : vector<64x512xf32>
    %154 = tpu.matmul %152, %153, %cst_49 {dimension_numbers = #tpu.dot_dimension_numbers<[1], [0], [0], [1], [0, 0, 1, 1], [], []>} : vector<64x1280xf32>, vector<1280x512xf32>, vector<64x512xf32> -> vector<64x512xf32>
    %c0_50 = arith.constant 0 : index
    %c0_51 = arith.constant 0 : index
    %155 = vector.load %arg5[%c0_50, %c0_51] : memref<1x512xf32, #tpu.memory_space<vmem>>, vector<1x512xf32>
    %156 = vector.broadcast %155 : vector<1x512xf32> to vector<64x512xf32>
    %157 = arith.addf %154, %156 : vector<64x512xf32>
    %cst_52 = arith.constant 0.000000e+00 : f32
    %158 = vector.broadcast %cst_52 : f32 to vector<64x512xf32>
    %159 = arith.maximumf %157, %158 : vector<64x512xf32>
    %160 = vector.shape_cast %159 : vector<64x512xf32> to vector<8x8x512xf32>
    %161 = vector.extract_strided_slice %160 {offsets = [0, 0, 0], sizes = [1, 8, 512], strides = [1, 1, 1]} : vector<8x8x512xf32> to vector<1x8x512xf32>
    %162 = vector.shape_cast %161 : vector<1x8x512xf32> to vector<8x512xf32>
    %163 = vector.extract_strided_slice %160 {offsets = [1, 0, 0], sizes = [1, 8, 512], strides = [1, 1, 1]} : vector<8x8x512xf32> to vector<1x8x512xf32>
    %164 = vector.shape_cast %163 : vector<1x8x512xf32> to vector<8x512xf32>
    %165 = arith.maximumf %162, %164 : vector<8x512xf32>
    %166 = vector.extract_strided_slice %165 {offsets = [0, 0], sizes = [8, 256], strides = [1, 1]} : vector<8x512xf32> to vector<8x256xf32>
    %167 = vector.extract_strided_slice %165 {offsets = [0, 256], sizes = [8, 256], strides = [1, 1]} : vector<8x512xf32> to vector<8x256xf32>
    %168 = arith.maximumf %166, %167 : vector<8x256xf32>
    %169 = vector.extract_strided_slice %160 {offsets = [2, 0, 0], sizes = [1, 8, 512], strides = [1, 1, 1]} : vector<8x8x512xf32> to vector<1x8x512xf32>
    %170 = vector.shape_cast %169 : vector<1x8x512xf32> to vector<8x512xf32>
    %171 = vector.extract_strided_slice %160 {offsets = [3, 0, 0], sizes = [1, 8, 512], strides = [1, 1, 1]} : vector<8x8x512xf32> to vector<1x8x512xf32>
    %172 = vector.shape_cast %171 : vector<1x8x512xf32> to vector<8x512xf32>
    %173 = arith.maximumf %170, %172 : vector<8x512xf32>
    %174 = vector.extract_strided_slice %173 {offsets = [0, 0], sizes = [8, 256], strides = [1, 1]} : vector<8x512xf32> to vector<8x256xf32>
    %175 = vector.extract_strided_slice %173 {offsets = [0, 256], sizes = [8, 256], strides = [1, 1]} : vector<8x512xf32> to vector<8x256xf32>
    %176 = arith.maximumf %174, %175 : vector<8x256xf32>
    %177 = vector.extract_strided_slice %160 {offsets = [4, 0, 0], sizes = [1, 8, 512], strides = [1, 1, 1]} : vector<8x8x512xf32> to vector<1x8x512xf32>
    %178 = vector.shape_cast %177 : vector<1x8x512xf32> to vector<8x512xf32>
    %179 = vector.extract_strided_slice %160 {offsets = [5, 0, 0], sizes = [1, 8, 512], strides = [1, 1, 1]} : vector<8x8x512xf32> to vector<1x8x512xf32>
    %180 = vector.shape_cast %179 : vector<1x8x512xf32> to vector<8x512xf32>
    %181 = arith.maximumf %178, %180 : vector<8x512xf32>
    %182 = vector.extract_strided_slice %181 {offsets = [0, 0], sizes = [8, 256], strides = [1, 1]} : vector<8x512xf32> to vector<8x256xf32>
    %183 = vector.extract_strided_slice %181 {offsets = [0, 256], sizes = [8, 256], strides = [1, 1]} : vector<8x512xf32> to vector<8x256xf32>
    %184 = arith.maximumf %182, %183 : vector<8x256xf32>
    %185 = vector.extract_strided_slice %160 {offsets = [6, 0, 0], sizes = [1, 8, 512], strides = [1, 1, 1]} : vector<8x8x512xf32> to vector<1x8x512xf32>
    %186 = vector.shape_cast %185 : vector<1x8x512xf32> to vector<8x512xf32>
    %187 = vector.extract_strided_slice %160 {offsets = [7, 0, 0], sizes = [1, 8, 512], strides = [1, 1, 1]} : vector<8x8x512xf32> to vector<1x8x512xf32>
    %188 = vector.shape_cast %187 : vector<1x8x512xf32> to vector<8x512xf32>
    %189 = arith.maximumf %186, %188 : vector<8x512xf32>
    %190 = vector.extract_strided_slice %189 {offsets = [0, 0], sizes = [8, 256], strides = [1, 1]} : vector<8x512xf32> to vector<8x256xf32>
    %191 = vector.extract_strided_slice %189 {offsets = [0, 256], sizes = [8, 256], strides = [1, 1]} : vector<8x512xf32> to vector<8x256xf32>
    %192 = arith.maximumf %190, %191 : vector<8x256xf32>
    %193 = tpu.concatenate %168, %176, %184, %192 in 1 : vector<8x256xf32>, vector<8x256xf32>, vector<8x256xf32>, vector<8x256xf32> -> vector<8x1024xf32>
    %c0_53 = arith.constant 0 : index
    %c0_54 = arith.constant 0 : index
    %194 = vector.load %arg6[%c0_53, %c0_54] : memref<1024x512xf32, #tpu.memory_space<vmem>>, vector<1024x512xf32>
    %cst_55 = arith.constant dense<0.000000e+00> : vector<8x512xf32>
    %195 = tpu.matmul %193, %194, %cst_55 {dimension_numbers = #tpu.dot_dimension_numbers<[1], [0], [0], [1], [0, 0, 1, 1], [], []>} : vector<8x1024xf32>, vector<1024x512xf32>, vector<8x512xf32> -> vector<8x512xf32>
    %c0_56 = arith.constant 0 : index
    %c0_57 = arith.constant 0 : index
    %196 = vector.load %arg7[%c0_56, %c0_57] : memref<1x512xf32, #tpu.memory_space<vmem>>, vector<1x512xf32>
    %197 = vector.broadcast %196 : vector<1x512xf32> to vector<8x512xf32>
    %198 = arith.addf %195, %197 : vector<8x512xf32>
    %cst_58 = arith.constant 0.000000e+00 : f32
    %199 = vector.broadcast %cst_58 : f32 to vector<8x512xf32>
    %200 = arith.maximumf %198, %199 : vector<8x512xf32>
    %c0_59 = arith.constant 0 : index
    %c0_60 = arith.constant 0 : index
    %201 = vector.load %arg8[%c0_59, %c0_60] : memref<512x128xf32, #tpu.memory_space<vmem>>, vector<512x128xf32>
    %cst_61 = arith.constant dense<0.000000e+00> : vector<8x128xf32>
    %202 = tpu.matmul %200, %201, %cst_61 {dimension_numbers = #tpu.dot_dimension_numbers<[1], [0], [0], [1], [0, 0, 1, 1], [], []>} : vector<8x512xf32>, vector<512x128xf32>, vector<8x128xf32> -> vector<8x128xf32>
    %c0_62 = arith.constant 0 : index
    %c0_63 = arith.constant 0 : index
    %203 = vector.load %arg9[%c0_62, %c0_63] : memref<1x128xf32, #tpu.memory_space<vmem>>, vector<1x128xf32>
    %204 = vector.broadcast %203 : vector<1x128xf32> to vector<8x128xf32>
    %205 = arith.addf %202, %204 : vector<8x128xf32>
    %206 = vector.extract_strided_slice %205 {offsets = [0, 0], sizes = [8, 10], strides = [1, 1]} : vector<8x128xf32> to vector<8x10xf32>
    %cst_64 = arith.constant dense<0xFF800000> : vector<8xf32>
    %207 = vector.multi_reduction <maximumf>, %206, %cst_64 [1] : vector<8x10xf32> to vector<8xf32>
    %208 = vector.shape_cast %207 : vector<8xf32> to vector<8x1xf32>
    %209 = vector.broadcast %208 : vector<8x1xf32> to vector<8x10xf32>
    %210 = arith.subf %206, %209 : vector<8x10xf32>
    %211 = math.exp %210 : vector<8x10xf32>
    %cst_65 = arith.constant dense<0.000000e+00> : vector<8xf32>
    %212 = vector.multi_reduction <add>, %211, %cst_65 [1] : vector<8x10xf32> to vector<8xf32>
    %213 = vector.shape_cast %212 : vector<8xf32> to vector<8x1xf32>
    %214 = math.log %213 : vector<8x1xf32>
    %215 = arith.addf %208, %214 : vector<8x1xf32>
    %216 = vector.broadcast %215 : vector<8x1xf32> to vector<8x128xf32>
    %217 = arith.subf %205, %216 : vector<8x128xf32>
    %c0_66 = arith.constant 0 : index
    %c0_67 = arith.constant 0 : index
    %218 = vector.load %arg10[%c0_66, %c0_67] : memref<8x128xf32, #tpu.memory_space<vmem>>, vector<8x128xf32>
    tpu.vector_store %arg10[%c0_66, %c0_67], %217 {strides = array<i32>} : memref<8x128xf32, #tpu.memory_space<vmem>>, vector<8x128xf32>,
    return
  }
  func.func @transform_0(%arg0: i32) -> (i32, i32, i32) {
    %c0_i32 = arith.constant 0 : i32
    %c0_i32_0 = arith.constant 0 : i32
    %c0_i32_1 = arith.constant 0 : i32
    return %c0_i32, %arg0, %c0_i32_0 : i32, i32, i32
  }
  func.func @transform_1(%arg0: i32) -> (i32, i32) {
    %c0_i32 = arith.constant 0 : i32
    %c0_i32_0 = arith.constant 0 : i32
    %c0_i32_1 = arith.constant 0 : i32
    return %c0_i32, %c0_i32_0 : i32, i32
  }
  func.func @transform_2(%arg0: i32) -> (i32, i32) {
    %c0_i32 = arith.constant 0 : i32
    %c0_i32_0 = arith.constant 0 : i32
    %c0_i32_1 = arith.constant 0 : i32
    return %c0_i32, %c0_i32_0 : i32, i32
  }
  func.func @transform_3(%arg0: i32) -> (i32, i32) {
    %c0_i32 = arith.constant 0 : i32
    %c0_i32_0 = arith.constant 0 : i32
    %c0_i32_1 = arith.constant 0 : i32
    return %c0_i32, %c0_i32_0 : i32, i32
  }
  func.func @transform_4(%arg0: i32) -> (i32, i32) {
    %c0_i32 = arith.constant 0 : i32
    %c0_i32_0 = arith.constant 0 : i32
    %c0_i32_1 = arith.constant 0 : i32
    return %c0_i32, %c0_i32_0 : i32, i32
  }
  func.func @transform_5(%arg0: i32) -> (i32, i32) {
    %c0_i32 = arith.constant 0 : i32
    %c0_i32_0 = arith.constant 0 : i32
    %c0_i32_1 = arith.constant 0 : i32
    return %c0_i32, %c0_i32_0 : i32, i32
  }
  func.func @transform_6(%arg0: i32) -> (i32, i32) {
    %c0_i32 = arith.constant 0 : i32
    %c0_i32_0 = arith.constant 0 : i32
    %c0_i32_1 = arith.constant 0 : i32
    return %c0_i32, %c0_i32_0 : i32, i32
  }
  func.func @transform_7(%arg0: i32) -> (i32, i32) {
    %c0_i32 = arith.constant 0 : i32
    %c0_i32_0 = arith.constant 0 : i32
    %c0_i32_1 = arith.constant 0 : i32
    return %c0_i32, %c0_i32_0 : i32, i32
  }
  func.func @transform_8(%arg0: i32) -> (i32, i32) {
    %c0_i32 = arith.constant 0 : i32
    %c0_i32_0 = arith.constant 0 : i32
    %c0_i32_1 = arith.constant 0 : i32
    return %c0_i32, %c0_i32_0 : i32, i32
  }
  func.func @transform_9(%arg0: i32) -> (i32, i32) {
    %c0_i32 = arith.constant 0 : i32
    %c0_i32_0 = arith.constant 0 : i32
    return %arg0, %c0_i32 : i32, i32
  }
}

</mosaic_0001>

<llo_original>
// kernel: simplenet_forward.1
$region0: #{simplenet_forward.1}
  #allocation0 [shape = 'u32[]', space=smem, size = 0x4, offset = 0x4, fixed_abs, tag = 'smem constant byte address 0x4 - core index']
  #allocation1 [shape = 'u32[144,128]{1,0:T(1,128)}', space=vmem, size = 0x12000, scoped, tag = 'internal scratch']
  #allocation2 [shape = 'f32[12,8,256]{2,1,0:T(8,128)}', space=vmem, size = 0x18000, scoped, tag = 'scratch operand']
  %s0 = inlined_call_operand.vmem [shape: f32[24,8,140], index: 0, kind: input, shape index: {}]
  %s1 = inlined_call_operand.hbm [shape: f32[140,512], index: 1, kind: input, shape index: {}]
  %s2 = inlined_call_operand.hbm [shape: f32[1,512], index: 2, kind: input, shape index: {}]
  %s3 = inlined_call_operand.hbm [shape: f32[1280,512], index: 3, kind: input, shape index: {}]
  %s4 = inlined_call_operand.hbm [shape: f32[1,512], index: 4, kind: input, shape index: {}]
  %s5 = inlined_call_operand.hbm [shape: f32[1024,512], index: 5, kind: input, shape index: {}]
  %s6 = inlined_call_operand.hbm [shape: f32[1,512], index: 6, kind: input, shape index: {}]
  %s7 = inlined_call_operand.hbm [shape: f32[512,128], index: 7, kind: input, shape index: {}]
  %s8 = inlined_call_operand.hbm [shape: f32[1,128], index: 8, kind: input, shape index: {}]
  %s9 = inlined_call_operand.vmem [shape: f32[8,128], index: 9, kind: output, shape index: {}]
  %s10 = sld [smem:[#allocation0]]
  $region78: #{simplenet_forward.1} parent=0
    _
  %s12 = ssub.s32 1, %s10
  %s13 = scalar_select 0, %s12, %s10
  $region1: #{simplenet_forward.1} parent=0
    #allocation3 [shape = 'u8[294912]{0}', space=vmem, size = 0x48000, scoped, tag = 'input window, operand 1, single buffered']
    #allocation4 [shape = 's32[1]{0}', space=sflag, size = 0x4, scoped, tag = 'scoped memory for simplenet_forward.1']
    #allocation5 [shape = 'u8[2048]{0}', space=vmem, size = 0x800, scoped, tag = 'input window, operand 2, single buffered']
    #allocation6 [shape = 's32[1]{0}', space=sflag, size = 0x4, scoped, tag = 'scoped memory for simplenet_forward.1']
    #allocation7 [shape = 'u8[2621440]{0}', space=vmem, size = 0x280000, scoped, tag = 'input window, operand 3, single buffered']
    #allocation8 [shape = 'u8[2048]{0}', space=vmem, size = 0x800, scoped, tag = 'input window, operand 4, single buffered']
    #allocation9 [shape = 's32[1]{0}', space=sflag, size = 0x4, scoped, tag = 'scoped memory for simplenet_forward.1']
    #allocation10 [shape = 'u8[2097152]{0}', space=vmem, size = 0x200000, scoped, tag = 'input window, operand 5, single buffered']
    #allocation11 [shape = 'u8[2048]{0}', space=vmem, size = 0x800, scoped, tag = 'input window, operand 6, single buffered']
    #allocation12 [shape = 's32[1]{0}', space=sflag, size = 0x4, scoped, tag = 'scoped memory for simplenet_forward.1']
    #allocation13 [shape = 'u8[262144]{0}', space=vmem, size = 0x40000, scoped, tag = 'input window, operand 7, single buffered']
    #allocation14 [shape = 'u8[512]{0}', space=vmem, size = 0x400, scoped, tag = 'input window, operand 8, single buffered']
    #allocation15 [shape = 's32[1]{0}', space=sflag, size = 0x4, scoped, tag = 'scoped memory for simplenet_forward.1']
    %14 = vsyncpa [#allocation4], 0
    %15 = vsyncpa [#allocation6], 0
    %16 = vsyncpa [#allocation9], 0
    %17 = vsyncpa [#allocation12], 0
    %18 = vsyncpa [#allocation15], 0
    // Predicated region
    $region2: #{simplenet_forward.1} parent=1 // pred_check
      _
    $region3: #{simplenet_forward.1} parent=1 // pred_check_branch
      %20 = sbr.rel (0) target = $region5
    $region4: #{simplenet_forward.1} parent=1 // pred_region
      _
    $region5: #{simplenet_forward.1} parent=1 // pred_fallthru
      _
    // Predicated region
    $region6: #{simplenet_forward.1} parent=1 // pred_check
      _
    $region7: #{simplenet_forward.1} parent=1 // pred_check_branch
      %22 = sbr.rel (0) target = $region9
    $region8: #{simplenet_forward.1} parent=1 // pred_region
      %s24 = ssub.s32 9216, 9216
      %25 = vsyncadd [#allocation4], %s24
      %s26 = sshll.u32 [#allocation3], 4
      %s27 = int_to_ptr.vmem [resolvable:$true] %s26
      %32 = dma.hbm_to_vmem [thread:$0]  %s1, 9216, %s27, [#allocation4], 512, 512, 32
    $region9: #{simplenet_forward.1} parent=1 // pred_fallthru
      _
    // Predicated region
    $region10: #{simplenet_forward.1} parent=1 // pred_check
      _
    $region11: #{simplenet_forward.1} parent=1 // pred_check_branch
      %34 = sbr.rel (0) target = $region13
    $region12: #{simplenet_forward.1} parent=1 // pred_region
      %s36 = ssub.s32 64, 64
      %37 = vsyncadd [#allocation6], %s36
      %s39 = sshll.u32 [#allocation5], 4
      %s40 = int_to_ptr.vmem [resolvable:$true] %s39
      %42 = dma.hbm_to_vmem [thread:$0]  %s2, 64, %s40, [#allocation6]
    $region13: #{simplenet_forward.1} parent=1 // pred_fallthru
      _
    // Predicated region
    $region14: #{simplenet_forward.1} parent=1 // pred_check
      _
    $region15: #{simplenet_forward.1} parent=1 // pred_check_branch
      %44 = sbr.rel (0) target = $region17
    $region16: #{simplenet_forward.1} parent=1 // pred_region
      %s46 = ssub.s32 81920, 81920
      %47 = vsyncadd [#allocation6], %s46
      %s48 = sshll.u32 [#allocation7], 4
      %s49 = int_to_ptr.vmem [resolvable:$true] %s48
      %54 = dma.hbm_to_vmem [thread:$0]  %s3, 81920, %s49, [#allocation6], 512, 512, 32
    $region17: #{simplenet_forward.1} parent=1 // pred_fallthru
      _
    // Predicated region
    $region18: #{simplenet_forward.1} parent=1 // pred_check
      _
    $region19: #{simplenet_forward.1} parent=1 // pred_check_branch
      %56 = sbr.rel (0) target = $region21
    $region20: #{simplenet_forward.1} parent=1 // pred_region
      %s58 = ssub.s32 64, 64
      %59 = vsyncadd [#allocation9], %s58
      %s61 = sshll.u32 [#allocation8], 4
      %s62 = int_to_ptr.vmem [resolvable:$true] %s61
      %64 = dma.hbm_to_vmem [thread:$0]  %s4, 64, %s62, [#allocation9]
    $region21: #{simplenet_forward.1} parent=1 // pred_fallthru
      _
    // Predicated region
    $region22: #{simplenet_forward.1} parent=1 // pred_check
      _
    $region23: #{simplenet_forward.1} parent=1 // pred_check_branch
      %66 = sbr.rel (0) target = $region25
    $region24: #{simplenet_forward.1} parent=1 // pred_region
      %s68 = ssub.s32 65536, 65536
      %69 = vsyncadd [#allocation9], %s68
      %s70 = sshll.u32 [#allocation10], 4
      %s71 = int_to_ptr.vmem [resolvable:$true] %s70
      %76 = dma.hbm_to_vmem [thread:$0]  %s5, 65536, %s71, [#allocation9], 512, 512, 32
    $region25: #{simplenet_forward.1} parent=1 // pred_fallthru
      _
    // Predicated region
    $region26: #{simplenet_forward.1} parent=1 // pred_check
      _
    $region27: #{simplenet_forward.1} parent=1 // pred_check_branch
      %78 = sbr.rel (0) target = $region29
    $region28: #{simplenet_forward.1} parent=1 // pred_region
      %s80 = ssub.s32 64, 64
      %81 = vsyncadd [#allocation12], %s80
      %s83 = sshll.u32 [#allocation11], 4
      %s84 = int_to_ptr.vmem [resolvable:$true] %s83
      %86 = dma.hbm_to_vmem [thread:$0]  %s6, 64, %s84, [#allocation12]
    $region29: #{simplenet_forward.1} parent=1 // pred_fallthru
      _
    // Predicated region
    $region30: #{simplenet_forward.1} parent=1 // pred_check
      _
    $region31: #{simplenet_forward.1} parent=1 // pred_check_branch
      %88 = sbr.rel (0) target = $region33
    $region32: #{simplenet_forward.1} parent=1 // pred_region
      %s90 = ssub.s32 8192, 8192
      %91 = vsyncadd [#allocation12], %s90
      %s92 = sshll.u32 [#allocation13], 4
      %s93 = int_to_ptr.vmem [resolvable:$true] %s92
      %98 = dma.hbm_to_vmem [thread:$0]  %s7, 8192, %s93, [#allocation12], 128, 128, 8
    $region33: #{simplenet_forward.1} parent=1 // pred_fallthru
      _
    // Predicated region
    $region34: #{simplenet_forward.1} parent=1 // pred_check
      _
    $region35: #{simplenet_forward.1} parent=1 // pred_check_branch
      %100 = sbr.rel (0) target = $region37
    $region36: #{simplenet_forward.1} parent=1 // pred_region
      %s102 = ssub.s32 16, 16
      %103 = vsyncadd [#allocation15], %s102
      %s105 = sshll.u32 [#allocation14], 4
      %s106 = int_to_ptr.vmem [resolvable:$true] %s105
      %108 = dma.hbm_to_vmem [thread:$0]  %s8, 16, %s106, [#allocation15]
    $region37: #{simplenet_forward.1} parent=1 // pred_fallthru
      _
    // Predicated region
    $region38: #{simplenet_forward.1} parent=1 // pred_check
      _
    $region39: #{simplenet_forward.1} parent=1 // pred_check_branch
      %110 = sbr.rel (0) target = $region41
    $region40: #{simplenet_forward.1} parent=1 // pred_region
      %111 = dma.done [#allocation4], 9216
    $region41: #{simplenet_forward.1} parent=1 // pred_fallthru
      _
    // Predicated region
    $region42: #{simplenet_forward.1} parent=1 // pred_check
      _
    $region43: #{simplenet_forward.1} parent=1 // pred_check_branch
      %113 = sbr.rel (0) target = $region45
    $region44: #{simplenet_forward.1} parent=1 // pred_region
      %114 = dma.done [#allocation6], 64
    $region45: #{simplenet_forward.1} parent=1 // pred_fallthru
      _
    // Predicated region
    $region46: #{simplenet_forward.1} parent=1 // pred_check
      _
    $region47: #{simplenet_forward.1} parent=1 // pred_check_branch
      %116 = sbr.rel (0) target = $region49
    $region48: #{simplenet_forward.1} parent=1 // pred_region
      %117 = dma.done [#allocation6], 81920
    $region49: #{simplenet_forward.1} parent=1 // pred_fallthru
      _
    // Predicated region
    $region50: #{simplenet_forward.1} parent=1 // pred_check
      _
    $region51: #{simplenet_forward.1} parent=1 // pred_check_branch
      %119 = sbr.rel (0) target = $region53
    $region52: #{simplenet_forward.1} parent=1 // pred_region
      %120 = dma.done [#allocation9], 64
    $region53: #{simplenet_forward.1} parent=1 // pred_fallthru
      _
    // Predicated region
    $region54: #{simplenet_forward.1} parent=1 // pred_check
      _
    $region55: #{simplenet_forward.1} parent=1 // pred_check_branch
      %122 = sbr.rel (0) target = $region57
    $region56: #{simplenet_forward.1} parent=1 // pred_region
      %123 = dma.done [#allocation9], 65536
    $region57: #{simplenet_forward.1} parent=1 // pred_fallthru
      _
    // Predicated region
    $region58: #{simplenet_forward.1} parent=1 // pred_check
      _
    $region59: #{simplenet_forward.1} parent=1 // pred_check_branch
      %125 = sbr.rel (0) target = $region61
    $region60: #{simplenet_forward.1} parent=1 // pred_region
      %126 = dma.done [#allocation12], 64
    $region61: #{simplenet_forward.1} parent=1 // pred_fallthru
      _
    // Predicated region
    $region62: #{simplenet_forward.1} parent=1 // pred_check
      _
    $region63: #{simplenet_forward.1} parent=1 // pred_check_branch
      %128 = sbr.rel (0) target = $region65
    $region64: #{simplenet_forward.1} parent=1 // pred_region
      %129 = dma.done [#allocation12], 8192
    $region65: #{simplenet_forward.1} parent=1 // pred_fallthru
      _
    // Predicated region
    $region66: #{simplenet_forward.1} parent=1 // pred_check
      _
    $region67: #{simplenet_forward.1} parent=1 // pred_check_branch
      %131 = sbr.rel (0) target = $region69
    $region68: #{simplenet_forward.1} parent=1 // pred_region
      %132 = dma.done [#allocation15], 16
    $region69: #{simplenet_forward.1} parent=1 // pred_fallthru
      _
    %v133 = vld [vmem:[%s0] sm:$0xff]
    %v134 = vld [vmem:[%s0 + $0x8] sm:$0xff]
    %v135 = vld [vmem:[%s0 + $0x10] sm:$0xff]
    %v136 = vld [vmem:[%s0 + $0x18] sm:$0xff]
    %v137 = vld [vmem:[%s0 + $0x20] sm:$0xff]
    %v138 = vld [vmem:[%s0 + $0x28] sm:$0xff]
    %v139 = vld [vmem:[%s0 + $0x30] sm:$0xff]
    %v140 = vld [vmem:[%s0 + $0x38] sm:$0xff]
    %v141 = vld [vmem:[%s0 + $0x40] sm:$0xff]
    %v142 = vld [vmem:[%s0 + $0x48] sm:$0xff]
    %v143 = vld [vmem:[%s0 + $0x50] sm:$0xff]
    %v144 = vld [vmem:[%s0 + $0x58] sm:$0xff]
    %v145 = vld [vmem:[%s0 + $0x60] sm:$0xff]
    %v146 = vld [vmem:[%s0 + $0x68] sm:$0xff]
    %v147 = vld [vmem:[%s0 + $0x70] sm:$0xff]
    %v148 = vld [vmem:[%s0 + $0x78] sm:$0xff]
    %v149 = vld [vmem:[%s0 + $0x80] sm:$0xff]
    %v150 = vld [vmem:[%s0 + $0x88] sm:$0xff]
    %v151 = vld [vmem:[%s0 + $0x90] sm:$0xff]
    %v152 = vld [vmem:[%s0 + $0x98] sm:$0xff]
    %v153 = vld [vmem:[%s0 + $0xa0] sm:$0xff]
    %v154 = vld [vmem:[%s0 + $0xa8] sm:$0xff]
    %v155 = vld [vmem:[%s0 + $0xb0] sm:$0xff]
    %v156 = vld [vmem:[%s0 + $0xb8] sm:$0xff]
    %v157 = vld [vmem:[%s0 + $0xc0] sm:$0xff]
    %v158 = vld [vmem:[%s0 + $0xc8] sm:$0xff]
    %v159 = vld [vmem:[%s0 + $0xd0] sm:$0xff]
    %v160 = vld [vmem:[%s0 + $0xd8] sm:$0xff]
    %v161 = vld [vmem:[%s0 + $0xe0] sm:$0xff]
    %v162 = vld [vmem:[%s0 + $0xe8] sm:$0xff]
    %v163 = vld [vmem:[%s0 + $0xf0] sm:$0xff]
    %v164 = vld [vmem:[%s0 + $0xf8] sm:$0xff]
    %v165 = vld [vmem:[%s0 + $0x100] sm:$0xff]
    %v166 = vld [vmem:[%s0 + $0x108] sm:$0xff]
    %v167 = vld [vmem:[%s0 + $0x110] sm:$0xff]
    %v168 = vld [vmem:[%s0 + $0x118] sm:$0xff]
    %v169 = vld [vmem:[%s0 + $0x120] sm:$0xff]
    %v170 = vld [vmem:[%s0 + $0x128] sm:$0xff]
    %v171 = vld [vmem:[%s0 + $0x130] sm:$0xff]
    %v172 = vld [vmem:[%s0 + $0x138] sm:$0xff]
    %v173 = vld [vmem:[%s0 + $0x140] sm:$0xff]
    %v174 = vld [vmem:[%s0 + $0x148] sm:$0xff]
    %v175 = vld [vmem:[%s0 + $0x150] sm:$0xff]
    %v176 = vld [vmem:[%s0 + $0x158] sm:$0xff]
    %v177 = vld [vmem:[%s0 + $0x160] sm:$0xff]
    %v178 = vld [vmem:[%s0 + $0x168] sm:$0xff]
    %v179 = vld [vmem:[%s0 + $0x170] sm:$0xff]
    %v180 = vld [vmem:[%s0 + $0x178] sm:$0xff]
    %v181 = vld [vmem:[#allocation3] sm:$0xff]
    %v182 = vld [vmem:[#allocation3 + $0x8] sm:$0xff]
    %v183 = vld [vmem:[#allocation3 + $0x10] sm:$0xff]
    %v184 = vld [vmem:[#allocation3 + $0x18] sm:$0xff]
    %v185 = vld [vmem:[#allocation3 + $0x20] sm:$0xff]
    %v186 = vld [vmem:[#allocation3 + $0x28] sm:$0xff]
    %v187 = vld [vmem:[#allocation3 + $0x30] sm:$0xff]
    %v188 = vld [vmem:[#allocation3 + $0x38] sm:$0xff]
    %v189 = vld [vmem:[#allocation3 + $0x40] sm:$0xff]
    %v190 = vld [vmem:[#allocation3 + $0x48] sm:$0xff]
    %v191 = vld [vmem:[#allocation3 + $0x50] sm:$0xff]
    %v192 = vld [vmem:[#allocation3 + $0x58] sm:$0xff]
    %v193 = vld [vmem:[#allocation3 + $0x60] sm:$0xff]
    %v194 = vld [vmem:[#allocation3 + $0x68] sm:$0xff]
    %v195 = vld [vmem:[#allocation3 + $0x70] sm:$0xff]
    %v196 = vld [vmem:[#allocation3 + $0x78] sm:$0xff]
    %v197 = vld [vmem:[#allocation3 + $0x80] sm:$0xff]
    %v198 = vld [vmem:[#allocation3 + $0x88] sm:$0xff]
    %v199 = vld [vmem:[#allocation3 + $0x90] sm:$0xff]
    %v200 = vld [vmem:[#allocation3 + $0x98] sm:$0xff]
    %v201 = vld [vmem:[#allocation3 + $0xa0] sm:$0xff]
    %v202 = vld [vmem:[#allocation3 + $0xa8] sm:$0xff]
    %v203 = vld [vmem:[#allocation3 + $0xb0] sm:$0xff]
    %v204 = vld [vmem:[#allocation3 + $0xb8] sm:$0xff]
    %v205 = vld [vmem:[#allocation3 + $0xc0] sm:$0xff]
    %v206 = vld [vmem:[#allocation3 + $0xc8] sm:$0xff]
    %v207 = vld [vmem:[#allocation3 + $0xd0] sm:$0xff]
    %v208 = vld [vmem:[#allocation3 + $0xd8] sm:$0xff]
    %v209 = vld [vmem:[#allocation3 + $0xe0] sm:$0xff]
    %v210 = vld [vmem:[#allocation3 + $0xe8] sm:$0xff]
    %v211 = vld [vmem:[#allocation3 + $0xf0] sm:$0xff]
    %v212 = vld [vmem:[#allocation3 + $0xf8] sm:$0xff]
    %v213 = vld [vmem:[#allocation3 + $0x100] sm:$0xff]
    %v214 = vld [vmem:[#allocation3 + $0x108] sm:$0xff]
    %v215 = vld [vmem:[#allocation3 + $0x110] sm:$0xff]
    %v216 = vld [vmem:[#allocation3 + $0x118] sm:$0xff]
    %v217 = vld [vmem:[#allocation3 + $0x120] sm:$0xff]
    %v218 = vld [vmem:[#allocation3 + $0x128] sm:$0xff]
    %v219 = vld [vmem:[#allocation3 + $0x130] sm:$0xff]
    %v220 = vld [vmem:[#allocation3 + $0x138] sm:$0xff]
    %v221 = vld [vmem:[#allocation3 + $0x140] sm:$0xff]
    %v222 = vld [vmem:[#allocation3 + $0x148] sm:$0xff]
    %v223 = vld [vmem:[#allocation3 + $0x150] sm:$0xff]
    %v224 = vld [vmem:[#allocation3 + $0x158] sm:$0xff]
    %v225 = vld [vmem:[#allocation3 + $0x160] sm:$0xff]
    %v226 = vld [vmem:[#allocation3 + $0x168] sm:$0xff]
    %v227 = vld [vmem:[#allocation3 + $0x170] sm:$0xff]
    %v228 = vld [vmem:[#allocation3 + $0x178] sm:$0xff]
    %v229 = vld [vmem:[#allocation3 + $0x180] sm:$0xff]
    %v230 = vld [vmem:[#allocation3 + $0x188] sm:$0xff]
    %v231 = vld [vmem:[#allocation3 + $0x190] sm:$0xff]
    %v232 = vld [vmem:[#allocation3 + $0x198] sm:$0xff]
    %v233 = vld [vmem:[#allocation3 + $0x1a0] sm:$0xff]
    %v234 = vld [vmem:[#allocation3 + $0x1a8] sm:$0xff]
    %v235 = vld [vmem:[#allocation3 + $0x1b0] sm:$0xff]
    %v236 = vld [vmem:[#allocation3 + $0x1b8] sm:$0xff]
    %v237 = vld [vmem:[#allocation3 + $0x1c0] sm:$0xff]
    %v238 = vld [vmem:[#allocation3 + $0x1c8] sm:$0xff]
    %v239 = vld [vmem:[#allocation3 + $0x1d0] sm:$0xff]
    %v240 = vld [vmem:[#allocation3 + $0x1d8] sm:$0xff]
    %v241 = vld [vmem:[#allocation3 + $0x1e0] sm:$0xff]
    %v242 = vld [vmem:[#allocation3 + $0x1e8] sm:$0xff]
    %v243 = vld [vmem:[#allocation3 + $0x1f0] sm:$0xff]
    %v244 = vld [vmem:[#allocation3 + $0x1f8] sm:$0xff]
    %v245 = vld [vmem:[#allocation3 + $0x200] sm:$0xff]
    %v246 = vld [vmem:[#allocation3 + $0x208] sm:$0xff]
    %v247 = vld [vmem:[#allocation3 + $0x210] sm:$0xff]
    %v248 = vld [vmem:[#allocation3 + $0x218] sm:$0xff]
    %v249 = vld [vmem:[#allocation3 + $0x220] sm:$0xf]
    %v250 = vld [vmem:[#allocation3 + $0x228] sm:$0xf]
    %v251 = vld [vmem:[#allocation3 + $0x230] sm:$0xf]
    %v252 = vld [vmem:[#allocation3 + $0x238] sm:$0xf]
    %v253 = vld [vmem:[#allocation5] sm:$0xf]
    %v255 = vlaneseq
    %v256 = vshrl.u32 %v255, 7
    %v257 = vsub.s32 0, %v256
    %v258 = vrot.slane %v253, %v257
    %v259 = vlaneseq
    %v260 = vshrl.u32 %v259, 7
    %v261 = vsub.s32 1, %v260
    %v262 = vrot.slane %v253, %v261
    %v263 = vlaneseq
    %v264 = vshrl.u32 %v263, 7
    %v265 = vsub.s32 2, %v264
    %v266 = vrot.slane %v253, %v265
    %v267 = vlaneseq
    %v268 = vshrl.u32 %v267, 7
    %v269 = vsub.s32 3, %v268
    %v270 = vrot.slane %v253, %v269
    %vm275 = vcmask 97280
    %v277 = vsel %vm275, %v134, 0
    %v280 = vsel %vm275, %v136, 0
    %v283 = vsel %vm275, %v138, 0
    %v286 = vsel %vm275, %v140, 0
    %v289 = vsel %vm275, %v142, 0
    %v292 = vsel %vm275, %v144, 0
    %v295 = vsel %vm275, %v146, 0
    %v298 = vsel %vm275, %v148, 0
    %v301 = vsel %vm275, %v150, 0
    %v304 = vsel %vm275, %v152, 0
    %v307 = vsel %vm275, %v154, 0
    %v310 = vsel %vm275, %v156, 0
    %v313 = vsel %vm275, %v158, 0
    %v316 = vsel %vm275, %v160, 0
    %v319 = vsel %vm275, %v162, 0
    %v322 = vsel %vm275, %v164, 0
    %v325 = vsel %vm275, %v166, 0
    %v328 = vsel %vm275, %v168, 0
    %v331 = vsel %vm275, %v170, 0
    %v334 = vsel %vm275, %v172, 0
    %v337 = vsel %vm275, %v174, 0
    %v340 = vsel %vm275, %v176, 0
    %v343 = vsel %vm275, %v178, 0
    %v346 = vsel %vm275, %v180, 0
    %vm348 = vcmask 1043456
    %v350 = vsel %vm348, %v249, 0
    %v353 = vsel %vm348, %v250, 0
    %v356 = vsel %vm348, %v251, 0
    %v359 = vsel %vm348, %v252, 0
    %361 = vmatprep.subr.mxu0 %v242
    %362 = vmatpush1.msra.mxu0 %v241
    %363 = vmatprep.subr.mxu0 %v238
    %364 = vmatpush1.msra.mxu0 %v237
    %365 = vmatprep.subr.mxu0 %v234
    %366 = vmatpush1.msra.mxu0 %v233
    %367 = vmatprep.subr.mxu0 %v230
    %368 = vmatpush1.msra.mxu0 %v229
    %369 = vmatprep.subr.mxu0 %v226
    %370 = vmatpush1.msra.mxu0 %v225
    %371 = vmatprep.subr.mxu0 %v222
    %372 = vmatpush1.msra.mxu0 %v221
    %373 = vmatprep.subr.mxu0 %v218
    %374 = vmatpush1.msra.mxu0 %v217
    %375 = vmatprep.subr.mxu0 %v214
    %376 = vmatpush1.msra.mxu0 %v213
    %377 = vmatprep.subr.mxu0 %v210
    %378 = vmatpush1.msra.mxu0 %v209
    %379 = vmatprep.subr.mxu0 %v206
    %380 = vmatpush1.msra.mxu0 %v205
    %381 = vmatprep.subr.mxu0 %v202
    %382 = vmatpush1.msra.mxu0 %v201
    %383 = vmatprep.subr.mxu0 %v198
    %384 = vmatpush1.msra.mxu0 %v197
    %385 = vmatprep.subr.mxu0 %v194
    %386 = vmatpush1.msra.mxu0 %v193
    %387 = vmatprep.subr.mxu0 %v190
    %388 = vmatpush1.msra.mxu0 %v189
    %389 = vmatprep.subr.mxu0 %v186
    %390 = vmatpush1.msra.mxu0 %v185
    %391 = vmatprep.subr.mxu0 %v182
    %392 = vmatpush1.msra.mxu0 %v181
    %393 = vmatprep.subr.mxu0 0.0
    %394 = vmatpush2.msra.mxu0 0.0
    %395 = vmatprep.subr.mxu0 0.0
    %396 = vmatpush2.msra.mxu0 0.0
    %397 = vmatprep.subr.mxu0 0.0
    %398 = vmatpush2.msra.mxu0 0.0
    %399 = vmatprep.subr.mxu0 0.0
    %400 = vmatpush2.msra.mxu0 0.0
    %401 = vmatprep.subr.mxu0 0.0
    %402 = vmatpush2.msra.mxu0 0.0
    %403 = vmatprep.subr.mxu0 0.0
    %404 = vmatpush2.msra.mxu0 0.0
    %405 = vmatprep.subr.mxu0 0.0
    %406 = vmatpush2.msra.mxu0 0.0
    %407 = vmatprep.subr.mxu0 0.0
    %408 = vmatpush2.msra.mxu0 0.0
    %409 = vmatprep.subr.mxu0 0.0
    %410 = vmatpush2.msra.mxu0 0.0
    %411 = vmatprep.subr.mxu0 0.0
    %412 = vmatpush2.msra.mxu0 0.0
    %413 = vmatprep.subr.mxu0 0.0
    %414 = vmatpush2.msra.mxu0 0.0
    %415 = vmatprep.subr.mxu0 0.0
    %416 = vmatpush2.msra.mxu0 0.0
    %417 = vmatprep.subr.mxu0 0.0
    %418 = vmatpush2.msra.mxu0 0.0
    %419 = vmatprep.subr.mxu0 0.0
    %420 = vmatpush2.msra.mxu0 0.0
    %421 = vmatprep.subr.mxu0 %v353
    %422 = vmatpush2.msra.mxu0 %v350
    %423 = vmatprep.subr.mxu0 %v246
    %424 = vmatpush2.msra.mxu0 %v245
    %425 = vmatprep.mubr.f32.mxu0 %v277
    %426 = vmatmul.mubr.f32.gmra.mxu0 %v133
    %v427 = vpop.f32.mrf.mxu0
    %v428 = vadd.f32 %v258, %v427
    %v429 = vpop.f32.mrf.mxu0
    %v430 = vadd.f32 %v262, %v429
    %431 = vmatprep.mubr.f32.mxu0 %v280
    %432 = vmatmul.mubr.f32.gmra.mxu0 %v135
    %v433 = vpop.f32.mrf.mxu0
    %v434 = vadd.f32 %v258, %v433
    %v435 = vpop.f32.mrf.mxu0
    %v436 = vadd.f32 %v262, %v435
    %437 = vmatprep.mubr.f32.mxu0 %v283
    %438 = vmatmul.mubr.f32.gmra.mxu0 %v137
    %v439 = vpop.f32.mrf.mxu0
    %v440 = vadd.f32 %v258, %v439
    %v441 = vpop.f32.mrf.mxu0
    %v442 = vadd.f32 %v262, %v441
    %443 = vmatprep.mubr.f32.mxu0 %v286
    %444 = vmatmul.mubr.f32.gmra.mxu0 %v139
    %v445 = vpop.f32.mrf.mxu0
    %v446 = vadd.f32 %v258, %v445
    %v447 = vpop.f32.mrf.mxu0
    %v448 = vadd.f32 %v262, %v447
    %449 = vmatprep.mubr.f32.mxu0 %v289
    %450 = vmatmul.mubr.f32.gmra.mxu0 %v141
    %v451 = vpop.f32.mrf.mxu0
    %v452 = vadd.f32 %v258, %v451
    %v453 = vpop.f32.mrf.mxu0
    %v454 = vadd.f32 %v262, %v453
    %455 = vmatprep.mubr.f32.mxu0 %v292
    %456 = vmatmul.mubr.f32.gmra.mxu0 %v143
    %v457 = vpop.f32.mrf.mxu0
    %v458 = vadd.f32 %v258, %v457
    %v459 = vpop.f32.mrf.mxu0
    %v460 = vadd.f32 %v262, %v459
    %461 = vmatprep.mubr.f32.mxu0 %v295
    %462 = vmatmul.mubr.f32.gmra.mxu0 %v145
    %v463 = vpop.f32.mrf.mxu0
    %v464 = vadd.f32 %v258, %v463
    %v465 = vpop.f32.mrf.mxu0
    %v466 = vadd.f32 %v262, %v465
    %467 = vmatprep.mubr.f32.mxu0 %v298
    %468 = vmatmul.mubr.f32.gmra.mxu0 %v147
    %v469 = vpop.f32.mrf.mxu0
    %v470 = vadd.f32 %v258, %v469
    %v471 = vpop.f32.mrf.mxu0
    %v472 = vadd.f32 %v262, %v471
    %473 = vmatprep.mubr.f32.mxu0 %v301
    %474 = vmatmul.mubr.f32.gmra.mxu0 %v149
    %v475 = vpop.f32.mrf.mxu0
    %v476 = vadd.f32 %v258, %v475
    %v477 = vpop.f32.mrf.mxu0
    %v478 = vadd.f32 %v262, %v477
    %479 = vmatprep.mubr.f32.mxu0 %v304
    %480 = vmatmul.mubr.f32.gmra.mxu0 %v151
    %v481 = vpop.f32.mrf.mxu0
    %v482 = vadd.f32 %v258, %v481
    %v483 = vpop.f32.mrf.mxu0
    %v484 = vadd.f32 %v262, %v483
    %485 = vmatprep.mubr.f32.mxu0 %v307
    %486 = vmatmul.mubr.f32.gmra.mxu0 %v153
    %v487 = vpop.f32.mrf.mxu0
    %v488 = vadd.f32 %v258, %v487
    %v489 = vpop.f32.mrf.mxu0
    %v490 = vadd.f32 %v262, %v489
    %491 = vmatprep.mubr.f32.mxu0 %v310
    %492 = vmatmul.mubr.f32.gmra.mxu0 %v155
    %v493 = vpop.f32.mrf.mxu0
    %v494 = vadd.f32 %v258, %v493
    %v495 = vpop.f32.mrf.mxu0
    %v496 = vadd.f32 %v262, %v495
    %497 = vmatprep.mubr.f32.mxu0 %v313
    %498 = vmatmul.mubr.f32.gmra.mxu0 %v157
    %v499 = vpop.f32.mrf.mxu0
    %v500 = vadd.f32 %v258, %v499
    %v501 = vpop.f32.mrf.mxu0
    %v502 = vadd.f32 %v262, %v501
    %503 = vmatprep.mubr.f32.mxu0 %v316
    %504 = vmatmul.mubr.f32.gmra.mxu0 %v159
    %v505 = vpop.f32.mrf.mxu0
    %v506 = vadd.f32 %v258, %v505
    %v507 = vpop.f32.mrf.mxu0
    %v508 = vadd.f32 %v262, %v507
    %509 = vmatprep.mubr.f32.mxu0 %v319
    %510 = vmatmul.mubr.f32.gmra.mxu0 %v161
    %v511 = vpop.f32.mrf.mxu0
    %v512 = vadd.f32 %v258, %v511
    %v513 = vpop.f32.mrf.mxu0
    %v514 = vadd.f32 %v262, %v513
    %515 = vmatprep.mubr.f32.mxu0 %v322
    %516 = vmatmul.mubr.f32.gmra.mxu0 %v163
    %v517 = vpop.f32.mrf.mxu0
    %v518 = vadd.f32 %v258, %v517
    %v519 = vpop.f32.mrf.mxu0
    %v520 = vadd.f32 %v262, %v519
    %521 = vmatprep.mubr.f32.mxu0 %v325
    %522 = vmatmul.mubr.f32.gmra.mxu0 %v165
    %v523 = vpop.f32.mrf.mxu0
    %v524 = vadd.f32 %v258, %v523
    %v525 = vpop.f32.mrf.mxu0
    %v526 = vadd.f32 %v262, %v525
    %527 = vmatprep.mubr.f32.mxu0 %v328
    %528 = vmatmul.mubr.f32.gmra.mxu0 %v167
    %v529 = vpop.f32.mrf.mxu0
    %v530 = vadd.f32 %v258, %v529
    %v531 = vpop.f32.mrf.mxu0
    %v532 = vadd.f32 %v262, %v531
    %533 = vmatprep.mubr.f32.mxu0 %v331
    %534 = vmatmul.mubr.f32.gmra.mxu0 %v169
    %v535 = vpop.f32.mrf.mxu0
    %v536 = vadd.f32 %v258, %v535
    %v537 = vpop.f32.mrf.mxu0
    %v538 = vadd.f32 %v262, %v537
    %539 = vmatprep.mubr.f32.mxu0 %v334
    %540 = vmatmul.mubr.f32.gmra.mxu0 %v171
    %v541 = vpop.f32.mrf.mxu0
    %v542 = vadd.f32 %v258, %v541
    %v543 = vpop.f32.mrf.mxu0
    %v544 = vadd.f32 %v262, %v543
    %545 = vmatprep.mubr.f32.mxu0 %v337
    %546 = vmatmul.mubr.f32.gmra.mxu0 %v173
    %v547 = vpop.f32.mrf.mxu0
    %v548 = vadd.f32 %v258, %v547
    %v549 = vpop.f32.mrf.mxu0
    %v550 = vadd.f32 %v262, %v549
    %551 = vmatprep.mubr.f32.mxu0 %v340
    %552 = vmatmul.mubr.f32.gmra.mxu0 %v175
    %v553 = vpop.f32.mrf.mxu0
    %v554 = vadd.f32 %v258, %v553
    %v555 = vpop.f32.mrf.mxu0
    %v556 = vadd.f32 %v262, %v555
    %557 = vmatprep.mubr.f32.mxu0 %v343
    %558 = vmatmul.mubr.f32.gmra.mxu0 %v177
    %v559 = vpop.f32.mrf.mxu0
    %v560 = vadd.f32 %v258, %v559
    %v561 = vpop.f32.mrf.mxu0
    %v562 = vadd.f32 %v262, %v561
    %563 = vmatprep.mubr.f32.mxu0 %v346
    %564 = vmatmul.mubr.f32.gmra.mxu0 %v179
    %v565 = vpop.f32.mrf.mxu0
    %v566 = vadd.f32 %v258, %v565
    %v567 = vpop.f32.mrf.mxu0
    %v568 = vadd.f32 %v262, %v567
    %569 = vdwg.mxu0
    %570 = vmatprep.subr.mxu0 %v244
    %571 = vmatpush1.msra.mxu0 %v243
    %572 = vmatprep.subr.mxu0 %v240
    %573 = vmatpush1.msra.mxu0 %v239
    %574 = vmatprep.subr.mxu0 %v236
    %575 = vmatpush1.msra.mxu0 %v235
    %576 = vmatprep.subr.mxu0 %v232
    %577 = vmatpush1.msra.mxu0 %v231
    %578 = vmatprep.subr.mxu0 %v228
    %579 = vmatpush1.msra.mxu0 %v227
    %580 = vmatprep.subr.mxu0 %v224
    %581 = vmatpush1.msra.mxu0 %v223
    %582 = vmatprep.subr.mxu0 %v220
    %583 = vmatpush1.msra.mxu0 %v219
    %584 = vmatprep.subr.mxu0 %v216
    %585 = vmatpush1.msra.mxu0 %v215
    %586 = vmatprep.subr.mxu0 %v212
    %587 = vmatpush1.msra.mxu0 %v211
    %588 = vmatprep.subr.mxu0 %v208
    %589 = vmatpush1.msra.mxu0 %v207
    %590 = vmatprep.subr.mxu0 %v204
    %591 = vmatpush1.msra.mxu0 %v203
    %592 = vmatprep.subr.mxu0 %v200
    %593 = vmatpush1.msra.mxu0 %v199
    %594 = vmatprep.subr.mxu0 %v196
    %595 = vmatpush1.msra.mxu0 %v195
    %596 = vmatprep.subr.mxu0 %v192
    %597 = vmatpush1.msra.mxu0 %v191
    %598 = vmatprep.subr.mxu0 %v188
    %599 = vmatpush1.msra.mxu0 %v187
    %600 = vmatprep.subr.mxu0 %v184
    %601 = vmatpush1.msra.mxu0 %v183
    %602 = vmatprep.subr.mxu0 0.0
    %603 = vmatpush2.msra.mxu0 0.0
    %604 = vmatprep.subr.mxu0 0.0
    %605 = vmatpush2.msra.mxu0 0.0
    %606 = vmatprep.subr.mxu0 0.0
    %607 = vmatpush2.msra.mxu0 0.0
    %608 = vmatprep.subr.mxu0 0.0
    %609 = vmatpush2.msra.mxu0 0.0
    %610 = vmatprep.subr.mxu0 0.0
    %611 = vmatpush2.msra.mxu0 0.0
    %612 = vmatprep.subr.mxu0 0.0
    %613 = vmatpush2.msra.mxu0 0.0
    %614 = vmatprep.subr.mxu0 0.0
    %615 = vmatpush2.msra.mxu0 0.0
    %616 = vmatprep.subr.mxu0 0.0
    %617 = vmatpush2.msra.mxu0 0.0
    %618 = vmatprep.subr.mxu0 0.0
    %619 = vmatpush2.msra.mxu0 0.0
    %620 = vmatprep.subr.mxu0 0.0
    %621 = vmatpush2.msra.mxu0 0.0
    %622 = vmatprep.subr.mxu0 0.0
    %623 = vmatpush2.msra.mxu0 0.0
    %624 = vmatprep.subr.mxu0 0.0
    %625 = vmatpush2.msra.mxu0 0.0
    %626 = vmatprep.subr.mxu0 0.0
    %627 = vmatpush2.msra.mxu0 0.0
    %628 = vmatprep.subr.mxu0 0.0
    %629 = vmatpush2.msra.mxu0 0.0
    %630 = vmatprep.subr.mxu0 %v359
    %631 = vmatpush2.msra.mxu0 %v356
    %632 = vmatprep.subr.mxu0 %v248
    %633 = vmatpush2.msra.mxu0 %v247
    %634 = vmatprep.mubr.f32.mxu0 %v277
    %635 = vmatmul.mubr.f32.gmra.mxu0 %v133
    %v636 = vpop.f32.mrf.mxu0
    %v637 = vadd.f32 %v266, %v636
    %v638 = vpop.f32.mrf.mxu0
    %v639 = vadd.f32 %v270, %v638
    %640 = vmatprep.mubr.f32.mxu0 %v280
    %641 = vmatmul.mubr.f32.gmra.mxu0 %v135
    %v642 = vpop.f32.mrf.mxu0
    %v643 = vadd.f32 %v266, %v642
    %v644 = vpop.f32.mrf.mxu0
    %v645 = vadd.f32 %v270, %v644
    %646 = vmatprep.mubr.f32.mxu0 %v283
    %647 = vmatmul.mubr.f32.gmra.mxu0 %v137
    %v648 = vpop.f32.mrf.mxu0
    %v649 = vadd.f32 %v266, %v648
    %v650 = vpop.f32.mrf.mxu0
    %v651 = vadd.f32 %v270, %v650
    %652 = vmatprep.mubr.f32.mxu0 %v286
    %653 = vmatmul.mubr.f32.gmra.mxu0 %v139
    %v654 = vpop.f32.mrf.mxu0
    %v655 = vadd.f32 %v266, %v654
    %v656 = vpop.f32.mrf.mxu0
    %v657 = vadd.f32 %v270, %v656
    %658 = vmatprep.mubr.f32.mxu0 %v289
    %659 = vmatmul.mubr.f32.gmra.mxu0 %v141
    %v660 = vpop.f32.mrf.mxu0
    %v661 = vadd.f32 %v266, %v660
    %v662 = vpop.f32.mrf.mxu0
    %v663 = vadd.f32 %v270, %v662
    %664 = vmatprep.mubr.f32.mxu0 %v292
    %665 = vmatmul.mubr.f32.gmra.mxu0 %v143
    %v666 = vpop.f32.mrf.mxu0
    %v667 = vadd.f32 %v266, %v666
    %v668 = vpop.f32.mrf.mxu0
    %v669 = vadd.f32 %v270, %v668
    %670 = vmatprep.mubr.f32.mxu0 %v295
    %671 = vmatmul.mubr.f32.gmra.mxu0 %v145
    %v672 = vpop.f32.mrf.mxu0
    %v673 = vadd.f32 %v266, %v672
    %v674 = vpop.f32.mrf.mxu0
    %v675 = vadd.f32 %v270, %v674
    %676 = vmatprep.mubr.f32.mxu0 %v298
    %677 = vmatmul.mubr.f32.gmra.mxu0 %v147
    %v678 = vpop.f32.mrf.mxu0
    %v679 = vadd.f32 %v266, %v678
    %v680 = vpop.f32.mrf.mxu0
    %v681 = vadd.f32 %v270, %v680
    %682 = vmatprep.mubr.f32.mxu0 %v301
    %683 = vmatmul.mubr.f32.gmra.mxu0 %v149
    %v684 = vpop.f32.mrf.mxu0
    %v685 = vadd.f32 %v266, %v684
    %v686 = vpop.f32.mrf.mxu0
    %v687 = vadd.f32 %v270, %v686
    %688 = vmatprep.mubr.f32.mxu0 %v304
    %689 = vmatmul.mubr.f32.gmra.mxu0 %v151
    %v690 = vpop.f32.mrf.mxu0
    %v691 = vadd.f32 %v266, %v690
    %v692 = vpop.f32.mrf.mxu0
    %v693 = vadd.f32 %v270, %v692
    %694 = vmatprep.mubr.f32.mxu0 %v307
    %695 = vmatmul.mubr.f32.gmra.mxu0 %v153
    %v696 = vpop.f32.mrf.mxu0
    %v697 = vadd.f32 %v266, %v696
    %v698 = vpop.f32.mrf.mxu0
    %v699 = vadd.f32 %v270, %v698
    %700 = vmatprep.mubr.f32.mxu0 %v310
    %701 = vmatmul.mubr.f32.gmra.mxu0 %v155
    %v702 = vpop.f32.mrf.mxu0
    %v703 = vadd.f32 %v266, %v702
    %v704 = vpop.f32.mrf.mxu0
    %v705 = vadd.f32 %v270, %v704
    %706 = vmatprep.mubr.f32.mxu0 %v313
    %707 = vmatmul.mubr.f32.gmra.mxu0 %v157
    %v708 = vpop.f32.mrf.mxu0
    %v709 = vadd.f32 %v266, %v708
    %v710 = vpop.f32.mrf.mxu0
    %v711 = vadd.f32 %v270, %v710
    %712 = vmatprep.mubr.f32.mxu0 %v316
    %713 = vmatmul.mubr.f32.gmra.mxu0 %v159
    %v714 = vpop.f32.mrf.mxu0
    %v715 = vadd.f32 %v266, %v714
    %v716 = vpop.f32.mrf.mxu0
    %v717 = vadd.f32 %v270, %v716
    %718 = vmatprep.mubr.f32.mxu0 %v319
    %719 = vmatmul.mubr.f32.gmra.mxu0 %v161
    %v720 = vpop.f32.mrf.mxu0
    %v721 = vadd.f32 %v266, %v720
    %v722 = vpop.f32.mrf.mxu0
    %v723 = vadd.f32 %v270, %v722
    %724 = vmatprep.mubr.f32.mxu0 %v322
    %725 = vmatmul.mubr.f32.gmra.mxu0 %v163
    %v726 = vpop.f32.mrf.mxu0
    %v727 = vadd.f32 %v266, %v726
    %v728 = vpop.f32.mrf.mxu0
    %v729 = vadd.f32 %v270, %v728
    %730 = vmatprep.mubr.f32.mxu0 %v325
    %731 = vmatmul.mubr.f32.gmra.mxu0 %v165
    %v732 = vpop.f32.mrf.mxu0
    %v733 = vadd.f32 %v266, %v732
    %v734 = vpop.f32.mrf.mxu0
    %v735 = vadd.f32 %v270, %v734
    %736 = vmatprep.mubr.f32.mxu0 %v328
    %737 = vmatmul.mubr.f32.gmra.mxu0 %v167
    %v738 = vpop.f32.mrf.mxu0
    %v739 = vadd.f32 %v266, %v738
    %v740 = vpop.f32.mrf.mxu0
    %v741 = vadd.f32 %v270, %v740
    %742 = vmatprep.mubr.f32.mxu0 %v331
    %743 = vmatmul.mubr.f32.gmra.mxu0 %v169
    %v744 = vpop.f32.mrf.mxu0
    %v745 = vadd.f32 %v266, %v744
    %v746 = vpop.f32.mrf.mxu0
    %v747 = vadd.f32 %v270, %v746
    %748 = vmatprep.mubr.f32.mxu0 %v334
    %749 = vmatmul.mubr.f32.gmra.mxu0 %v171
    %v750 = vpop.f32.mrf.mxu0
    %v751 = vadd.f32 %v266, %v750
    %v752 = vpop.f32.mrf.mxu0
    %v753 = vadd.f32 %v270, %v752
    %754 = vmatprep.mubr.f32.mxu0 %v337
    %755 = vmatmul.mubr.f32.gmra.mxu0 %v173
    %v756 = vpop.f32.mrf.mxu0
    %v757 = vadd.f32 %v266, %v756
    %v758 = vpop.f32.mrf.mxu0
    %v759 = vadd.f32 %v270, %v758
    %760 = vmatprep.mubr.f32.mxu0 %v340
    %761 = vmatmul.mubr.f32.gmra.mxu0 %v175
    %v762 = vpop.f32.mrf.mxu0
    %v763 = vadd.f32 %v266, %v762
    %v764 = vpop.f32.mrf.mxu0
    %v765 = vadd.f32 %v270, %v764
    %766 = vmatprep.mubr.f32.mxu0 %v343
    %767 = vmatmul.mubr.f32.gmra.mxu0 %v177
    %v768 = vpop.f32.mrf.mxu0
    %v769 = vadd.f32 %v266, %v768
    %v770 = vpop.f32.mrf.mxu0
    %v771 = vadd.f32 %v270, %v770
    %772 = vmatprep.mubr.f32.mxu0 %v346
    %773 = vmatmul.mubr.f32.gmra.mxu0 %v179
    %v774 = vpop.f32.mrf.mxu0
    %v775 = vadd.f32 %v266, %v774
    %v776 = vpop.f32.mrf.mxu0
    %v777 = vadd.f32 %v270, %v776
    %778 = vdwg.mxu0
    %v779 = vmax.f32 %v428, 0.0
    %v780 = vmax.f32 %v430, 0.0
    %v781 = vmax.f32 %v637, 0.0
    %v782 = vmax.f32 %v639, 0.0
    %v783 = vmax.f32 %v434, 0.0
    %v784 = vmax.f32 %v436, 0.0
    %v785 = vmax.f32 %v643, 0.0
    %v786 = vmax.f32 %v645, 0.0
    %v787 = vmax.f32 %v440, 0.0
    %v788 = vmax.f32 %v442, 0.0
    %v789 = vmax.f32 %v649, 0.0
    %v790 = vmax.f32 %v651, 0.0
    %v791 = vmax.f32 %v446, 0.0
    %v792 = vmax.f32 %v448, 0.0
    %v793 = vmax.f32 %v655, 0.0
    %v794 = vmax.f32 %v657, 0.0
    %v795 = vmax.f32 %v452, 0.0
    %v796 = vmax.f32 %v454, 0.0
    %v797 = vmax.f32 %v661, 0.0
    %v798 = vmax.f32 %v663, 0.0
    %v799 = vmax.f32 %v458, 0.0
    %v800 = vmax.f32 %v460, 0.0
    %v801 = vmax.f32 %v667, 0.0
    %v802 = vmax.f32 %v669, 0.0
    %v803 = vmax.f32 %v464, 0.0
    %v804 = vmax.f32 %v466, 0.0
    %v805 = vmax.f32 %v673, 0.0
    %v806 = vmax.f32 %v675, 0.0
    %v807 = vmax.f32 %v470, 0.0
    %v808 = vmax.f32 %v472, 0.0
    %v809 = vmax.f32 %v679, 0.0
    %v810 = vmax.f32 %v681, 0.0
    %v811 = vmax.f32 %v476, 0.0
    %v812 = vmax.f32 %v478, 0.0
    %v813 = vmax.f32 %v685, 0.0
    %v814 = vmax.f32 %v687, 0.0
    %v815 = vmax.f32 %v482, 0.0
    %v816 = vmax.f32 %v484, 0.0
    %v817 = vmax.f32 %v691, 0.0
    %v818 = vmax.f32 %v693, 0.0
    %v819 = vmax.f32 %v488, 0.0
    %v820 = vmax.f32 %v490, 0.0
    %v821 = vmax.f32 %v697, 0.0
    %v822 = vmax.f32 %v699, 0.0
    %v823 = vmax.f32 %v494, 0.0
    %v824 = vmax.f32 %v496, 0.0
    %v825 = vmax.f32 %v703, 0.0
    %v826 = vmax.f32 %v705, 0.0
    %v827 = vmax.f32 %v500, 0.0
    %v828 = vmax.f32 %v502, 0.0
    %v829 = vmax.f32 %v709, 0.0
    %v830 = vmax.f32 %v711, 0.0
    %v831 = vmax.f32 %v506, 0.0
    %v832 = vmax.f32 %v508, 0.0
    %v833 = vmax.f32 %v715, 0.0
    %v834 = vmax.f32 %v717, 0.0
    %v835 = vmax.f32 %v512, 0.0
    %v836 = vmax.f32 %v514, 0.0
    %v837 = vmax.f32 %v721, 0.0
    %v838 = vmax.f32 %v723, 0.0
    %v839 = vmax.f32 %v518, 0.0
    %v840 = vmax.f32 %v520, 0.0
    %v841 = vmax.f32 %v727, 0.0
    %v842 = vmax.f32 %v729, 0.0
    %v843 = vmax.f32 %v524, 0.0
    %v844 = vmax.f32 %v526, 0.0
    %v845 = vmax.f32 %v733, 0.0
    %v846 = vmax.f32 %v735, 0.0
    %v847 = vmax.f32 %v530, 0.0
    %v848 = vmax.f32 %v532, 0.0
    %v849 = vmax.f32 %v739, 0.0
    %v850 = vmax.f32 %v741, 0.0
    %v851 = vmax.f32 %v536, 0.0
    %v852 = vmax.f32 %v538, 0.0
    %v853 = vmax.f32 %v745, 0.0
    %v854 = vmax.f32 %v747, 0.0
    %v855 = vmax.f32 %v542, 0.0
    %v856 = vmax.f32 %v544, 0.0
    %v857 = vmax.f32 %v751, 0.0
    %v858 = vmax.f32 %v753, 0.0
    %v859 = vmax.f32 %v548, 0.0
    %v860 = vmax.f32 %v550, 0.0
    %v861 = vmax.f32 %v757, 0.0
    %v862 = vmax.f32 %v759, 0.0
    %v863 = vmax.f32 %v554, 0.0
    %v864 = vmax.f32 %v556, 0.0
    %v865 = vmax.f32 %v763, 0.0
    %v866 = vmax.f32 %v765, 0.0
    %v867 = vmax.f32 %v560, 0.0
    %v868 = vmax.f32 %v562, 0.0
    %v869 = vmax.f32 %v769, 0.0
    %v870 = vmax.f32 %v771, 0.0
    %v871 = vmax.f32 %v566, 0.0
    %v872 = vmax.f32 %v568, 0.0
    %v873 = vmax.f32 %v775, 0.0
    %v874 = vmax.f32 %v777, 0.0
    %v875 = vmax.f32 %v779, %v783
    %v876 = vmax.f32 %v780, %v784
    %v877 = vmax.f32 %v781, %v785
    %v878 = vmax.f32 %v782, %v786
    %v879 = vmax.f32 %v875, %v877
    %v880 = vmax.f32 %v876, %v878
    %881 = vst [vmem:[#allocation2] sm:$0xff] %v879
    %882 = vst [vmem:[#allocation2 + $0x8] sm:$0xff] %v880
    %v883 = vmax.f32 %v787, %v791
    %v884 = vmax.f32 %v788, %v792
    %v885 = vmax.f32 %v789, %v793
    %v886 = vmax.f32 %v790, %v794
    %v887 = vmax.f32 %v883, %v885
    %v888 = vmax.f32 %v884, %v886
    %s889 = scalar_lea.vmem [#allocation2], 16
    %890 = vst [vmem:[%s889] sm:$0xff] %v887
    %891 = vst [vmem:[%s889 + $0x8] sm:$0xff] %v888
    %v892 = vmax.f32 %v795, %v799
    %v893 = vmax.f32 %v796, %v800
    %v894 = vmax.f32 %v797, %v801
    %v895 = vmax.f32 %v798, %v802
    %v896 = vmax.f32 %v892, %v894
    %v897 = vmax.f32 %v893, %v895
    %s898 = scalar_lea.vmem [#allocation2], 32
    %899 = vst [vmem:[%s898] sm:$0xff] %v896
    %900 = vst [vmem:[%s898 + $0x8] sm:$0xff] %v897
    %v901 = vmax.f32 %v803, %v807
    %v902 = vmax.f32 %v804, %v808
    %v903 = vmax.f32 %v805, %v809
    %v904 = vmax.f32 %v806, %v810
    %v905 = vmax.f32 %v901, %v903
    %v906 = vmax.f32 %v902, %v904
    %s907 = scalar_lea.vmem [#allocation2], 48
    %908 = vst [vmem:[%s907] sm:$0xff] %v905
    %909 = vst [vmem:[%s907 + $0x8] sm:$0xff] %v906
    %v910 = vmax.f32 %v811, %v815
    %v911 = vmax.f32 %v812, %v816
    %v912 = vmax.f32 %v813, %v817
    %v913 = vmax.f32 %v814, %v818
    %v914 = vmax.f32 %v910, %v912
    %v915 = vmax.f32 %v911, %v913
    %s916 = scalar_lea.vmem [#allocation2], 64
    %917 = vst [vmem:[%s916] sm:$0xff] %v914
    %918 = vst [vmem:[%s916 + $0x8] sm:$0xff] %v915
    %v919 = vmax.f32 %v819, %v823
    %v920 = vmax.f32 %v820, %v824
    %v921 = vmax.f32 %v821, %v825
    %v922 = vmax.f32 %v822, %v826
    %v923 = vmax.f32 %v919, %v921
    %v924 = vmax.f32 %v920, %v922
    %s925 = scalar_lea.vmem [#allocation2], 80
    %926 = vst [vmem:[%s925] sm:$0xff] %v923
    %927 = vst [vmem:[%s925 + $0x8] sm:$0xff] %v924
    %v928 = vmax.f32 %v827, %v831
    %v929 = vmax.f32 %v828, %v832
    %v930 = vmax.f32 %v829, %v833
    %v931 = vmax.f32 %v830, %v834
    %v932 = vmax.f32 %v928, %v930
    %v933 = vmax.f32 %v929, %v931
    %s934 = scalar_lea.vmem [#allocation2], 96
    %935 = vst [vmem:[%s934] sm:$0xff] %v932
    %936 = vst [vmem:[%s934 + $0x8] sm:$0xff] %v933
    %v937 = vmax.f32 %v835, %v839
    %v938 = vmax.f32 %v836, %v840
    %v939 = vmax.f32 %v837, %v841
    %v940 = vmax.f32 %v838, %v842
    %v941 = vmax.f32 %v937, %v939
    %v942 = vmax.f32 %v938, %v940
    %s943 = scalar_lea.vmem [#allocation2], 112
    %944 = vst [vmem:[%s943] sm:$0xff] %v941
    %945 = vst [vmem:[%s943 + $0x8] sm:$0xff] %v942
    %v946 = vmax.f32 %v843, %v847
    %v947 = vmax.f32 %v844, %v848
    %v948 = vmax.f32 %v845, %v849
    %v949 = vmax.f32 %v846, %v850
    %v950 = vmax.f32 %v946, %v948
    %v951 = vmax.f32 %v947, %v949
    %s952 = scalar_lea.vmem [#allocation2], 128
    %953 = vst [vmem:[%s952] sm:$0xff] %v950
    %954 = vst [vmem:[%s952 + $0x8] sm:$0xff] %v951
    %v955 = vmax.f32 %v851, %v855
    %v956 = vmax.f32 %v852, %v856
    %v957 = vmax.f32 %v853, %v857
    %v958 = vmax.f32 %v854, %v858
    %v959 = vmax.f32 %v955, %v957
    %v960 = vmax.f32 %v956, %v958
    %s961 = scalar_lea.vmem [#allocation2], 144
    %962 = vst [vmem:[%s961] sm:$0xff] %v959
    %963 = vst [vmem:[%s961 + $0x8] sm:$0xff] %v960
    %v964 = vmax.f32 %v859, %v863
    %v965 = vmax.f32 %v860, %v864
    %v966 = vmax.f32 %v861, %v865
    %v967 = vmax.f32 %v862, %v866
    %v968 = vmax.f32 %v964, %v966
    %v969 = vmax.f32 %v965, %v967
    %s970 = scalar_lea.vmem [#allocation2], 160
    %971 = vst [vmem:[%s970] sm:$0xff] %v968
    %972 = vst [vmem:[%s970 + $0x8] sm:$0xff] %v969
    %v973 = vmax.f32 %v867, %v871
    %v974 = vmax.f32 %v868, %v872
    %v975 = vmax.f32 %v869, %v873
    %v976 = vmax.f32 %v870, %v874
    %v977 = vmax.f32 %v973, %v975
    %v978 = vmax.f32 %v974, %v976
    %s979 = scalar_lea.vmem [#allocation2], 176
    %980 = vst [vmem:[%s979] sm:$0xff] %v977
    %981 = vst [vmem:[%s979 + $0x8] sm:$0xff] %v978
    %v982 = vld [vmem:[#allocation2] sm:$0xff]
    %v983 = vld [vmem:[#allocation2 + $0x8] sm:$0xff]
    %v984 = vld [vmem:[#allocation2 + $0x10] sm:$0xff]
    %v985 = vld [vmem:[#allocation2 + $0x18] sm:$0xff]
    %v986 = vld [vmem:[#allocation2 + $0x20] sm:$0xff]
    %v987 = vld [vmem:[#allocation2 + $0x28] sm:$0xff]
    %v988 = vld [vmem:[#allocation2 + $0x30] sm:$0xff]
    %v989 = vld [vmem:[#allocation2 + $0x38] sm:$0xff]
    %v990 = vld [vmem:[#allocation2 + $0x40] sm:$0xff]
    %v991 = vld [vmem:[#allocation2 + $0x48] sm:$0xff]
    %v992 = vld [vmem:[#allocation2 + $0x50] sm:$0xff]
    %v993 = vld [vmem:[#allocation2 + $0x58] sm:$0xff]
    %v994 = vld [vmem:[#allocation2 + $0x60] sm:$0xff]
    %v995 = vld [vmem:[#allocation2 + $0x68] sm:$0xff]
    %v996 = vld [vmem:[#allocation2 + $0x70] sm:$0xff]
    %v997 = vld [vmem:[#allocation2 + $0x78] sm:$0xff]
    %v998 = vld [vmem:[%s889] sm:$0xff]
    %v999 = vld [vmem:[%s889 + $0x8] sm:$0xff]
    %v1000 = vld [vmem:[%s889 + $0x10] sm:$0xff]
    %v1001 = vld [vmem:[%s889 + $0x18] sm:$0xff]
    %v1002 = vld [vmem:[%s889 + $0x20] sm:$0xff]
    %v1003 = vld [vmem:[%s889 + $0x28] sm:$0xff]
    %v1004 = vld [vmem:[%s889 + $0x30] sm:$0xff]
    %v1005 = vld [vmem:[%s889 + $0x38] sm:$0xff]
    %v1006 = vld [vmem:[%s889 + $0x40] sm:$0xff]
    %v1007 = vld [vmem:[%s889 + $0x48] sm:$0xff]
    %v1008 = vld [vmem:[%s889 + $0x50] sm:$0xff]
    %v1009 = vld [vmem:[%s889 + $0x58] sm:$0xff]
    %v1010 = vld [vmem:[%s889 + $0x60] sm:$0xff]
    %v1011 = vld [vmem:[%s889 + $0x68] sm:$0xff]
    %v1012 = vld [vmem:[%s889 + $0x70] sm:$0xff]
    %v1013 = vld [vmem:[%s889 + $0x78] sm:$0xff]
    %v1014 = vld [vmem:[%s898] sm:$0xff]
    %v1015 = vld [vmem:[%s898 + $0x8] sm:$0xff]
    %v1016 = vld [vmem:[%s898 + $0x10] sm:$0xff]
    %v1017 = vld [vmem:[%s898 + $0x18] sm:$0xff]
    %v1018 = vld [vmem:[%s898 + $0x20] sm:$0xff]
    %v1019 = vld [vmem:[%s898 + $0x28] sm:$0xff]
    %v1020 = vld [vmem:[%s898 + $0x30] sm:$0xff]
    %v1021 = vld [vmem:[%s898 + $0x38] sm:$0xff]
    %v1022 = vld [vmem:[%s898 + $0x40] sm:$0xff]
    %v1023 = vld [vmem:[%s898 + $0x48] sm:$0xff]
    %v1024 = vld [vmem:[%s898 + $0x50] sm:$0xff]
    %v1025 = vld [vmem:[%s898 + $0x58] sm:$0xff]
    %v1026 = vld [vmem:[%s898 + $0x60] sm:$0xff]
    %v1027 = vld [vmem:[%s898 + $0x68] sm:$0xff]
    %v1028 = vld [vmem:[%s898 + $0x70] sm:$0xff]
    %v1029 = vld [vmem:[%s898 + $0x78] sm:$0xff]
    %v1030 = vld [vmem:[%s907] sm:$0xff]
    %v1031 = vld [vmem:[%s907 + $0x8] sm:$0xff]
    %v1032 = vld [vmem:[%s907 + $0x10] sm:$0xff]
    %v1033 = vld [vmem:[%s907 + $0x18] sm:$0xff]
    %v1034 = vld [vmem:[%s907 + $0x20] sm:$0xff]
    %v1035 = vld [vmem:[%s907 + $0x28] sm:$0xff]
    %v1036 = vld [vmem:[%s907 + $0x30] sm:$0xff]
    %v1037 = vld [vmem:[%s907 + $0x38] sm:$0xff]
    %v1038 = vld [vmem:[%s907 + $0x40] sm:$0xff]
    %v1039 = vld [vmem:[%s907 + $0x48] sm:$0xff]
    %v1040 = vld [vmem:[%s907 + $0x50] sm:$0xff]
    %v1041 = vld [vmem:[%s907 + $0x58] sm:$0xff]
    %v1042 = vld [vmem:[%s907 + $0x60] sm:$0xff]
    %v1043 = vld [vmem:[%s907 + $0x68] sm:$0xff]
    %v1044 = vld [vmem:[%s907 + $0x70] sm:$0xff]
    %v1045 = vld [vmem:[%s907 + $0x78] sm:$0xff]
    %v1046 = vld [vmem:[%s916] sm:$0xff]
    %v1047 = vld [vmem:[%s916 + $0x8] sm:$0xff]
    %v1048 = vld [vmem:[%s916 + $0x10] sm:$0xff]
    %v1049 = vld [vmem:[%s916 + $0x18] sm:$0xff]
    %v1050 = vld [vmem:[%s916 + $0x20] sm:$0xff]
    %v1051 = vld [vmem:[%s916 + $0x28] sm:$0xff]
    %v1052 = vld [vmem:[%s916 + $0x30] sm:$0xff]
    %v1053 = vld [vmem:[%s916 + $0x38] sm:$0xff]
    %v1054 = vld [vmem:[%s916 + $0x40] sm:$0xff]
    %v1055 = vld [vmem:[%s916 + $0x48] sm:$0xff]
    %v1056 = vld [vmem:[%s916 + $0x50] sm:$0xff]
    %v1057 = vld [vmem:[%s916 + $0x58] sm:$0xff]
    %v1058 = vld [vmem:[%s916 + $0x60] sm:$0xff]
    %v1059 = vld [vmem:[%s916 + $0x68] sm:$0xff]
    %v1060 = vld [vmem:[%s916 + $0x70] sm:$0xff]
    %v1061 = vld [vmem:[%s916 + $0x78] sm:$0xff]
    %v1062 = vld [vmem:[#allocation7] sm:$0xff]
    %v1063 = vld [vmem:[#allocation7 + $0x8] sm:$0xff]
    %v1064 = vld [vmem:[#allocation7 + $0x10] sm:$0xff]
    %v1065 = vld [vmem:[#allocation7 + $0x18] sm:$0xff]
    %v1066 = vld [vmem:[#allocation7 + $0x20] sm:$0xff]
    %v1067 = vld [vmem:[#allocation7 + $0x28] sm:$0xff]
    %v1068 = vld [vmem:[#allocation7 + $0x30] sm:$0xff]
    %v1069 = vld [vmem:[#allocation7 + $0x38] sm:$0xff]
    %v1070 = vld [vmem:[#allocation7 + $0x40] sm:$0xff]
    %v1071 = vld [vmem:[#allocation7 + $0x48] sm:$0xff]
    %v1072 = vld [vmem:[#allocation7 + $0x50] sm:$0xff]
    %v1073 = vld [vmem:[#allocation7 + $0x58] sm:$0xff]
    %v1074 = vld [vmem:[#allocation7 + $0x60] sm:$0xff]
    %v1075 = vld [vmem:[#allocation7 + $0x68] sm:$0xff]
    %v1076 = vld [vmem:[#allocation7 + $0x70] sm:$0xff]
    %v1077 = vld [vmem:[#allocation7 + $0x78] sm:$0xff]
    %v1078 = vld [vmem:[#allocation7 + $0x80] sm:$0xff]
    %v1079 = vld [vmem:[#allocation7 + $0x88] sm:$0xff]
    %v1080 = vld [vmem:[#allocation7 + $0x90] sm:$0xff]
    %v1081 = vld [vmem:[#allocation7 + $0x98] sm:$0xff]
    %v1082 = vld [vmem:[#allocation7 + $0xa0] sm:$0xff]
    %v1083 = vld [vmem:[#allocation7 + $0xa8] sm:$0xff]
    %v1084 = vld [vmem:[#allocation7 + $0xb0] sm:$0xff]
    %v1085 = vld [vmem:[#allocation7 + $0xb8] sm:$0xff]
    %v1086 = vld [vmem:[#allocation7 + $0xc0] sm:$0xff]
    %v1087 = vld [vmem:[#allocation7 + $0xc8] sm:$0xff]
    %v1088 = vld [vmem:[#allocation7 + $0xd0] sm:$0xff]
    %v1089 = vld [vmem:[#allocation7 + $0xd8] sm:$0xff]
    %v1090 = vld [vmem:[#allocation7 + $0xe0] sm:$0xff]
    %v1091 = vld [vmem:[#allocation7 + $0xe8] sm:$0xff]
    %v1092 = vld [vmem:[#allocation7 + $0xf0] sm:$0xff]
    %v1093 = vld [vmem:[#allocation7 + $0xf8] sm:$0xff]
    %v1094 = vld [vmem:[#allocation7 + $0x100] sm:$0xff]
    %v1095 = vld [vmem:[#allocation7 + $0x108] sm:$0xff]
    %v1096 = vld [vmem:[#allocation7 + $0x110] sm:$0xff]
    %v1097 = vld [vmem:[#allocation7 + $0x118] sm:$0xff]
    %v1098 = vld [vmem:[#allocation7 + $0x120] sm:$0xff]
    %v1099 = vld [vmem:[#allocation7 + $0x128] sm:$0xff]
    %v1100 = vld [vmem:[#allocation7 + $0x130] sm:$0xff]
    %v1101 = vld [vmem:[#allocation7 + $0x138] sm:$0xff]
    %v1102 = vld [vmem:[#allocation7 + $0x140] sm:$0xff]
    %v1103 = vld [vmem:[#allocation7 + $0x148] sm:$0xff]
    %v1104 = vld [vmem:[#allocation7 + $0x150] sm:$0xff]
    %v1105 = vld [vmem:[#allocation7 + $0x158] sm:$0xff]
    %v1106 = vld [vmem:[#allocation7 + $0x160] sm:$0xff]
    %v1107 = vld [vmem:[#allocation7 + $0x168] sm:$0xff]
    %v1108 = vld [vmem:[#allocation7 + $0x170] sm:$0xff]
    %v1109 = vld [vmem:[#allocation7 + $0x178] sm:$0xff]
    %v1110 = vld [vmem:[#allocation7 + $0x180] sm:$0xff]
    %v1111 = vld [vmem:[#allocation7 + $0x188] sm:$0xff]
    %v1112 = vld [vmem:[#allocation7 + $0x190] sm:$0xff]
    %v1113 = vld [vmem:[#allocation7 + $0x198] sm:$0xff]
    %v1114 = vld [vmem:[#allocation7 + $0x1a0] sm:$0xff]
    %v1115 = vld [vmem:[#allocation7 + $0x1a8] sm:$0xff]
    %v1116 = vld [vmem:[#allocation7 + $0x1b0] sm:$0xff]
    %v1117 = vld [vmem:[#allocation7 + $0x1b8] sm:$0xff]
    %v1118 = vld [vmem:[#allocation7 + $0x1c0] sm:$0xff]
    %v1119 = vld [vmem:[#allocation7 + $0x1c8] sm:$0xff]
    %v1120 = vld [vmem:[#allocation7 + $0x1d0] sm:$0xff]
    %v1121 = vld [vmem:[#allocation7 + $0x1d8] sm:$0xff]
    %v1122 = vld [vmem:[#allocation7 + $0x1e0] sm:$0xff]
    %v1123 = vld [vmem:[#allocation7 + $0x1e8] sm:$0xff]
    %v1124 = vld [vmem:[#allocation7 + $0x1f0] sm:$0xff]
    %v1125 = vld [vmem:[#allocation7 + $0x1f8] sm:$0xff]
    %v1126 = vld [vmem:[#allocation7 + $0x200] sm:$0xff]
    %v1127 = vld [vmem:[#allocation7 + $0x208] sm:$0xff]
    %v1128 = vld [vmem:[#allocation7 + $0x210] sm:$0xff]
    %v1129 = vld [vmem:[#allocation7 + $0x218] sm:$0xff]
    %v1130 = vld [vmem:[#allocation7 + $0x220] sm:$0xff]
    %v1131 = vld [vmem:[#allocation7 + $0x228] sm:$0xff]
    %v1132 = vld [vmem:[#allocation7 + $0x230] sm:$0xff]
    %v1133 = vld [vmem:[#allocation7 + $0x238] sm:$0xff]
    %v1134 = vld [vmem:[#allocation7 + $0x240] sm:$0xff]
    %v1135 = vld [vmem:[#allocation7 + $0x248] sm:$0xff]
    %v1136 = vld [vmem:[#allocation7 + $0x250] sm:$0xff]
    %v1137 = vld [vmem:[#allocation7 + $0x258] sm:$0xff]
    %v1138 = vld [vmem:[#allocation7 + $0x260] sm:$0xff]
    %v1139 = vld [vmem:[#allocation7 + $0x268] sm:$0xff]
    %v1140 = vld [vmem:[#allocation7 + $0x270] sm:$0xff]
    %v1141 = vld [vmem:[#allocation7 + $0x278] sm:$0xff]
    %v1142 = vld [vmem:[#allocation7 + $0x280] sm:$0xff]
    %v1143 = vld [vmem:[#allocation7 + $0x288] sm:$0xff]
    %v1144 = vld [vmem:[#allocation7 + $0x290] sm:$0xff]
    %v1145 = vld [vmem:[#allocation7 + $0x298] sm:$0xff]
    %v1146 = vld [vmem:[#allocation7 + $0x2a0] sm:$0xff]
    %v1147 = vld [vmem:[#allocation7 + $0x2a8] sm:$0xff]
    %v1148 = vld [vmem:[#allocation7 + $0x2b0] sm:$0xff]
    %v1149 = vld [vmem:[#allocation7 + $0x2b8] sm:$0xff]
    %v1150 = vld [vmem:[#allocation7 + $0x2c0] sm:$0xff]
    %v1151 = vld [vmem:[#allocation7 + $0x2c8] sm:$0xff]
    %v1152 = vld [vmem:[#allocation7 + $0x2d0] sm:$0xff]
    %v1153 = vld [vmem:[#allocation7 + $0x2d8] sm:$0xff]
    %v1154 = vld [vmem:[#allocation7 + $0x2e0] sm:$0xff]
    %v1155 = vld [vmem:[#allocation7 + $0x2e8] sm:$0xff]
    %v1156 = vld [vmem:[#allocation7 + $0x2f0] sm:$0xff]
    %v1157 = vld [vmem:[#allocation7 + $0x2f8] sm:$0xff]
    %v1158 = vld [vmem:[#allocation7 + $0x300] sm:$0xff]
    %v1159 = vld [vmem:[#allocation7 + $0x308] sm:$0xff]
    %v1160 = vld [vmem:[#allocation7 + $0x310] sm:$0xff]
    %v1161 = vld [vmem:[#allocation7 + $0x318] sm:$0xff]
    %v1162 = vld [vmem:[#allocation7 + $0x320] sm:$0xff]
    %v1163 = vld [vmem:[#allocation7 + $0x328] sm:$0xff]
    %v1164 = vld [vmem:[#allocation7 + $0x330] sm:$0xff]
    %v1165 = vld [vmem:[#allocation7 + $0x338] sm:$0xff]
    %v1166 = vld [vmem:[#allocation7 + $0x340] sm:$0xff]
    %v1167 = vld [vmem:[#allocation7 + $0x348] sm:$0xff]
    %v1168 = vld [vmem:[#allocation7 + $0x350] sm:$0xff]
    %v1169 = vld [vmem:[#allocation7 + $0x358] sm:$0xff]
    %v1170 = vld [vmem:[#allocation7 + $0x360] sm:$0xff]
    %v1171 = vld [vmem:[#allocation7 + $0x368] sm:$0xff]
    %v1172 = vld [vmem:[#allocation7 + $0x370] sm:$0xff]
    %v1173 = vld [vmem:[#allocation7 + $0x378] sm:$0xff]
    %v1174 = vld [vmem:[#allocation7 + $0x380] sm:$0xff]
    %v1175 = vld [vmem:[#allocation7 + $0x388] sm:$0xff]
    %v1176 = vld [vmem:[#allocation7 + $0x390] sm:$0xff]
    %v1177 = vld [vmem:[#allocation7 + $0x398] sm:$0xff]
    %v1178 = vld [vmem:[#allocation7 + $0x3a0] sm:$0xff]
    %v1179 = vld [vmem:[#allocation7 + $0x3a8] sm:$0xff]
    %v1180 = vld [vmem:[#allocation7 + $0x3b0] sm:$0xff]
    %v1181 = vld [vmem:[#allocation7 + $0x3b8] sm:$0xff]
    %v1182 = vld [vmem:[#allocation7 + $0x3c0] sm:$0xff]
    %v1183 = vld [vmem:[#allocation7 + $0x3c8] sm:$0xff]
    %v1184 = vld [vmem:[#allocation7 + $0x3d0] sm:$0xff]
    %v1185 = vld [vmem:[#allocation7 + $0x3d8] sm:$0xff]
    %v1186 = vld [vmem:[#allocation7 + $0x3e0] sm:$0xff]
    %v1187 = vld [vmem:[#allocation7 + $0x3e8] sm:$0xff]
    %v1188 = vld [vmem:[#allocation7 + $0x3f0] sm:$0xff]
    %v1189 = vld [vmem:[#allocation7 + $0x3f8] sm:$0xff]
    %v1190 = vld [vmem:[#allocation7 + $0x400] sm:$0xff]
    %v1191 = vld [vmem:[#allocation7 + $0x408] sm:$0xff]
    %v1192 = vld [vmem:[#allocation7 + $0x410] sm:$0xff]
    %v1193 = vld [vmem:[#allocation7 + $0x418] sm:$0xff]
    %v1194 = vld [vmem:[#allocation7 + $0x420] sm:$0xff]
    %v1195 = vld [vmem:[#allocation7 + $0x428] sm:$0xff]
    %v1196 = vld [vmem:[#allocation7 + $0x430] sm:$0xff]
    %v1197 = vld [vmem:[#allocation7 + $0x438] sm:$0xff]
    %v1198 = vld [vmem:[#allocation7 + $0x440] sm:$0xff]
    %v1199 = vld [vmem:[#allocation7 + $0x448] sm:$0xff]
    %v1200 = vld [vmem:[#allocation7 + $0x450] sm:$0xff]
    %v1201 = vld [vmem:[#allocation7 + $0x458] sm:$0xff]
    %v1202 = vld [vmem:[#allocation7 + $0x460] sm:$0xff]
    %v1203 = vld [vmem:[#allocation7 + $0x468] sm:$0xff]
    %v1204 = vld [vmem:[#allocation7 + $0x470] sm:$0xff]
    %v1205 = vld [vmem:[#allocation7 + $0x478] sm:$0xff]
    %v1206 = vld [vmem:[#allocation7 + $0x480] sm:$0xff]
    %v1207 = vld [vmem:[#allocation7 + $0x488] sm:$0xff]
    %v1208 = vld [vmem:[#allocation7 + $0x490] sm:$0xff]
    %v1209 = vld [vmem:[#allocation7 + $0x498] sm:$0xff]
    %v1210 = vld [vmem:[#allocation7 + $0x4a0] sm:$0xff]
    %v1211 = vld [vmem:[#allocation7 + $0x4a8] sm:$0xff]
    %v1212 = vld [vmem:[#allocation7 + $0x4b0] sm:$0xff]
    %v1213 = vld [vmem:[#allocation7 + $0x4b8] sm:$0xff]
    %v1214 = vld [vmem:[#allocation7 + $0x4c0] sm:$0xff]
    %v1215 = vld [vmem:[#allocation7 + $0x4c8] sm:$0xff]
    %v1216 = vld [vmem:[#allocation7 + $0x4d0] sm:$0xff]
    %v1217 = vld [vmem:[#allocation7 + $0x4d8] sm:$0xff]
    %v1218 = vld [vmem:[#allocation7 + $0x4e0] sm:$0xff]
    %v1219 = vld [vmem:[#allocation7 + $0x4e8] sm:$0xff]
    %v1220 = vld [vmem:[#allocation7 + $0x4f0] sm:$0xff]
    %v1221 = vld [vmem:[#allocation7 + $0x4f8] sm:$0xff]
    %v1222 = vld [vmem:[#allocation7 + $0x500] sm:$0xff]
    %v1223 = vld [vmem:[#allocation7 + $0x508] sm:$0xff]
    %v1224 = vld [vmem:[#allocation7 + $0x510] sm:$0xff]
    %v1225 = vld [vmem:[#allocation7 + $0x518] sm:$0xff]
    %v1226 = vld [vmem:[#allocation7 + $0x520] sm:$0xff]
    %v1227 = vld [vmem:[#allocation7 + $0x528] sm:$0xff]
    %v1228 = vld [vmem:[#allocation7 + $0x530] sm:$0xff]
    %v1229 = vld [vmem:[#allocation7 + $0x538] sm:$0xff]
    %v1230 = vld [vmem:[#allocation7 + $0x540] sm:$0xff]
    %v1231 = vld [vmem:[#allocation7 + $0x548] sm:$0xff]
    %v1232 = vld [vmem:[#allocation7 + $0x550] sm:$0xff]
    %v1233 = vld [vmem:[#allocation7 + $0x558] sm:$0xff]
    %v1234 = vld [vmem:[#allocation7 + $0x560] sm:$0xff]
    %v1235 = vld [vmem:[#allocation7 + $0x568] sm:$0xff]
    %v1236 = vld [vmem:[#allocation7 + $0x570] sm:$0xff]
    %v1237 = vld [vmem:[#allocation7 + $0x578] sm:$0xff]
    %v1238 = vld [vmem:[#allocation7 + $0x580] sm:$0xff]
    %v1239 = vld [vmem:[#allocation7 + $0x588] sm:$0xff]
    %v1240 = vld [vmem:[#allocation7 + $0x590] sm:$0xff]
    %v1241 = vld [vmem:[#allocation7 + $0x598] sm:$0xff]
    %v1242 = vld [vmem:[#allocation7 + $0x5a0] sm:$0xff]
    %v1243 = vld [vmem:[#allocation7 + $0x5a8] sm:$0xff]
    %v1244 = vld [vmem:[#allocation7 + $0x5b0] sm:$0xff]
    %v1245 = vld [vmem:[#allocation7 + $0x5b8] sm:$0xff]
    %v1246 = vld [vmem:[#allocation7 + $0x5c0] sm:$0xff]
    %v1247 = vld [vmem:[#allocation7 + $0x5c8] sm:$0xff]
    %v1248 = vld [vmem:[#allocation7 + $0x5d0] sm:$0xff]
    %v1249 = vld [vmem:[#allocation7 + $0x5d8] sm:$0xff]
    %v1250 = vld [vmem:[#allocation7 + $0x5e0] sm:$0xff]
    %v1251 = vld [vmem:[#allocation7 + $0x5e8] sm:$0xff]
    %v1252 = vld [vmem:[#allocation7 + $0x5f0] sm:$0xff]
    %v1253 = vld [vmem:[#allocation7 + $0x5f8] sm:$0xff]
    %v1254 = vld [vmem:[#allocation7 + $0x600] sm:$0xff]
    %v1255 = vld [vmem:[#allocation7 + $0x608] sm:$0xff]
    %v1256 = vld [vmem:[#allocation7 + $0x610] sm:$0xff]
    %v1257 = vld [vmem:[#allocation7 + $0x618] sm:$0xff]
    %v1258 = vld [vmem:[#allocation7 + $0x620] sm:$0xff]
    %v1259 = vld [vmem:[#allocation7 + $0x628] sm:$0xff]
    %v1260 = vld [vmem:[#allocation7 + $0x630] sm:$0xff]
    %v1261 = vld [vmem:[#allocation7 + $0x638] sm:$0xff]
    %v1262 = vld [vmem:[#allocation7 + $0x640] sm:$0xff]
    %v1263 = vld [vmem:[#allocation7 + $0x648] sm:$0xff]
    %v1264 = vld [vmem:[#allocation7 + $0x650] sm:$0xff]
    %v1265 = vld [vmem:[#allocation7 + $0x658] sm:$0xff]
    %v1266 = vld [vmem:[#allocation7 + $0x660] sm:$0xff]
    %v1267 = vld [vmem:[#allocation7 + $0x668] sm:$0xff]
    %v1268 = vld [vmem:[#allocation7 + $0x670] sm:$0xff]
    %v1269 = vld [vmem:[#allocation7 + $0x678] sm:$0xff]
    %v1270 = vld [vmem:[#allocation7 + $0x680] sm:$0xff]
    %v1271 = vld [vmem:[#allocation7 + $0x688] sm:$0xff]
    %v1272 = vld [vmem:[#allocation7 + $0x690] sm:$0xff]
    %v1273 = vld [vmem:[#allocation7 + $0x698] sm:$0xff]
    %v1274 = vld [vmem:[#allocation7 + $0x6a0] sm:$0xff]
    %v1275 = vld [vmem:[#allocation7 + $0x6a8] sm:$0xff]
    %v1276 = vld [vmem:[#allocation7 + $0x6b0] sm:$0xff]
    %v1277 = vld [vmem:[#allocation7 + $0x6b8] sm:$0xff]
    %v1278 = vld [vmem:[#allocation7 + $0x6c0] sm:$0xff]
    %v1279 = vld [vmem:[#allocation7 + $0x6c8] sm:$0xff]
    %v1280 = vld [vmem:[#allocation7 + $0x6d0] sm:$0xff]
    %v1281 = vld [vmem:[#allocation7 + $0x6d8] sm:$0xff]
    %v1282 = vld [vmem:[#allocation7 + $0x6e0] sm:$0xff]
    %v1283 = vld [vmem:[#allocation7 + $0x6e8] sm:$0xff]
    %v1284 = vld [vmem:[#allocation7 + $0x6f0] sm:$0xff]
    %v1285 = vld [vmem:[#allocation7 + $0x6f8] sm:$0xff]
    %v1286 = vld [vmem:[#allocation7 + $0x700] sm:$0xff]
    %v1287 = vld [vmem:[#allocation7 + $0x708] sm:$0xff]
    %v1288 = vld [vmem:[#allocation7 + $0x710] sm:$0xff]
    %v1289 = vld [vmem:[#allocation7 + $0x718] sm:$0xff]
    %v1290 = vld [vmem:[#allocation7 + $0x720] sm:$0xff]
    %v1291 = vld [vmem:[#allocation7 + $0x728] sm:$0xff]
    %v1292 = vld [vmem:[#allocation7 + $0x730] sm:$0xff]
    %v1293 = vld [vmem:[#allocation7 + $0x738] sm:$0xff]
    %v1294 = vld [vmem:[#allocation7 + $0x740] sm:$0xff]
    %v1295 = vld [vmem:[#allocation7 + $0x748] sm:$0xff]
    %v1296 = vld [vmem:[#allocation7 + $0x750] sm:$0xff]
    %v1297 = vld [vmem:[#allocation7 + $0x758] sm:$0xff]
    %v1298 = vld [vmem:[#allocation7 + $0x760] sm:$0xff]
    %v1299 = vld [vmem:[#allocation7 + $0x768] sm:$0xff]
    %v1300 = vld [vmem:[#allocation7 + $0x770] sm:$0xff]
    %v1301 = vld [vmem:[#allocation7 + $0x778] sm:$0xff]
    %v1302 = vld [vmem:[#allocation7 + $0x780] sm:$0xff]
    %v1303 = vld [vmem:[#allocation7 + $0x788] sm:$0xff]
    %v1304 = vld [vmem:[#allocation7 + $0x790] sm:$0xff]
    %v1305 = vld [vmem:[#allocation7 + $0x798] sm:$0xff]
    %v1306 = vld [vmem:[#allocation7 + $0x7a0] sm:$0xff]
    %v1307 = vld [vmem:[#allocation7 + $0x7a8] sm:$0xff]
    %v1308 = vld [vmem:[#allocation7 + $0x7b0] sm:$0xff]
    %v1309 = vld [vmem:[#allocation7 + $0x7b8] sm:$0xff]
    %v1310 = vld [vmem:[#allocation7 + $0x7c0] sm:$0xff]
    %v1311 = vld [vmem:[#allocation7 + $0x7c8] sm:$0xff]
    %v1312 = vld [vmem:[#allocation7 + $0x7d0] sm:$0xff]
    %v1313 = vld [vmem:[#allocation7 + $0x7d8] sm:$0xff]
    %v1314 = vld [vmem:[#allocation7 + $0x7e0] sm:$0xff]
    %v1315 = vld [vmem:[#allocation7 + $0x7e8] sm:$0xff]
    %v1316 = vld [vmem:[#allocation7 + $0x7f0] sm:$0xff]
    %v1317 = vld [vmem:[#allocation7 + $0x7f8] sm:$0xff]
    %v1318 = vld [vmem:[#allocation7 + $0x800] sm:$0xff]
    %v1319 = vld [vmem:[#allocation7 + $0x808] sm:$0xff]
    %v1320 = vld [vmem:[#allocation7 + $0x810] sm:$0xff]
    %v1321 = vld [vmem:[#allocation7 + $0x818] sm:$0xff]
    %v1322 = vld [vmem:[#allocation7 + $0x820] sm:$0xff]
    %v1323 = vld [vmem:[#allocation7 + $0x828] sm:$0xff]
    %v1324 = vld [vmem:[#allocation7 + $0x830] sm:$0xff]
    %v1325 = vld [vmem:[#allocation7 + $0x838] sm:$0xff]
    %v1326 = vld [vmem:[#allocation7 + $0x840] sm:$0xff]
    %v1327 = vld [vmem:[#allocation7 + $0x848] sm:$0xff]
    %v1328 = vld [vmem:[#allocation7 + $0x850] sm:$0xff]
    %v1329 = vld [vmem:[#allocation7 + $0x858] sm:$0xff]
    %v1330 = vld [vmem:[#allocation7 + $0x860] sm:$0xff]
    %v1331 = vld [vmem:[#allocation7 + $0x868] sm:$0xff]
    %v1332 = vld [vmem:[#allocation7 + $0x870] sm:$0xff]
    %v1333 = vld [vmem:[#allocation7 + $0x878] sm:$0xff]
    %v1334 = vld [vmem:[#allocation7 + $0x880] sm:$0xff]
    %v1335 = vld [vmem:[#allocation7 + $0x888] sm:$0xff]
    %v1336 = vld [vmem:[#allocation7 + $0x890] sm:$0xff]
    %v1337 = vld [vmem:[#allocation7 + $0x898] sm:$0xff]
    %v1338 = vld [vmem:[#allocation7 + $0x8a0] sm:$0xff]
    %v1339 = vld [vmem:[#allocation7 + $0x8a8] sm:$0xff]
    %v1340 = vld [vmem:[#allocation7 + $0x8b0] sm:$0xff]
    %v1341 = vld [vmem:[#allocation7 + $0x8b8] sm:$0xff]
    %v1342 = vld [vmem:[#allocation7 + $0x8c0] sm:$0xff]
    %v1343 = vld [vmem:[#allocation7 + $0x8c8] sm:$0xff]
    %v1344 = vld [vmem:[#allocation7 + $0x8d0] sm:$0xff]
    %v1345 = vld [vmem:[#allocation7 + $0x8d8] sm:$0xff]
    %v1346 = vld [vmem:[#allocation7 + $0x8e0] sm:$0xff]
    %v1347 = vld [vmem:[#allocation7 + $0x8e8] sm:$0xff]
    %v1348 = vld [vmem:[#allocation7 + $0x8f0] sm:$0xff]
    %v1349 = vld [vmem:[#allocation7 + $0x8f8] sm:$0xff]
    %v1350 = vld [vmem:[#allocation7 + $0x900] sm:$0xff]
    %v1351 = vld [vmem:[#allocation7 + $0x908] sm:$0xff]
    %v1352 = vld [vmem:[#allocation7 + $0x910] sm:$0xff]
    %v1353 = vld [vmem:[#allocation7 + $0x918] sm:$0xff]
    %v1354 = vld [vmem:[#allocation7 + $0x920] sm:$0xff]
    %v1355 = vld [vmem:[#allocation7 + $0x928] sm:$0xff]
    %v1356 = vld [vmem:[#allocation7 + $0x930] sm:$0xff]
    %v1357 = vld [vmem:[#allocation7 + $0x938] sm:$0xff]
    %v1358 = vld [vmem:[#allocation7 + $0x940] sm:$0xff]
    %v1359 = vld [vmem:[#allocation7 + $0x948] sm:$0xff]
    %v1360 = vld [vmem:[#allocation7 + $0x950] sm:$0xff]
    %v1361 = vld [vmem:[#allocation7 + $0x958] sm:$0xff]
    %v1362 = vld [vmem:[#allocation7 + $0x960] sm:$0xff]
    %v1363 = vld [vmem:[#allocation7 + $0x968] sm:$0xff]
    %v1364 = vld [vmem:[#allocation7 + $0x970] sm:$0xff]
    %v1365 = vld [vmem:[#allocation7 + $0x978] sm:$0xff]
    %v1366 = vld [vmem:[#allocation7 + $0x980] sm:$0xff]
    %v1367 = vld [vmem:[#allocation7 + $0x988] sm:$0xff]
    %v1368 = vld [vmem:[#allocation7 + $0x990] sm:$0xff]
    %v1369 = vld [vmem:[#allocation7 + $0x998] sm:$0xff]
    %v1370 = vld [vmem:[#allocation7 + $0x9a0] sm:$0xff]
    %v1371 = vld [vmem:[#allocation7 + $0x9a8] sm:$0xff]
    %v1372 = vld [vmem:[#allocation7 + $0x9b0] sm:$0xff]
    %v1373 = vld [vmem:[#allocation7 + $0x9b8] sm:$0xff]
    %v1374 = vld [vmem:[#allocation7 + $0x9c0] sm:$0xff]
    %v1375 = vld [vmem:[#allocation7 + $0x9c8] sm:$0xff]
    %v1376 = vld [vmem:[#allocation7 + $0x9d0] sm:$0xff]
    %v1377 = vld [vmem:[#allocation7 + $0x9d8] sm:$0xff]
    %v1378 = vld [vmem:[#allocation7 + $0x9e0] sm:$0xff]
    %v1379 = vld [vmem:[#allocation7 + $0x9e8] sm:$0xff]
    %v1380 = vld [vmem:[#allocation7 + $0x9f0] sm:$0xff]
    %v1381 = vld [vmem:[#allocation7 + $0x9f8] sm:$0xff]
    %v1382 = vld [vmem:[#allocation7 + $0xa00] sm:$0xff]
    %v1383 = vld [vmem:[#allocation7 + $0xa08] sm:$0xff]
    %v1384 = vld [vmem:[#allocation7 + $0xa10] sm:$0xff]
    %v1385 = vld [vmem:[#allocation7 + $0xa18] sm:$0xff]
    %v1386 = vld [vmem:[#allocation7 + $0xa20] sm:$0xff]
    %v1387 = vld [vmem:[#allocation7 + $0xa28] sm:$0xff]
    %v1388 = vld [vmem:[#allocation7 + $0xa30] sm:$0xff]
    %v1389 = vld [vmem:[#allocation7 + $0xa38] sm:$0xff]
    %v1390 = vld [vmem:[#allocation7 + $0xa40] sm:$0xff]
    %v1391 = vld [vmem:[#allocation7 + $0xa48] sm:$0xff]
    %v1392 = vld [vmem:[#allocation7 + $0xa50] sm:$0xff]
    %v1393 = vld [vmem:[#allocation7 + $0xa58] sm:$0xff]
    %v1394 = vld [vmem:[#allocation7 + $0xa60] sm:$0xff]
    %v1395 = vld [vmem:[#allocation7 + $0xa68] sm:$0xff]
    %v1396 = vld [vmem:[#allocation7 + $0xa70] sm:$0xff]
    %v1397 = vld [vmem:[#allocation7 + $0xa78] sm:$0xff]
    %v1398 = vld [vmem:[#allocation7 + $0xa80] sm:$0xff]
    %v1399 = vld [vmem:[#allocation7 + $0xa88] sm:$0xff]
    %v1400 = vld [vmem:[#allocation7 + $0xa90] sm:$0xff]
    %v1401 = vld [vmem:[#allocation7 + $0xa98] sm:$0xff]
    %v1402 = vld [vmem:[#allocation7 + $0xaa0] sm:$0xff]
    %v1403 = vld [vmem:[#allocation7 + $0xaa8] sm:$0xff]
    %v1404 = vld [vmem:[#allocation7 + $0xab0] sm:$0xff]
    %v1405 = vld [vmem:[#allocation7 + $0xab8] sm:$0xff]
    %v1406 = vld [vmem:[#allocation7 + $0xac0] sm:$0xff]
    %v1407 = vld [vmem:[#allocation7 + $0xac8] sm:$0xff]
    %v1408 = vld [vmem:[#allocation7 + $0xad0] sm:$0xff]
    %v1409 = vld [vmem:[#allocation7 + $0xad8] sm:$0xff]
    %v1410 = vld [vmem:[#allocation7 + $0xae0] sm:$0xff]
    %v1411 = vld [vmem:[#allocation7 + $0xae8] sm:$0xff]
    %v1412 = vld [vmem:[#allocation7 + $0xaf0] sm:$0xff]
    %v1413 = vld [vmem:[#allocation7 + $0xaf8] sm:$0xff]
    %v1414 = vld [vmem:[#allocation7 + $0xb00] sm:$0xff]
    %v1415 = vld [vmem:[#allocation7 + $0xb08] sm:$0xff]
    %v1416 = vld [vmem:[#allocation7 + $0xb10] sm:$0xff]
    %v1417 = vld [vmem:[#allocation7 + $0xb18] sm:$0xff]
    %v1418 = vld [vmem:[#allocation7 + $0xb20] sm:$0xff]
    %v1419 = vld [vmem:[#allocation7 + $0xb28] sm:$0xff]
    %v1420 = vld [vmem:[#allocation7 + $0xb30] sm:$0xff]
    %v1421 = vld [vmem:[#allocation7 + $0xb38] sm:$0xff]
    %v1422 = vld [vmem:[#allocation7 + $0xb40] sm:$0xff]
    %v1423 = vld [vmem:[#allocation7 + $0xb48] sm:$0xff]
    %v1424 = vld [vmem:[#allocation7 + $0xb50] sm:$0xff]
    %v1425 = vld [vmem:[#allocation7 + $0xb58] sm:$0xff]
    %v1426 = vld [vmem:[#allocation7 + $0xb60] sm:$0xff]
    %v1427 = vld [vmem:[#allocation7 + $0xb68] sm:$0xff]
    %v1428 = vld [vmem:[#allocation7 + $0xb70] sm:$0xff]
    %v1429 = vld [vmem:[#allocation7 + $0xb78] sm:$0xff]
    %v1430 = vld [vmem:[#allocation7 + $0xb80] sm:$0xff]
    %v1431 = vld [vmem:[#allocation7 + $0xb88] sm:$0xff]
    %v1432 = vld [vmem:[#allocation7 + $0xb90] sm:$0xff]
    %v1433 = vld [vmem:[#allocation7 + $0xb98] sm:$0xff]
    %v1434 = vld [vmem:[#allocation7 + $0xba0] sm:$0xff]
    %v1435 = vld [vmem:[#allocation7 + $0xba8] sm:$0xff]
    %v1436 = vld [vmem:[#allocation7 + $0xbb0] sm:$0xff]
    %v1437 = vld [vmem:[#allocation7 + $0xbb8] sm:$0xff]
    %v1438 = vld [vmem:[#allocation7 + $0xbc0] sm:$0xff]
    %v1439 = vld [vmem:[#allocation7 + $0xbc8] sm:$0xff]
    %v1440 = vld [vmem:[#allocation7 + $0xbd0] sm:$0xff]
    %v1441 = vld [vmem:[#allocation7 + $0xbd8] sm:$0xff]
    %v1442 = vld [vmem:[#allocation7 + $0xbe0] sm:$0xff]
    %v1443 = vld [vmem:[#allocation7 + $0xbe8] sm:$0xff]
    %v1444 = vld [vmem:[#allocation7 + $0xbf0] sm:$0xff]
    %v1445 = vld [vmem:[#allocation7 + $0xbf8] sm:$0xff]
    %v1446 = vld [vmem:[#allocation7 + $0xc00] sm:$0xff]
    %v1447 = vld [vmem:[#allocation7 + $0xc08] sm:$0xff]
    %v1448 = vld [vmem:[#allocation7 + $0xc10] sm:$0xff]
    %v1449 = vld [vmem:[#allocation7 + $0xc18] sm:$0xff]
    %v1450 = vld [vmem:[#allocation7 + $0xc20] sm:$0xff]
    %v1451 = vld [vmem:[#allocation7 + $0xc28] sm:$0xff]
    %v1452 = vld [vmem:[#allocation7 + $0xc30] sm:$0xff]
    %v1453 = vld [vmem:[#allocation7 + $0xc38] sm:$0xff]
    %v1454 = vld [vmem:[#allocation7 + $0xc40] sm:$0xff]
    %v1455 = vld [vmem:[#allocation7 + $0xc48] sm:$0xff]
    %v1456 = vld [vmem:[#allocation7 + $0xc50] sm:$0xff]
    %v1457 = vld [vmem:[#allocation7 + $0xc58] sm:$0xff]
    %v1458 = vld [vmem:[#allocation7 + $0xc60] sm:$0xff]
    %v1459 = vld [vmem:[#allocation7 + $0xc68] sm:$0xff]
    %v1460 = vld [vmem:[#allocation7 + $0xc70] sm:$0xff]
    %v1461 = vld [vmem:[#allocation7 + $0xc78] sm:$0xff]
    %v1462 = vld [vmem:[#allocation7 + $0xc80] sm:$0xff]
    %v1463 = vld [vmem:[#allocation7 + $0xc88] sm:$0xff]
    %v1464 = vld [vmem:[#allocation7 + $0xc90] sm:$0xff]
    %v1465 = vld [vmem:[#allocation7 + $0xc98] sm:$0xff]
    %v1466 = vld [vmem:[#allocation7 + $0xca0] sm:$0xff]
    %v1467 = vld [vmem:[#allocation7 + $0xca8] sm:$0xff]
    %v1468 = vld [vmem:[#allocation7 + $0xcb0] sm:$0xff]
    %v1469 = vld [vmem:[#allocation7 + $0xcb8] sm:$0xff]
    %v1470 = vld [vmem:[#allocation7 + $0xcc0] sm:$0xff]
    %v1471 = vld [vmem:[#allocation7 + $0xcc8] sm:$0xff]
    %v1472 = vld [vmem:[#allocation7 + $0xcd0] sm:$0xff]
    %v1473 = vld [vmem:[#allocation7 + $0xcd8] sm:$0xff]
    %v1474 = vld [vmem:[#allocation7 + $0xce0] sm:$0xff]
    %v1475 = vld [vmem:[#allocation7 + $0xce8] sm:$0xff]
    %v1476 = vld [vmem:[#allocation7 + $0xcf0] sm:$0xff]
    %v1477 = vld [vmem:[#allocation7 + $0xcf8] sm:$0xff]
    %v1478 = vld [vmem:[#allocation7 + $0xd00] sm:$0xff]
    %v1479 = vld [vmem:[#allocation7 + $0xd08] sm:$0xff]
    %v1480 = vld [vmem:[#allocation7 + $0xd10] sm:$0xff]
    %v1481 = vld [vmem:[#allocation7 + $0xd18] sm:$0xff]
    %v1482 = vld [vmem:[#allocation7 + $0xd20] sm:$0xff]
    %v1483 = vld [vmem:[#allocation7 + $0xd28] sm:$0xff]
    %v1484 = vld [vmem:[#allocation7 + $0xd30] sm:$0xff]
    %v1485 = vld [vmem:[#allocation7 + $0xd38] sm:$0xff]
    %v1486 = vld [vmem:[#allocation7 + $0xd40] sm:$0xff]
    %v1487 = vld [vmem:[#allocation7 + $0xd48] sm:$0xff]
    %v1488 = vld [vmem:[#allocation7 + $0xd50] sm:$0xff]
    %v1489 = vld [vmem:[#allocation7 + $0xd58] sm:$0xff]
    %v1490 = vld [vmem:[#allocation7 + $0xd60] sm:$0xff]
    %v1491 = vld [vmem:[#allocation7 + $0xd68] sm:$0xff]
    %v1492 = vld [vmem:[#allocation7 + $0xd70] sm:$0xff]
    %v1493 = vld [vmem:[#allocation7 + $0xd78] sm:$0xff]
    %v1494 = vld [vmem:[#allocation7 + $0xd80] sm:$0xff]
    %v1495 = vld [vmem:[#allocation7 + $0xd88] sm:$0xff]
    %v1496 = vld [vmem:[#allocation7 + $0xd90] sm:$0xff]
    %v1497 = vld [vmem:[#allocation7 + $0xd98] sm:$0xff]
    %v1498 = vld [vmem:[#allocation7 + $0xda0] sm:$0xff]
    %v1499 = vld [vmem:[#allocation7 + $0xda8] sm:$0xff]
    %v1500 = vld [vmem:[#allocation7 + $0xdb0] sm:$0xff]
    %v1501 = vld [vmem:[#allocation7 + $0xdb8] sm:$0xff]
    %v1502 = vld [vmem:[#allocation7 + $0xdc0] sm:$0xff]
    %v1503 = vld [vmem:[#allocation7 + $0xdc8] sm:$0xff]
    %v1504 = vld [vmem:[#allocation7 + $0xdd0] sm:$0xff]
    %v1505 = vld [vmem:[#allocation7 + $0xdd8] sm:$0xff]
    %v1506 = vld [vmem:[#allocation7 + $0xde0] sm:$0xff]
    %v1507 = vld [vmem:[#allocation7 + $0xde8] sm:$0xff]
    %v1508 = vld [vmem:[#allocation7 + $0xdf0] sm:$0xff]
    %v1509 = vld [vmem:[#allocation7 + $0xdf8] sm:$0xff]
    %v1510 = vld [vmem:[#allocation7 + $0xe00] sm:$0xff]
    %v1511 = vld [vmem:[#allocation7 + $0xe08] sm:$0xff]
    %v1512 = vld [vmem:[#allocation7 + $0xe10] sm:$0xff]
    %v1513 = vld [vmem:[#allocation7 + $0xe18] sm:$0xff]
    %v1514 = vld [vmem:[#allocation7 + $0xe20] sm:$0xff]
    %v1515 = vld [vmem:[#allocation7 + $0xe28] sm:$0xff]
    %v1516 = vld [vmem:[#allocation7 + $0xe30] sm:$0xff]
    %v1517 = vld [vmem:[#allocation7 + $0xe38] sm:$0xff]
    %v1518 = vld [vmem:[#allocation7 + $0xe40] sm:$0xff]
    %v1519 = vld [vmem:[#allocation7 + $0xe48] sm:$0xff]
    %v1520 = vld [vmem:[#allocation7 + $0xe50] sm:$0xff]
    %v1521 = vld [vmem:[#allocation7 + $0xe58] sm:$0xff]
    %v1522 = vld [vmem:[#allocation7 + $0xe60] sm:$0xff]
    %v1523 = vld [vmem:[#allocation7 + $0xe68] sm:$0xff]
    %v1524 = vld [vmem:[#allocation7 + $0xe70] sm:$0xff]
    %v1525 = vld [vmem:[#allocation7 + $0xe78] sm:$0xff]
    %v1526 = vld [vmem:[#allocation7 + $0xe80] sm:$0xff]
    %v1527 = vld [vmem:[#allocation7 + $0xe88] sm:$0xff]
    %v1528 = vld [vmem:[#allocation7 + $0xe90] sm:$0xff]
    %v1529 = vld [vmem:[#allocation7 + $0xe98] sm:$0xff]
    %v1530 = vld [vmem:[#allocation7 + $0xea0] sm:$0xff]
    %v1531 = vld [vmem:[#allocation7 + $0xea8] sm:$0xff]
    %v1532 = vld [vmem:[#allocation7 + $0xeb0] sm:$0xff]
    %v1533 = vld [vmem:[#allocation7 + $0xeb8] sm:$0xff]
    %v1534 = vld [vmem:[#allocation7 + $0xec0] sm:$0xff]
    %v1535 = vld [vmem:[#allocation7 + $0xec8] sm:$0xff]
    %v1536 = vld [vmem:[#allocation7 + $0xed0] sm:$0xff]
    %v1537 = vld [vmem:[#allocation7 + $0xed8] sm:$0xff]
    %v1538 = vld [vmem:[#allocation7 + $0xee0] sm:$0xff]
    %v1539 = vld [vmem:[#allocation7 + $0xee8] sm:$0xff]
    %v1540 = vld [vmem:[#allocation7 + $0xef0] sm:$0xff]
    %v1541 = vld [vmem:[#allocation7 + $0xef8] sm:$0xff]
    %v1542 = vld [vmem:[#allocation7 + $0xf00] sm:$0xff]
    %v1543 = vld [vmem:[#allocation7 + $0xf08] sm:$0xff]
    %v1544 = vld [vmem:[#allocation7 + $0xf10] sm:$0xff]
    %v1545 = vld [vmem:[#allocation7 + $0xf18] sm:$0xff]
    %v1546 = vld [vmem:[#allocation7 + $0xf20] sm:$0xff]
    %v1547 = vld [vmem:[#allocation7 + $0xf28] sm:$0xff]
    %v1548 = vld [vmem:[#allocation7 + $0xf30] sm:$0xff]
    %v1549 = vld [vmem:[#allocation7 + $0xf38] sm:$0xff]
    %v1550 = vld [vmem:[#allocation7 + $0xf40] sm:$0xff]
    %v1551 = vld [vmem:[#allocation7 + $0xf48] sm:$0xff]
    %v1552 = vld [vmem:[#allocation7 + $0xf50] sm:$0xff]
    %v1553 = vld [vmem:[#allocation7 + $0xf58] sm:$0xff]
    %v1554 = vld [vmem:[#allocation7 + $0xf60] sm:$0xff]
    %v1555 = vld [vmem:[#allocation7 + $0xf68] sm:$0xff]
    %v1556 = vld [vmem:[#allocation7 + $0xf70] sm:$0xff]
    %v1557 = vld [vmem:[#allocation7 + $0xf78] sm:$0xff]
    %v1558 = vld [vmem:[#allocation7 + $0xf80] sm:$0xff]
    %v1559 = vld [vmem:[#allocation7 + $0xf88] sm:$0xff]
    %v1560 = vld [vmem:[#allocation7 + $0xf90] sm:$0xff]
    %v1561 = vld [vmem:[#allocation7 + $0xf98] sm:$0xff]
    %v1562 = vld [vmem:[#allocation7 + $0xfa0] sm:$0xff]
    %v1563 = vld [vmem:[#allocation7 + $0xfa8] sm:$0xff]
    %v1564 = vld [vmem:[#allocation7 + $0xfb0] sm:$0xff]
    %v1565 = vld [vmem:[#allocation7 + $0xfb8] sm:$0xff]
    %v1566 = vld [vmem:[#allocation7 + $0xfc0] sm:$0xff]
    %v1567 = vld [vmem:[#allocation7 + $0xfc8] sm:$0xff]
    %v1568 = vld [vmem:[#allocation7 + $0xfd0] sm:$0xff]
    %v1569 = vld [vmem:[#allocation7 + $0xfd8] sm:$0xff]
    %v1570 = vld [vmem:[#allocation7 + $0xfe0] sm:$0xff]
    %v1571 = vld [vmem:[#allocation7 + $0xfe8] sm:$0xff]
    %v1572 = vld [vmem:[#allocation7 + $0xff0] sm:$0xff]
    %v1573 = vld [vmem:[#allocation7 + $0xff8] sm:$0xff]
    %v1574 = vld [vmem:[#allocation7 + $0x1000] sm:$0xff]
    %v1575 = vld [vmem:[#allocation7 + $0x1008] sm:$0xff]
    %v1576 = vld [vmem:[#allocation7 + $0x1010] sm:$0xff]
    %v1577 = vld [vmem:[#allocation7 + $0x1018] sm:$0xff]
    %v1578 = vld [vmem:[#allocation7 + $0x1020] sm:$0xff]
    %v1579 = vld [vmem:[#allocation7 + $0x1028] sm:$0xff]
    %v1580 = vld [vmem:[#allocation7 + $0x1030] sm:$0xff]
    %v1581 = vld [vmem:[#allocation7 + $0x1038] sm:$0xff]
    %v1582 = vld [vmem:[#allocation7 + $0x1040] sm:$0xff]
    %v1583 = vld [vmem:[#allocation7 + $0x1048] sm:$0xff]
    %v1584 = vld [vmem:[#allocation7 + $0x1050] sm:$0xff]
    %v1585 = vld [vmem:[#allocation7 + $0x1058] sm:$0xff]
    %v1586 = vld [vmem:[#allocation7 + $0x1060] sm:$0xff]
    %v1587 = vld [vmem:[#allocation7 + $0x1068] sm:$0xff]
    %v1588 = vld [vmem:[#allocation7 + $0x1070] sm:$0xff]
    %v1589 = vld [vmem:[#allocation7 + $0x1078] sm:$0xff]
    %v1590 = vld [vmem:[#allocation7 + $0x1080] sm:$0xff]
    %v1591 = vld [vmem:[#allocation7 + $0x1088] sm:$0xff]
    %v1592 = vld [vmem:[#allocation7 + $0x1090] sm:$0xff]
    %v1593 = vld [vmem:[#allocation7 + $0x1098] sm:$0xff]
    %v1594 = vld [vmem:[#allocation7 + $0x10a0] sm:$0xff]
    %v1595 = vld [vmem:[#allocation7 + $0x10a8] sm:$0xff]
    %v1596 = vld [vmem:[#allocation7 + $0x10b0] sm:$0xff]
    %v1597 = vld [vmem:[#allocation7 + $0x10b8] sm:$0xff]
    %v1598 = vld [vmem:[#allocation7 + $0x10c0] sm:$0xff]
    %v1599 = vld [vmem:[#allocation7 + $0x10c8] sm:$0xff]
    %v1600 = vld [vmem:[#allocation7 + $0x10d0] sm:$0xff]
    %v1601 = vld [vmem:[#allocation7 + $0x10d8] sm:$0xff]
    %v1602 = vld [vmem:[#allocation7 + $0x10e0] sm:$0xff]
    %v1603 = vld [vmem:[#allocation7 + $0x10e8] sm:$0xff]
    %v1604 = vld [vmem:[#allocation7 + $0x10f0] sm:$0xff]
    %v1605 = vld [vmem:[#allocation7 + $0x10f8] sm:$0xff]
    %v1606 = vld [vmem:[#allocation7 + $0x1100] sm:$0xff]
    %v1607 = vld [vmem:[#allocation7 + $0x1108] sm:$0xff]
    %v1608 = vld [vmem:[#allocation7 + $0x1110] sm:$0xff]
    %v1609 = vld [vmem:[#allocation7 + $0x1118] sm:$0xff]
    %v1610 = vld [vmem:[#allocation7 + $0x1120] sm:$0xff]
    %v1611 = vld [vmem:[#allocation7 + $0x1128] sm:$0xff]
    %v1612 = vld [vmem:[#allocation7 + $0x1130] sm:$0xff]
    %v1613 = vld [vmem:[#allocation7 + $0x1138] sm:$0xff]
    %v1614 = vld [vmem:[#allocation7 + $0x1140] sm:$0xff]
    %v1615 = vld [vmem:[#allocation7 + $0x1148] sm:$0xff]
    %v1616 = vld [vmem:[#allocation7 + $0x1150] sm:$0xff]
    %v1617 = vld [vmem:[#allocation7 + $0x1158] sm:$0xff]
    %v1618 = vld [vmem:[#allocation7 + $0x1160] sm:$0xff]
    %v1619 = vld [vmem:[#allocation7 + $0x1168] sm:$0xff]
    %v1620 = vld [vmem:[#allocation7 + $0x1170] sm:$0xff]
    %v1621 = vld [vmem:[#allocation7 + $0x1178] sm:$0xff]
    %v1622 = vld [vmem:[#allocation7 + $0x1180] sm:$0xff]
    %v1623 = vld [vmem:[#allocation7 + $0x1188] sm:$0xff]
    %v1624 = vld [vmem:[#allocation7 + $0x1190] sm:$0xff]
    %v1625 = vld [vmem:[#allocation7 + $0x1198] sm:$0xff]
    %v1626 = vld [vmem:[#allocation7 + $0x11a0] sm:$0xff]
    %v1627 = vld [vmem:[#allocation7 + $0x11a8] sm:$0xff]
    %v1628 = vld [vmem:[#allocation7 + $0x11b0] sm:$0xff]
    %v1629 = vld [vmem:[#allocation7 + $0x11b8] sm:$0xff]
    %v1630 = vld [vmem:[#allocation7 + $0x11c0] sm:$0xff]
    %v1631 = vld [vmem:[#allocation7 + $0x11c8] sm:$0xff]
    %v1632 = vld [vmem:[#allocation7 + $0x11d0] sm:$0xff]
    %v1633 = vld [vmem:[#allocation7 + $0x11d8] sm:$0xff]
    %v1634 = vld [vmem:[#allocation7 + $0x11e0] sm:$0xff]
    %v1635 = vld [vmem:[#allocation7 + $0x11e8] sm:$0xff]
    %v1636 = vld [vmem:[#allocation7 + $0x11f0] sm:$0xff]
    %v1637 = vld [vmem:[#allocation7 + $0x11f8] sm:$0xff]
    %v1638 = vld [vmem:[#allocation7 + $0x1200] sm:$0xff]
    %v1639 = vld [vmem:[#allocation7 + $0x1208] sm:$0xff]
    %v1640 = vld [vmem:[#allocation7 + $0x1210] sm:$0xff]
    %v1641 = vld [vmem:[#allocation7 + $0x1218] sm:$0xff]
    %v1642 = vld [vmem:[#allocation7 + $0x1220] sm:$0xff]
    %v1643 = vld [vmem:[#allocation7 + $0x1228] sm:$0xff]
    %v1644 = vld [vmem:[#allocation7 + $0x1230] sm:$0xff]
    %v1645 = vld [vmem:[#allocation7 + $0x1238] sm:$0xff]
    %v1646 = vld [vmem:[#allocation7 + $0x1240] sm:$0xff]
    %v1647 = vld [vmem:[#allocation7 + $0x1248] sm:$0xff]
    %v1648 = vld [vmem:[#allocation7 + $0x1250] sm:$0xff]
    %v1649 = vld [vmem:[#allocation7 + $0x1258] sm:$0xff]
    %v1650 = vld [vmem:[#allocation7 + $0x1260] sm:$0xff]
    %v1651 = vld [vmem:[#allocation7 + $0x1268] sm:$0xff]
    %v1652 = vld [vmem:[#allocation7 + $0x1270] sm:$0xff]
    %v1653 = vld [vmem:[#allocation7 + $0x1278] sm:$0xff]
    %v1654 = vld [vmem:[#allocation7 + $0x1280] sm:$0xff]
    %v1655 = vld [vmem:[#allocation7 + $0x1288] sm:$0xff]
    %v1656 = vld [vmem:[#allocation7 + $0x1290] sm:$0xff]
    %v1657 = vld [vmem:[#allocation7 + $0x1298] sm:$0xff]
    %v1658 = vld [vmem:[#allocation7 + $0x12a0] sm:$0xff]
    %v1659 = vld [vmem:[#allocation7 + $0x12a8] sm:$0xff]
    %v1660 = vld [vmem:[#allocation7 + $0x12b0] sm:$0xff]
    %v1661 = vld [vmem:[#allocation7 + $0x12b8] sm:$0xff]
    %v1662 = vld [vmem:[#allocation7 + $0x12c0] sm:$0xff]
    %v1663 = vld [vmem:[#allocation7 + $0x12c8] sm:$0xff]
    %v1664 = vld [vmem:[#allocation7 + $0x12d0] sm:$0xff]
    %v1665 = vld [vmem:[#allocation7 + $0x12d8] sm:$0xff]
    %v1666 = vld [vmem:[#allocation7 + $0x12e0] sm:$0xff]
    %v1667 = vld [vmem:[#allocation7 + $0x12e8] sm:$0xff]
    %v1668 = vld [vmem:[#allocation7 + $0x12f0] sm:$0xff]
    %v1669 = vld [vmem:[#allocation7 + $0x12f8] sm:$0xff]
    %v1670 = vld [vmem:[#allocation7 + $0x1300] sm:$0xff]
    %v1671 = vld [vmem:[#allocation7 + $0x1308] sm:$0xff]
    %v1672 = vld [vmem:[#allocation7 + $0x1310] sm:$0xff]
    %v1673 = vld [vmem:[#allocation7 + $0x1318] sm:$0xff]
    %v1674 = vld [vmem:[#allocation7 + $0x1320] sm:$0xff]
    %v1675 = vld [vmem:[#allocation7 + $0x1328] sm:$0xff]
    %v1676 = vld [vmem:[#allocation7 + $0x1330] sm:$0xff]
    %v1677 = vld [vmem:[#allocation7 + $0x1338] sm:$0xff]
    %v1678 = vld [vmem:[#allocation7 + $0x1340] sm:$0xff]
    %v1679 = vld [vmem:[#allocation7 + $0x1348] sm:$0xff]
    %v1680 = vld [vmem:[#allocation7 + $0x1350] sm:$0xff]
    %v1681 = vld [vmem:[#allocation7 + $0x1358] sm:$0xff]
    %v1682 = vld [vmem:[#allocation7 + $0x1360] sm:$0xff]
    %v1683 = vld [vmem:[#allocation7 + $0x1368] sm:$0xff]
    %v1684 = vld [vmem:[#allocation7 + $0x1370] sm:$0xff]
    %v1685 = vld [vmem:[#allocation7 + $0x1378] sm:$0xff]
    %v1686 = vld [vmem:[#allocation7 + $0x1380] sm:$0xff]
    %v1687 = vld [vmem:[#allocation7 + $0x1388] sm:$0xff]
    %v1688 = vld [vmem:[#allocation7 + $0x1390] sm:$0xff]
    %v1689 = vld [vmem:[#allocation7 + $0x1398] sm:$0xff]
    %v1690 = vld [vmem:[#allocation7 + $0x13a0] sm:$0xff]
    %v1691 = vld [vmem:[#allocation7 + $0x13a8] sm:$0xff]
    %v1692 = vld [vmem:[#allocation7 + $0x13b0] sm:$0xff]
    %v1693 = vld [vmem:[#allocation7 + $0x13b8] sm:$0xff]
    %v1694 = vld [vmem:[#allocation7 + $0x13c0] sm:$0xff]
    %v1695 = vld [vmem:[#allocation7 + $0x13c8] sm:$0xff]
    %v1696 = vld [vmem:[#allocation7 + $0x13d0] sm:$0xff]
    %v1697 = vld [vmem:[#allocation7 + $0x13d8] sm:$0xff]
    %v1698 = vld [vmem:[#allocation7 + $0x13e0] sm:$0xff]
    %v1699 = vld [vmem:[#allocation7 + $0x13e8] sm:$0xff]
    %v1700 = vld [vmem:[#allocation7 + $0x13f0] sm:$0xff]
    %v1701 = vld [vmem:[#allocation7 + $0x13f8] sm:$0xff]
    %v1702 = vld [vmem:[#allocation8] sm:$0xf]
    %v1704 = vlaneseq
    %v1705 = vshrl.u32 %v1704, 7
    %v1706 = vsub.s32 0, %v1705
    %v1707 = vrot.slane %v1702, %v1706
    %v1708 = vlaneseq
    %v1709 = vshrl.u32 %v1708, 7
    %v1710 = vsub.s32 1, %v1709
    %v1711 = vrot.slane %v1702, %v1710
    %v1712 = vlaneseq
    %v1713 = vshrl.u32 %v1712, 7
    %v1714 = vsub.s32 2, %v1713
    %v1715 = vrot.slane %v1702, %v1714
    %v1716 = vlaneseq
    %v1717 = vshrl.u32 %v1716, 7
    %v1718 = vsub.s32 3, %v1717
    %v1719 = vrot.slane %v1702, %v1718
    %1724 = vmatprep.subr.mxu0 %v1123
    %1725 = vmatpush1.msra.mxu0 %v1122
    %1726 = vmatprep.subr.mxu0 %v1119
    %1727 = vmatpush1.msra.mxu0 %v1118
    %1728 = vmatprep.subr.mxu0 %v1115
    %1729 = vmatpush1.msra.mxu0 %v1114
    %1730 = vmatprep.subr.mxu0 %v1111
    %1731 = vmatpush1.msra.mxu0 %v1110
    %1732 = vmatprep.subr.mxu0 %v1107
    %1733 = vmatpush1.msra.mxu0 %v1106
    %1734 = vmatprep.subr.mxu0 %v1103
    %1735 = vmatpush1.msra.mxu0 %v1102
    %1736 = vmatprep.subr.mxu0 %v1099
    %1737 = vmatpush1.msra.mxu0 %v1098
    %1738 = vmatprep.subr.mxu0 %v1095
    %1739 = vmatpush1.msra.mxu0 %v1094
    %1740 = vmatprep.subr.mxu0 %v1091
    %1741 = vmatpush1.msra.mxu0 %v1090
    %1742 = vmatprep.subr.mxu0 %v1087
    %1743 = vmatpush1.msra.mxu0 %v1086
    %1744 = vmatprep.subr.mxu0 %v1083
    %1745 = vmatpush1.msra.mxu0 %v1082
    %1746 = vmatprep.subr.mxu0 %v1079
    %1747 = vmatpush1.msra.mxu0 %v1078
    %1748 = vmatprep.subr.mxu0 %v1075
    %1749 = vmatpush1.msra.mxu0 %v1074
    %1750 = vmatprep.subr.mxu0 %v1071
    %1751 = vmatpush1.msra.mxu0 %v1070
    %1752 = vmatprep.subr.mxu0 %v1067
    %1753 = vmatpush1.msra.mxu0 %v1066
    %1754 = vmatprep.subr.mxu0 %v1063
    %1755 = vmatpush1.msra.mxu0 %v1062
    %1756 = vmatprep.subr.mxu0 %v1187
    %1757 = vmatpush2.msra.mxu0 %v1186
    %1758 = vmatprep.subr.mxu0 %v1183
    %1759 = vmatpush2.msra.mxu0 %v1182
    %1760 = vmatprep.subr.mxu0 %v1179
    %1761 = vmatpush2.msra.mxu0 %v1178
    %1762 = vmatprep.subr.mxu0 %v1175
    %1763 = vmatpush2.msra.mxu0 %v1174
    %1764 = vmatprep.subr.mxu0 %v1171
    %1765 = vmatpush2.msra.mxu0 %v1170
    %1766 = vmatprep.subr.mxu0 %v1167
    %1767 = vmatpush2.msra.mxu0 %v1166
    %1768 = vmatprep.subr.mxu0 %v1163
    %1769 = vmatpush2.msra.mxu0 %v1162
    %1770 = vmatprep.subr.mxu0 %v1159
    %1771 = vmatpush2.msra.mxu0 %v1158
    %1772 = vmatprep.subr.mxu0 %v1155
    %1773 = vmatpush2.msra.mxu0 %v1154
    %1774 = vmatprep.subr.mxu0 %v1151
    %1775 = vmatpush2.msra.mxu0 %v1150
    %1776 = vmatprep.subr.mxu0 %v1147
    %1777 = vmatpush2.msra.mxu0 %v1146
    %1778 = vmatprep.subr.mxu0 %v1143
    %1779 = vmatpush2.msra.mxu0 %v1142
    %1780 = vmatprep.subr.mxu0 %v1139
    %1781 = vmatpush2.msra.mxu0 %v1138
    %1782 = vmatprep.subr.mxu0 %v1135
    %1783 = vmatpush2.msra.mxu0 %v1134
    %1784 = vmatprep.subr.mxu0 %v1131
    %1785 = vmatpush2.msra.mxu0 %v1130
    %1786 = vmatprep.subr.mxu0 %v1127
    %1787 = vmatpush2.msra.mxu0 %v1126
    %1788 = vmatprep.mubr.f32.mxu0 %v983
    %1789 = vmatmul.mubr.f32.gmra.mxu0 %v982
    %v1790 = vpop.f32.mrf.mxu0
    %v1791 = vadd.f32 %v1707, %v1790
    %v1792 = vpop.f32.mrf.mxu0
    %v1793 = vadd.f32 %v1711, %v1792
    %1794 = vmatprep.mubr.f32.mxu0 %v985
    %1795 = vmatmul.mubr.f32.gmra.mxu0 %v984
    %v1796 = vpop.f32.mrf.mxu0
    %v1797 = vadd.f32 %v1707, %v1796
    %v1798 = vpop.f32.mrf.mxu0
    %v1799 = vadd.f32 %v1711, %v1798
    %1800 = vmatprep.mubr.f32.mxu0 %v987
    %1801 = vmatmul.mubr.f32.gmra.mxu0 %v986
    %v1802 = vpop.f32.mrf.mxu0
    %v1803 = vadd.f32 %v1707, %v1802
    %v1804 = vpop.f32.mrf.mxu0
    %v1805 = vadd.f32 %v1711, %v1804
    %1806 = vmatprep.mubr.f32.mxu0 %v989
    %1807 = vmatmul.mubr.f32.gmra.mxu0 %v988
    %v1808 = vpop.f32.mrf.mxu0
    %v1809 = vadd.f32 %v1707, %v1808
    %v1810 = vpop.f32.mrf.mxu0
    %v1811 = vadd.f32 %v1711, %v1810
    %1812 = vmatprep.mubr.f32.mxu0 %v991
    %1813 = vmatmul.mubr.f32.gmra.mxu0 %v990
    %v1814 = vpop.f32.mrf.mxu0
    %v1815 = vadd.f32 %v1707, %v1814
    %v1816 = vpop.f32.mrf.mxu0
    %v1817 = vadd.f32 %v1711, %v1816
    %1818 = vmatprep.mubr.f32.mxu0 %v993
    %1819 = vmatmul.mubr.f32.gmra.mxu0 %v992
    %v1820 = vpop.f32.mrf.mxu0
    %v1821 = vadd.f32 %v1707, %v1820
    %v1822 = vpop.f32.mrf.mxu0
    %v1823 = vadd.f32 %v1711, %v1822
    %1824 = vmatprep.mubr.f32.mxu0 %v995
    %1825 = vmatmul.mubr.f32.gmra.mxu0 %v994
    %v1826 = vpop.f32.mrf.mxu0
    %v1827 = vadd.f32 %v1707, %v1826
    %v1828 = vpop.f32.mrf.mxu0
    %v1829 = vadd.f32 %v1711, %v1828
    %1830 = vmatprep.mubr.f32.mxu0 %v997
    %1831 = vmatmul.mubr.f32.gmra.mxu0 %v996
    %v1832 = vpop.f32.mrf.mxu0
    %v1833 = vadd.f32 %v1707, %v1832
    %v1834 = vpop.f32.mrf.mxu0
    %v1835 = vadd.f32 %v1711, %v1834
    %1836 = vdwg.mxu0
    %1837 = vmatprep.subr.mxu0 %v1251
    %1838 = vmatpush1.msra.mxu0 %v1250
    %1839 = vmatprep.subr.mxu0 %v1247
    %1840 = vmatpush1.msra.mxu0 %v1246
    %1841 = vmatprep.subr.mxu0 %v1243
    %1842 = vmatpush1.msra.mxu0 %v1242
    %1843 = vmatprep.subr.mxu0 %v1239
    %1844 = vmatpush1.msra.mxu0 %v1238
    %1845 = vmatprep.subr.mxu0 %v1235
    %1846 = vmatpush1.msra.mxu0 %v1234
    %1847 = vmatprep.subr.mxu0 %v1231
    %1848 = vmatpush1.msra.mxu0 %v1230
    %1849 = vmatprep.subr.mxu0 %v1227
    %1850 = vmatpush1.msra.mxu0 %v1226
    %1851 = vmatprep.subr.mxu0 %v1223
    %1852 = vmatpush1.msra.mxu0 %v1222
    %1853 = vmatprep.subr.mxu0 %v1219
    %1854 = vmatpush1.msra.mxu0 %v1218
    %1855 = vmatprep.subr.mxu0 %v1215
    %1856 = vmatpush1.msra.mxu0 %v1214
    %1857 = vmatprep.subr.mxu0 %v1211
    %1858 = vmatpush1.msra.mxu0 %v1210
    %1859 = vmatprep.subr.mxu0 %v1207
    %1860 = vmatpush1.msra.mxu0 %v1206
    %1861 = vmatprep.subr.mxu0 %v1203
    %1862 = vmatpush1.msra.mxu0 %v1202
    %1863 = vmatprep.subr.mxu0 %v1199
    %1864 = vmatpush1.msra.mxu0 %v1198
    %1865 = vmatprep.subr.mxu0 %v1195
    %1866 = vmatpush1.msra.mxu0 %v1194
    %1867 = vmatprep.subr.mxu0 %v1191
    %1868 = vmatpush1.msra.mxu0 %v1190
    %1869 = vmatprep.subr.mxu0 %v1315
    %1870 = vmatpush2.msra.mxu0 %v1314
    %1871 = vmatprep.subr.mxu0 %v1311
    %1872 = vmatpush2.msra.mxu0 %v1310
    %1873 = vmatprep.subr.mxu0 %v1307
    %1874 = vmatpush2.msra.mxu0 %v1306
    %1875 = vmatprep.subr.mxu0 %v1303
    %1876 = vmatpush2.msra.mxu0 %v1302
    %1877 = vmatprep.subr.mxu0 %v1299
    %1878 = vmatpush2.msra.mxu0 %v1298
    %1879 = vmatprep.subr.mxu0 %v1295
    %1880 = vmatpush2.msra.mxu0 %v1294
    %1881 = vmatprep.subr.mxu0 %v1291
    %1882 = vmatpush2.msra.mxu0 %v1290
    %1883 = vmatprep.subr.mxu0 %v1287
    %1884 = vmatpush2.msra.mxu0 %v1286
    %1885 = vmatprep.subr.mxu0 %v1283
    %1886 = vmatpush2.msra.mxu0 %v1282
    %1887 = vmatprep.subr.mxu0 %v1279
    %1888 = vmatpush2.msra.mxu0 %v1278
    %1889 = vmatprep.subr.mxu0 %v1275
    %1890 = vmatpush2.msra.mxu0 %v1274
    %1891 = vmatprep.subr.mxu0 %v1271
    %1892 = vmatpush2.msra.mxu0 %v1270
    %1893 = vmatprep.subr.mxu0 %v1267
    %1894 = vmatpush2.msra.mxu0 %v1266
    %1895 = vmatprep.subr.mxu0 %v1263
    %1896 = vmatpush2.msra.mxu0 %v1262
    %1897 = vmatprep.subr.mxu0 %v1259
    %1898 = vmatpush2.msra.mxu0 %v1258
    %1899 = vmatprep.subr.mxu0 %v1255
    %1900 = vmatpush2.msra.mxu0 %v1254
    %1901 = vmatprep.mubr.f32.mxu0 %v999
    %1902 = vmatmul.mubr.f32.gmra.mxu0 %v998
    %v1903 = vpop.f32.mrf.mxu0
    %v1904 = vadd.f32 %v1791, %v1903
    %v1905 = vpop.f32.mrf.mxu0
    %v1906 = vadd.f32 %v1793, %v1905
    %1907 = vmatprep.mubr.f32.mxu0 %v1001
    %1908 = vmatmul.mubr.f32.gmra.mxu0 %v1000
    %v1909 = vpop.f32.mrf.mxu0
    %v1910 = vadd.f32 %v1797, %v1909
    %v1911 = vpop.f32.mrf.mxu0
    %v1912 = vadd.f32 %v1799, %v1911
    %1913 = vmatprep.mubr.f32.mxu0 %v1003
    %1914 = vmatmul.mubr.f32.gmra.mxu0 %v1002
    %v1915 = vpop.f32.mrf.mxu0
    %v1916 = vadd.f32 %v1803, %v1915
    %v1917 = vpop.f32.mrf.mxu0
    %v1918 = vadd.f32 %v1805, %v1917
    %1919 = vmatprep.mubr.f32.mxu0 %v1005
    %1920 = vmatmul.mubr.f32.gmra.mxu0 %v1004
    %v1921 = vpop.f32.mrf.mxu0
    %v1922 = vadd.f32 %v1809, %v1921
    %v1923 = vpop.f32.mrf.mxu0
    %v1924 = vadd.f32 %v1811, %v1923
    %1925 = vmatprep.mubr.f32.mxu0 %v1007
    %1926 = vmatmul.mubr.f32.gmra.mxu0 %v1006
    %v1927 = vpop.f32.mrf.mxu0
    %v1928 = vadd.f32 %v1815, %v1927
    %v1929 = vpop.f32.mrf.mxu0
    %v1930 = vadd.f32 %v1817, %v1929
    %1931 = vmatprep.mubr.f32.mxu0 %v1009
    %1932 = vmatmul.mubr.f32.gmra.mxu0 %v1008
    %v1933 = vpop.f32.mrf.mxu0
    %v1934 = vadd.f32 %v1821, %v1933
    %v1935 = vpop.f32.mrf.mxu0
    %v1936 = vadd.f32 %v1823, %v1935
    %1937 = vmatprep.mubr.f32.mxu0 %v1011
    %1938 = vmatmul.mubr.f32.gmra.mxu0 %v1010
    %v1939 = vpop.f32.mrf.mxu0
    %v1940 = vadd.f32 %v1827, %v1939
    %v1941 = vpop.f32.mrf.mxu0
    %v1942 = vadd.f32 %v1829, %v1941
    %1943 = vmatprep.mubr.f32.mxu0 %v1013
    %1944 = vmatmul.mubr.f32.gmra.mxu0 %v1012
    %v1945 = vpop.f32.mrf.mxu0
    %v1946 = vadd.f32 %v1833, %v1945
    %v1947 = vpop.f32.mrf.mxu0
    %v1948 = vadd.f32 %v1835, %v1947
    %1949 = vdwg.mxu0
    %1950 = vmatprep.subr.mxu0 %v1379
    %1951 = vmatpush1.msra.mxu0 %v1378
    %1952 = vmatprep.subr.mxu0 %v1375
    %1953 = vmatpush1.msra.mxu0 %v1374
    %1954 = vmatprep.subr.mxu0 %v1371
    %1955 = vmatpush1.msra.mxu0 %v1370
    %1956 = vmatprep.subr.mxu0 %v1367
    %1957 = vmatpush1.msra.mxu0 %v1366
    %1958 = vmatprep.subr.mxu0 %v1363
    %1959 = vmatpush1.msra.mxu0 %v1362
    %1960 = vmatprep.subr.mxu0 %v1359
    %1961 = vmatpush1.msra.mxu0 %v1358
    %1962 = vmatprep.subr.mxu0 %v1355
    %1963 = vmatpush1.msra.mxu0 %v1354
    %1964 = vmatprep.subr.mxu0 %v1351
    %1965 = vmatpush1.msra.mxu0 %v1350
    %1966 = vmatprep.subr.mxu0 %v1347
    %1967 = vmatpush1.msra.mxu0 %v1346
    %1968 = vmatprep.subr.mxu0 %v1343
    %1969 = vmatpush1.msra.mxu0 %v1342
    %1970 = vmatprep.subr.mxu0 %v1339
    %1971 = vmatpush1.msra.mxu0 %v1338
    %1972 = vmatprep.subr.mxu0 %v1335
    %1973 = vmatpush1.msra.mxu0 %v1334
    %1974 = vmatprep.subr.mxu0 %v1331
    %1975 = vmatpush1.msra.mxu0 %v1330
    %1976 = vmatprep.subr.mxu0 %v1327
    %1977 = vmatpush1.msra.mxu0 %v1326
    %1978 = vmatprep.subr.mxu0 %v1323
    %1979 = vmatpush1.msra.mxu0 %v1322
    %1980 = vmatprep.subr.mxu0 %v1319
    %1981 = vmatpush1.msra.mxu0 %v1318
    %1982 = vmatprep.subr.mxu0 %v1443
    %1983 = vmatpush2.msra.mxu0 %v1442
    %1984 = vmatprep.subr.mxu0 %v1439
    %1985 = vmatpush2.msra.mxu0 %v1438
    %1986 = vmatprep.subr.mxu0 %v1435
    %1987 = vmatpush2.msra.mxu0 %v1434
    %1988 = vmatprep.subr.mxu0 %v1431
    %1989 = vmatpush2.msra.mxu0 %v1430
    %1990 = vmatprep.subr.mxu0 %v1427
    %1991 = vmatpush2.msra.mxu0 %v1426
    %1992 = vmatprep.subr.mxu0 %v1423
    %1993 = vmatpush2.msra.mxu0 %v1422
    %1994 = vmatprep.subr.mxu0 %v1419
    %1995 = vmatpush2.msra.mxu0 %v1418
    %1996 = vmatprep.subr.mxu0 %v1415
    %1997 = vmatpush2.msra.mxu0 %v1414
    %1998 = vmatprep.subr.mxu0 %v1411
    %1999 = vmatpush2.msra.mxu0 %v1410
    %2000 = vmatprep.subr.mxu0 %v1407
    %2001 = vmatpush2.msra.mxu0 %v1406
    %2002 = vmatprep.subr.mxu0 %v1403
    %2003 = vmatpush2.msra.mxu0 %v1402
    %2004 = vmatprep.subr.mxu0 %v1399
    %2005 = vmatpush2.msra.mxu0 %v1398
    %2006 = vmatprep.subr.mxu0 %v1395
    %2007 = vmatpush2.msra.mxu0 %v1394
    %2008 = vmatprep.subr.mxu0 %v1391
    %2009 = vmatpush2.msra.mxu0 %v1390
    %2010 = vmatprep.subr.mxu0 %v1387
    %2011 = vmatpush2.msra.mxu0 %v1386
    %2012 = vmatprep.subr.mxu0 %v1383
    %2013 = vmatpush2.msra.mxu0 %v1382
    %2014 = vmatprep.mubr.f32.mxu0 %v1015
    %2015 = vmatmul.mubr.f32.gmra.mxu0 %v1014
    %v2016 = vpop.f32.mrf.mxu0
    %v2017 = vadd.f32 %v1904, %v2016
    %v2018 = vpop.f32.mrf.mxu0
    %v2019 = vadd.f32 %v1906, %v2018
    %2020 = vmatprep.mubr.f32.mxu0 %v1017
    %2021 = vmatmul.mubr.f32.gmra.mxu0 %v1016
    %v2022 = vpop.f32.mrf.mxu0
    %v2023 = vadd.f32 %v1910, %v2022
    %v2024 = vpop.f32.mrf.mxu0
    %v2025 = vadd.f32 %v1912, %v2024
    %2026 = vmatprep.mubr.f32.mxu0 %v1019
    %2027 = vmatmul.mubr.f32.gmra.mxu0 %v1018
    %v2028 = vpop.f32.mrf.mxu0
    %v2029 = vadd.f32 %v1916, %v2028
    %v2030 = vpop.f32.mrf.mxu0
    %v2031 = vadd.f32 %v1918, %v2030
    %2032 = vmatprep.mubr.f32.mxu0 %v1021
    %2033 = vmatmul.mubr.f32.gmra.mxu0 %v1020
    %v2034 = vpop.f32.mrf.mxu0
    %v2035 = vadd.f32 %v1922, %v2034
    %v2036 = vpop.f32.mrf.mxu0
    %v2037 = vadd.f32 %v1924, %v2036
    %2038 = vmatprep.mubr.f32.mxu0 %v1023
    %2039 = vmatmul.mubr.f32.gmra.mxu0 %v1022
    %v2040 = vpop.f32.mrf.mxu0
    %v2041 = vadd.f32 %v1928, %v2040
    %v2042 = vpop.f32.mrf.mxu0
    %v2043 = vadd.f32 %v1930, %v2042
    %2044 = vmatprep.mubr.f32.mxu0 %v1025
    %2045 = vmatmul.mubr.f32.gmra.mxu0 %v1024
    %v2046 = vpop.f32.mrf.mxu0
    %v2047 = vadd.f32 %v1934, %v2046
    %v2048 = vpop.f32.mrf.mxu0
    %v2049 = vadd.f32 %v1936, %v2048
    %2050 = vmatprep.mubr.f32.mxu0 %v1027
    %2051 = vmatmul.mubr.f32.gmra.mxu0 %v1026
    %v2052 = vpop.f32.mrf.mxu0
    %v2053 = vadd.f32 %v1940, %v2052
    %v2054 = vpop.f32.mrf.mxu0
    %v2055 = vadd.f32 %v1942, %v2054
    %2056 = vmatprep.mubr.f32.mxu0 %v1029
    %2057 = vmatmul.mubr.f32.gmra.mxu0 %v1028
    %v2058 = vpop.f32.mrf.mxu0
    %v2059 = vadd.f32 %v1946, %v2058
    %v2060 = vpop.f32.mrf.mxu0
    %v2061 = vadd.f32 %v1948, %v2060
    %2062 = vdwg.mxu0
    %2063 = vmatprep.subr.mxu0 %v1507
    %2064 = vmatpush1.msra.mxu0 %v1506
    %2065 = vmatprep.subr.mxu0 %v1503
    %2066 = vmatpush1.msra.mxu0 %v1502
    %2067 = vmatprep.subr.mxu0 %v1499
    %2068 = vmatpush1.msra.mxu0 %v1498
    %2069 = vmatprep.subr.mxu0 %v1495
    %2070 = vmatpush1.msra.mxu0 %v1494
    %2071 = vmatprep.subr.mxu0 %v1491
    %2072 = vmatpush1.msra.mxu0 %v1490
    %2073 = vmatprep.subr.mxu0 %v1487
    %2074 = vmatpush1.msra.mxu0 %v1486
    %2075 = vmatprep.subr.mxu0 %v1483
    %2076 = vmatpush1.msra.mxu0 %v1482
    %2077 = vmatprep.subr.mxu0 %v1479
    %2078 = vmatpush1.msra.mxu0 %v1478
    %2079 = vmatprep.subr.mxu0 %v1475
    %2080 = vmatpush1.msra.mxu0 %v1474
    %2081 = vmatprep.subr.mxu0 %v1471
    %2082 = vmatpush1.msra.mxu0 %v1470
    %2083 = vmatprep.subr.mxu0 %v1467
    %2084 = vmatpush1.msra.mxu0 %v1466
    %2085 = vmatprep.subr.mxu0 %v1463
    %2086 = vmatpush1.msra.mxu0 %v1462
    %2087 = vmatprep.subr.mxu0 %v1459
    %2088 = vmatpush1.msra.mxu0 %v1458
    %2089 = vmatprep.subr.mxu0 %v1455
    %2090 = vmatpush1.msra.mxu0 %v1454
    %2091 = vmatprep.subr.mxu0 %v1451
    %2092 = vmatpush1.msra.mxu0 %v1450
    %2093 = vmatprep.subr.mxu0 %v1447
    %2094 = vmatpush1.msra.mxu0 %v1446
    %2095 = vmatprep.subr.mxu0 %v1571
    %2096 = vmatpush2.msra.mxu0 %v1570
    %2097 = vmatprep.subr.mxu0 %v1567
    %2098 = vmatpush2.msra.mxu0 %v1566
    %2099 = vmatprep.subr.mxu0 %v1563
    %2100 = vmatpush2.msra.mxu0 %v1562
    %2101 = vmatprep.subr.mxu0 %v1559
    %2102 = vmatpush2.msra.mxu0 %v1558
    %2103 = vmatprep.subr.mxu0 %v1555
    %2104 = vmatpush2.msra.mxu0 %v1554
    %2105 = vmatprep.subr.mxu0 %v1551
    %2106 = vmatpush2.msra.mxu0 %v1550
    %2107 = vmatprep.subr.mxu0 %v1547
    %2108 = vmatpush2.msra.mxu0 %v1546
    %2109 = vmatprep.subr.mxu0 %v1543
    %2110 = vmatpush2.msra.mxu0 %v1542
    %2111 = vmatprep.subr.mxu0 %v1539
    %2112 = vmatpush2.msra.mxu0 %v1538
    %2113 = vmatprep.subr.mxu0 %v1535
    %2114 = vmatpush2.msra.mxu0 %v1534
    %2115 = vmatprep.subr.mxu0 %v1531
    %2116 = vmatpush2.msra.mxu0 %v1530
    %2117 = vmatprep.subr.mxu0 %v1527
    %2118 = vmatpush2.msra.mxu0 %v1526
    %2119 = vmatprep.subr.mxu0 %v1523
    %2120 = vmatpush2.msra.mxu0 %v1522
    %2121 = vmatprep.subr.mxu0 %v1519
    %2122 = vmatpush2.msra.mxu0 %v1518
    %2123 = vmatprep.subr.mxu0 %v1515
    %2124 = vmatpush2.msra.mxu0 %v1514
    %2125 = vmatprep.subr.mxu0 %v1511
    %2126 = vmatpush2.msra.mxu0 %v1510
    %2127 = vmatprep.mubr.f32.mxu0 %v1031
    %2128 = vmatmul.mubr.f32.gmra.mxu0 %v1030
    %v2129 = vpop.f32.mrf.mxu0
    %v2130 = vadd.f32 %v2017, %v2129
    %v2131 = vpop.f32.mrf.mxu0
    %v2132 = vadd.f32 %v2019, %v2131
    %2133 = vmatprep.mubr.f32.mxu0 %v1033
    %2134 = vmatmul.mubr.f32.gmra.mxu0 %v1032
    %v2135 = vpop.f32.mrf.mxu0
    %v2136 = vadd.f32 %v2023, %v2135
    %v2137 = vpop.f32.mrf.mxu0
    %v2138 = vadd.f32 %v2025, %v2137
    %2139 = vmatprep.mubr.f32.mxu0 %v1035
    %2140 = vmatmul.mubr.f32.gmra.mxu0 %v1034
    %v2141 = vpop.f32.mrf.mxu0
    %v2142 = vadd.f32 %v2029, %v2141
    %v2143 = vpop.f32.mrf.mxu0
    %v2144 = vadd.f32 %v2031, %v2143
    %2145 = vmatprep.mubr.f32.mxu0 %v1037
    %2146 = vmatmul.mubr.f32.gmra.mxu0 %v1036
    %v2147 = vpop.f32.mrf.mxu0
    %v2148 = vadd.f32 %v2035, %v2147
    %v2149 = vpop.f32.mrf.mxu0
    %v2150 = vadd.f32 %v2037, %v2149
    %2151 = vmatprep.mubr.f32.mxu0 %v1039
    %2152 = vmatmul.mubr.f32.gmra.mxu0 %v1038
    %v2153 = vpop.f32.mrf.mxu0
    %v2154 = vadd.f32 %v2041, %v2153
    %v2155 = vpop.f32.mrf.mxu0
    %v2156 = vadd.f32 %v2043, %v2155
    %2157 = vmatprep.mubr.f32.mxu0 %v1041
    %2158 = vmatmul.mubr.f32.gmra.mxu0 %v1040
    %v2159 = vpop.f32.mrf.mxu0
    %v2160 = vadd.f32 %v2047, %v2159
    %v2161 = vpop.f32.mrf.mxu0
    %v2162 = vadd.f32 %v2049, %v2161
    %2163 = vmatprep.mubr.f32.mxu0 %v1043
    %2164 = vmatmul.mubr.f32.gmra.mxu0 %v1042
    %v2165 = vpop.f32.mrf.mxu0
    %v2166 = vadd.f32 %v2053, %v2165
    %v2167 = vpop.f32.mrf.mxu0
    %v2168 = vadd.f32 %v2055, %v2167
    %2169 = vmatprep.mubr.f32.mxu0 %v1045
    %2170 = vmatmul.mubr.f32.gmra.mxu0 %v1044
    %v2171 = vpop.f32.mrf.mxu0
    %v2172 = vadd.f32 %v2059, %v2171
    %v2173 = vpop.f32.mrf.mxu0
    %v2174 = vadd.f32 %v2061, %v2173
    %2175 = vdwg.mxu0
    %2176 = vmatprep.subr.mxu0 %v1635
    %2177 = vmatpush1.msra.mxu0 %v1634
    %2178 = vmatprep.subr.mxu0 %v1631
    %2179 = vmatpush1.msra.mxu0 %v1630
    %2180 = vmatprep.subr.mxu0 %v1627
    %2181 = vmatpush1.msra.mxu0 %v1626
    %2182 = vmatprep.subr.mxu0 %v1623
    %2183 = vmatpush1.msra.mxu0 %v1622
    %2184 = vmatprep.subr.mxu0 %v1619
    %2185 = vmatpush1.msra.mxu0 %v1618
    %2186 = vmatprep.subr.mxu0 %v1615
    %2187 = vmatpush1.msra.mxu0 %v1614
    %2188 = vmatprep.subr.mxu0 %v1611
    %2189 = vmatpush1.msra.mxu0 %v1610
    %2190 = vmatprep.subr.mxu0 %v1607
    %2191 = vmatpush1.msra.mxu0 %v1606
    %2192 = vmatprep.subr.mxu0 %v1603
    %2193 = vmatpush1.msra.mxu0 %v1602
    %2194 = vmatprep.subr.mxu0 %v1599
    %2195 = vmatpush1.msra.mxu0 %v1598
    %2196 = vmatprep.subr.mxu0 %v1595
    %2197 = vmatpush1.msra.mxu0 %v1594
    %2198 = vmatprep.subr.mxu0 %v1591
    %2199 = vmatpush1.msra.mxu0 %v1590
    %2200 = vmatprep.subr.mxu0 %v1587
    %2201 = vmatpush1.msra.mxu0 %v1586
    %2202 = vmatprep.subr.mxu0 %v1583
    %2203 = vmatpush1.msra.mxu0 %v1582
    %2204 = vmatprep.subr.mxu0 %v1579
    %2205 = vmatpush1.msra.mxu0 %v1578
    %2206 = vmatprep.subr.mxu0 %v1575
    %2207 = vmatpush1.msra.mxu0 %v1574
    %2208 = vmatprep.subr.mxu0 %v1699
    %2209 = vmatpush2.msra.mxu0 %v1698
    %2210 = vmatprep.subr.mxu0 %v1695
    %2211 = vmatpush2.msra.mxu0 %v1694
    %2212 = vmatprep.subr.mxu0 %v1691
    %2213 = vmatpush2.msra.mxu0 %v1690
    %2214 = vmatprep.subr.mxu0 %v1687
    %2215 = vmatpush2.msra.mxu0 %v1686
    %2216 = vmatprep.subr.mxu0 %v1683
    %2217 = vmatpush2.msra.mxu0 %v1682
    %2218 = vmatprep.subr.mxu0 %v1679
    %2219 = vmatpush2.msra.mxu0 %v1678
    %2220 = vmatprep.subr.mxu0 %v1675
    %2221 = vmatpush2.msra.mxu0 %v1674
    %2222 = vmatprep.subr.mxu0 %v1671
    %2223 = vmatpush2.msra.mxu0 %v1670
    %2224 = vmatprep.subr.mxu0 %v1667
    %2225 = vmatpush2.msra.mxu0 %v1666
    %2226 = vmatprep.subr.mxu0 %v1663
    %2227 = vmatpush2.msra.mxu0 %v1662
    %2228 = vmatprep.subr.mxu0 %v1659
    %2229 = vmatpush2.msra.mxu0 %v1658
    %2230 = vmatprep.subr.mxu0 %v1655
    %2231 = vmatpush2.msra.mxu0 %v1654
    %2232 = vmatprep.subr.mxu0 %v1651
    %2233 = vmatpush2.msra.mxu0 %v1650
    %2234 = vmatprep.subr.mxu0 %v1647
    %2235 = vmatpush2.msra.mxu0 %v1646
    %2236 = vmatprep.subr.mxu0 %v1643
    %2237 = vmatpush2.msra.mxu0 %v1642
    %2238 = vmatprep.subr.mxu0 %v1639
    %2239 = vmatpush2.msra.mxu0 %v1638
    %2240 = vmatprep.mubr.f32.mxu0 %v1047
    %2241 = vmatmul.mubr.f32.gmra.mxu0 %v1046
    %v2242 = vpop.f32.mrf.mxu0
    %v2243 = vadd.f32 %v2130, %v2242
    %v2244 = vpop.f32.mrf.mxu0
    %v2245 = vadd.f32 %v2132, %v2244
    %2246 = vmatprep.mubr.f32.mxu0 %v1049
    %2247 = vmatmul.mubr.f32.gmra.mxu0 %v1048
    %v2248 = vpop.f32.mrf.mxu0
    %v2249 = vadd.f32 %v2136, %v2248
    %v2250 = vpop.f32.mrf.mxu0
    %v2251 = vadd.f32 %v2138, %v2250
    %2252 = vmatprep.mubr.f32.mxu0 %v1051
    %2253 = vmatmul.mubr.f32.gmra.mxu0 %v1050
    %v2254 = vpop.f32.mrf.mxu0
    %v2255 = vadd.f32 %v2142, %v2254
    %v2256 = vpop.f32.mrf.mxu0
    %v2257 = vadd.f32 %v2144, %v2256
    %2258 = vmatprep.mubr.f32.mxu0 %v1053
    %2259 = vmatmul.mubr.f32.gmra.mxu0 %v1052
    %v2260 = vpop.f32.mrf.mxu0
    %v2261 = vadd.f32 %v2148, %v2260
    %v2262 = vpop.f32.mrf.mxu0
    %v2263 = vadd.f32 %v2150, %v2262
    %2264 = vmatprep.mubr.f32.mxu0 %v1055
    %2265 = vmatmul.mubr.f32.gmra.mxu0 %v1054
    %v2266 = vpop.f32.mrf.mxu0
    %v2267 = vadd.f32 %v2154, %v2266
    %v2268 = vpop.f32.mrf.mxu0
    %v2269 = vadd.f32 %v2156, %v2268
    %2270 = vmatprep.mubr.f32.mxu0 %v1057
    %2271 = vmatmul.mubr.f32.gmra.mxu0 %v1056
    %v2272 = vpop.f32.mrf.mxu0
    %v2273 = vadd.f32 %v2160, %v2272
    %v2274 = vpop.f32.mrf.mxu0
    %v2275 = vadd.f32 %v2162, %v2274
    %2276 = vmatprep.mubr.f32.mxu0 %v1059
    %2277 = vmatmul.mubr.f32.gmra.mxu0 %v1058
    %v2278 = vpop.f32.mrf.mxu0
    %v2279 = vadd.f32 %v2166, %v2278
    %v2280 = vpop.f32.mrf.mxu0
    %v2281 = vadd.f32 %v2168, %v2280
    %2282 = vmatprep.mubr.f32.mxu0 %v1061
    %2283 = vmatmul.mubr.f32.gmra.mxu0 %v1060
    %v2284 = vpop.f32.mrf.mxu0
    %v2285 = vadd.f32 %v2172, %v2284
    %v2286 = vpop.f32.mrf.mxu0
    %v2287 = vadd.f32 %v2174, %v2286
    %2288 = vdwg.mxu0
    %2289 = vmatprep.subr.mxu0 %v1125
    %2290 = vmatpush1.msra.mxu0 %v1124
    %2291 = vmatprep.subr.mxu0 %v1121
    %2292 = vmatpush1.msra.mxu0 %v1120
    %2293 = vmatprep.subr.mxu0 %v1117
    %2294 = vmatpush1.msra.mxu0 %v1116
    %2295 = vmatprep.subr.mxu0 %v1113
    %2296 = vmatpush1.msra.mxu0 %v1112
    %2297 = vmatprep.subr.mxu0 %v1109
    %2298 = vmatpush1.msra.mxu0 %v1108
    %2299 = vmatprep.subr.mxu0 %v1105
    %2300 = vmatpush1.msra.mxu0 %v1104
    %2301 = vmatprep.subr.mxu0 %v1101
    %2302 = vmatpush1.msra.mxu0 %v1100
    %2303 = vmatprep.subr.mxu0 %v1097
    %2304 = vmatpush1.msra.mxu0 %v1096
    %2305 = vmatprep.subr.mxu0 %v1093
    %2306 = vmatpush1.msra.mxu0 %v1092
    %2307 = vmatprep.subr.mxu0 %v1089
    %2308 = vmatpush1.msra.mxu0 %v1088
    %2309 = vmatprep.subr.mxu0 %v1085
    %2310 = vmatpush1.msra.mxu0 %v1084
    %2311 = vmatprep.subr.mxu0 %v1081
    %2312 = vmatpush1.msra.mxu0 %v1080
    %2313 = vmatprep.subr.mxu0 %v1077
    %2314 = vmatpush1.msra.mxu0 %v1076
    %2315 = vmatprep.subr.mxu0 %v1073
    %2316 = vmatpush1.msra.mxu0 %v1072
    %2317 = vmatprep.subr.mxu0 %v1069
    %2318 = vmatpush1.msra.mxu0 %v1068
    %2319 = vmatprep.subr.mxu0 %v1065
    %2320 = vmatpush1.msra.mxu0 %v1064
    %2321 = vmatprep.subr.mxu0 %v1189
    %2322 = vmatpush2.msra.mxu0 %v1188
    %2323 = vmatprep.subr.mxu0 %v1185
    %2324 = vmatpush2.msra.mxu0 %v1184
    %2325 = vmatprep.subr.mxu0 %v1181
    %2326 = vmatpush2.msra.mxu0 %v1180
    %2327 = vmatprep.subr.mxu0 %v1177
    %2328 = vmatpush2.msra.mxu0 %v1176
    %2329 = vmatprep.subr.mxu0 %v1173
    %2330 = vmatpush2.msra.mxu0 %v1172
    %2331 = vmatprep.subr.mxu0 %v1169
    %2332 = vmatpush2.msra.mxu0 %v1168
    %2333 = vmatprep.subr.mxu0 %v1165
    %2334 = vmatpush2.msra.mxu0 %v1164
    %2335 = vmatprep.subr.mxu0 %v1161
    %2336 = vmatpush2.msra.mxu0 %v1160
    %2337 = vmatprep.subr.mxu0 %v1157
    %2338 = vmatpush2.msra.mxu0 %v1156
    %2339 = vmatprep.subr.mxu0 %v1153
    %2340 = vmatpush2.msra.mxu0 %v1152
    %2341 = vmatprep.subr.mxu0 %v1149
    %2342 = vmatpush2.msra.mxu0 %v1148
    %2343 = vmatprep.subr.mxu0 %v1145
    %2344 = vmatpush2.msra.mxu0 %v1144
    %2345 = vmatprep.subr.mxu0 %v1141
    %2346 = vmatpush2.msra.mxu0 %v1140
    %2347 = vmatprep.subr.mxu0 %v1137
    %2348 = vmatpush2.msra.mxu0 %v1136
    %2349 = vmatprep.subr.mxu0 %v1133
    %2350 = vmatpush2.msra.mxu0 %v1132
    %2351 = vmatprep.subr.mxu0 %v1129
    %2352 = vmatpush2.msra.mxu0 %v1128
    %2353 = vmatprep.mubr.f32.mxu0 %v983
    %2354 = vmatmul.mubr.f32.gmra.mxu0 %v982
    %v2355 = vpop.f32.mrf.mxu0
    %v2356 = vadd.f32 %v1715, %v2355
    %v2357 = vpop.f32.mrf.mxu0
    %v2358 = vadd.f32 %v1719, %v2357
    %2359 = vmatprep.mubr.f32.mxu0 %v985
    %2360 = vmatmul.mubr.f32.gmra.mxu0 %v984
    %v2361 = vpop.f32.mrf.mxu0
    %v2362 = vadd.f32 %v1715, %v2361
    %v2363 = vpop.f32.mrf.mxu0
    %v2364 = vadd.f32 %v1719, %v2363
    %2365 = vmatprep.mubr.f32.mxu0 %v987
    %2366 = vmatmul.mubr.f32.gmra.mxu0 %v986
    %v2367 = vpop.f32.mrf.mxu0
    %v2368 = vadd.f32 %v1715, %v2367
    %v2369 = vpop.f32.mrf.mxu0
    %v2370 = vadd.f32 %v1719, %v2369
    %2371 = vmatprep.mubr.f32.mxu0 %v989
    %2372 = vmatmul.mubr.f32.gmra.mxu0 %v988
    %v2373 = vpop.f32.mrf.mxu0
    %v2374 = vadd.f32 %v1715, %v2373
    %v2375 = vpop.f32.mrf.mxu0
    %v2376 = vadd.f32 %v1719, %v2375
    %2377 = vmatprep.mubr.f32.mxu0 %v991
    %2378 = vmatmul.mubr.f32.gmra.mxu0 %v990
    %v2379 = vpop.f32.mrf.mxu0
    %v2380 = vadd.f32 %v1715, %v2379
    %v2381 = vpop.f32.mrf.mxu0
    %v2382 = vadd.f32 %v1719, %v2381
    %2383 = vmatprep.mubr.f32.mxu0 %v993
    %2384 = vmatmul.mubr.f32.gmra.mxu0 %v992
    %v2385 = vpop.f32.mrf.mxu0
    %v2386 = vadd.f32 %v1715, %v2385
    %v2387 = vpop.f32.mrf.mxu0
    %v2388 = vadd.f32 %v1719, %v2387
    %2389 = vmatprep.mubr.f32.mxu0 %v995
    %2390 = vmatmul.mubr.f32.gmra.mxu0 %v994
    %v2391 = vpop.f32.mrf.mxu0
    %v2392 = vadd.f32 %v1715, %v2391
    %v2393 = vpop.f32.mrf.mxu0
    %v2394 = vadd.f32 %v1719, %v2393
    %2395 = vmatprep.mubr.f32.mxu0 %v997
    %2396 = vmatmul.mubr.f32.gmra.mxu0 %v996
    %v2397 = vpop.f32.mrf.mxu0
    %v2398 = vadd.f32 %v1715, %v2397
    %v2399 = vpop.f32.mrf.mxu0
    %v2400 = vadd.f32 %v1719, %v2399
    %2401 = vdwg.mxu0
    %2402 = vmatprep.subr.mxu0 %v1253
    %2403 = vmatpush1.msra.mxu0 %v1252
    %2404 = vmatprep.subr.mxu0 %v1249
    %2405 = vmatpush1.msra.mxu0 %v1248
    %2406 = vmatprep.subr.mxu0 %v1245
    %2407 = vmatpush1.msra.mxu0 %v1244
    %2408 = vmatprep.subr.mxu0 %v1241
    %2409 = vmatpush1.msra.mxu0 %v1240
    %2410 = vmatprep.subr.mxu0 %v1237
    %2411 = vmatpush1.msra.mxu0 %v1236
    %2412 = vmatprep.subr.mxu0 %v1233
    %2413 = vmatpush1.msra.mxu0 %v1232
    %2414 = vmatprep.subr.mxu0 %v1229
    %2415 = vmatpush1.msra.mxu0 %v1228
    %2416 = vmatprep.subr.mxu0 %v1225
    %2417 = vmatpush1.msra.mxu0 %v1224
    %2418 = vmatprep.subr.mxu0 %v1221
    %2419 = vmatpush1.msra.mxu0 %v1220
    %2420 = vmatprep.subr.mxu0 %v1217
    %2421 = vmatpush1.msra.mxu0 %v1216
    %2422 = vmatprep.subr.mxu0 %v1213
    %2423 = vmatpush1.msra.mxu0 %v1212
    %2424 = vmatprep.subr.mxu0 %v1209
    %2425 = vmatpush1.msra.mxu0 %v1208
    %2426 = vmatprep.subr.mxu0 %v1205
    %2427 = vmatpush1.msra.mxu0 %v1204
    %2428 = vmatprep.subr.mxu0 %v1201
    %2429 = vmatpush1.msra.mxu0 %v1200
    %2430 = vmatprep.subr.mxu0 %v1197
    %2431 = vmatpush1.msra.mxu0 %v1196
    %2432 = vmatprep.subr.mxu0 %v1193
    %2433 = vmatpush1.msra.mxu0 %v1192
    %2434 = vmatprep.subr.mxu0 %v1317
    %2435 = vmatpush2.msra.mxu0 %v1316
    %2436 = vmatprep.subr.mxu0 %v1313
    %2437 = vmatpush2.msra.mxu0 %v1312
    %2438 = vmatprep.subr.mxu0 %v1309
    %2439 = vmatpush2.msra.mxu0 %v1308
    %2440 = vmatprep.subr.mxu0 %v1305
    %2441 = vmatpush2.msra.mxu0 %v1304
    %2442 = vmatprep.subr.mxu0 %v1301
    %2443 = vmatpush2.msra.mxu0 %v1300
    %2444 = vmatprep.subr.mxu0 %v1297
    %2445 = vmatpush2.msra.mxu0 %v1296
    %2446 = vmatprep.subr.mxu0 %v1293
    %2447 = vmatpush2.msra.mxu0 %v1292
    %2448 = vmatprep.subr.mxu0 %v1289
    %2449 = vmatpush2.msra.mxu0 %v1288
    %2450 = vmatprep.subr.mxu0 %v1285
    %2451 = vmatpush2.msra.mxu0 %v1284
    %2452 = vmatprep.subr.mxu0 %v1281
    %2453 = vmatpush2.msra.mxu0 %v1280
    %2454 = vmatprep.subr.mxu0 %v1277
    %2455 = vmatpush2.msra.mxu0 %v1276
    %2456 = vmatprep.subr.mxu0 %v1273
    %2457 = vmatpush2.msra.mxu0 %v1272
    %2458 = vmatprep.subr.mxu0 %v1269
    %2459 = vmatpush2.msra.mxu0 %v1268
    %2460 = vmatprep.subr.mxu0 %v1265
    %2461 = vmatpush2.msra.mxu0 %v1264
    %2462 = vmatprep.subr.mxu0 %v1261
    %2463 = vmatpush2.msra.mxu0 %v1260
    %2464 = vmatprep.subr.mxu0 %v1257
    %2465 = vmatpush2.msra.mxu0 %v1256
    %2466 = vmatprep.mubr.f32.mxu0 %v999
    %2467 = vmatmul.mubr.f32.gmra.mxu0 %v998
    %v2468 = vpop.f32.mrf.mxu0
    %v2469 = vadd.f32 %v2356, %v2468
    %v2470 = vpop.f32.mrf.mxu0
    %v2471 = vadd.f32 %v2358, %v2470
    %2472 = vmatprep.mubr.f32.mxu0 %v1001
    %2473 = vmatmul.mubr.f32.gmra.mxu0 %v1000
    %v2474 = vpop.f32.mrf.mxu0
    %v2475 = vadd.f32 %v2362, %v2474
    %v2476 = vpop.f32.mrf.mxu0
    %v2477 = vadd.f32 %v2364, %v2476
    %2478 = vmatprep.mubr.f32.mxu0 %v1003
    %2479 = vmatmul.mubr.f32.gmra.mxu0 %v1002
    %v2480 = vpop.f32.mrf.mxu0
    %v2481 = vadd.f32 %v2368, %v2480
    %v2482 = vpop.f32.mrf.mxu0
    %v2483 = vadd.f32 %v2370, %v2482
    %2484 = vmatprep.mubr.f32.mxu0 %v1005
    %2485 = vmatmul.mubr.f32.gmra.mxu0 %v1004
    %v2486 = vpop.f32.mrf.mxu0
    %v2487 = vadd.f32 %v2374, %v2486
    %v2488 = vpop.f32.mrf.mxu0
    %v2489 = vadd.f32 %v2376, %v2488
    %2490 = vmatprep.mubr.f32.mxu0 %v1007
    %2491 = vmatmul.mubr.f32.gmra.mxu0 %v1006
    %v2492 = vpop.f32.mrf.mxu0
    %v2493 = vadd.f32 %v2380, %v2492
    %v2494 = vpop.f32.mrf.mxu0
    %v2495 = vadd.f32 %v2382, %v2494
    %2496 = vmatprep.mubr.f32.mxu0 %v1009
    %2497 = vmatmul.mubr.f32.gmra.mxu0 %v1008
    %v2498 = vpop.f32.mrf.mxu0
    %v2499 = vadd.f32 %v2386, %v2498
    %v2500 = vpop.f32.mrf.mxu0
    %v2501 = vadd.f32 %v2388, %v2500
    %2502 = vmatprep.mubr.f32.mxu0 %v1011
    %2503 = vmatmul.mubr.f32.gmra.mxu0 %v1010
    %v2504 = vpop.f32.mrf.mxu0
    %v2505 = vadd.f32 %v2392, %v2504
    %v2506 = vpop.f32.mrf.mxu0
    %v2507 = vadd.f32 %v2394, %v2506
    %2508 = vmatprep.mubr.f32.mxu0 %v1013
    %2509 = vmatmul.mubr.f32.gmra.mxu0 %v1012
    %v2510 = vpop.f32.mrf.mxu0
    %v2511 = vadd.f32 %v2398, %v2510
    %v2512 = vpop.f32.mrf.mxu0
    %v2513 = vadd.f32 %v2400, %v2512
    %2514 = vdwg.mxu0
    %2515 = vmatprep.subr.mxu0 %v1381
    %2516 = vmatpush1.msra.mxu0 %v1380
    %2517 = vmatprep.subr.mxu0 %v1377
    %2518 = vmatpush1.msra.mxu0 %v1376
    %2519 = vmatprep.subr.mxu0 %v1373
    %2520 = vmatpush1.msra.mxu0 %v1372
    %2521 = vmatprep.subr.mxu0 %v1369
    %2522 = vmatpush1.msra.mxu0 %v1368
    %2523 = vmatprep.subr.mxu0 %v1365
    %2524 = vmatpush1.msra.mxu0 %v1364
    %2525 = vmatprep.subr.mxu0 %v1361
    %2526 = vmatpush1.msra.mxu0 %v1360
    %2527 = vmatprep.subr.mxu0 %v1357
    %2528 = vmatpush1.msra.mxu0 %v1356
    %2529 = vmatprep.subr.mxu0 %v1353
    %2530 = vmatpush1.msra.mxu0 %v1352
    %2531 = vmatprep.subr.mxu0 %v1349
    %2532 = vmatpush1.msra.mxu0 %v1348
    %2533 = vmatprep.subr.mxu0 %v1345
    %2534 = vmatpush1.msra.mxu0 %v1344
    %2535 = vmatprep.subr.mxu0 %v1341
    %2536 = vmatpush1.msra.mxu0 %v1340
    %2537 = vmatprep.subr.mxu0 %v1337
    %2538 = vmatpush1.msra.mxu0 %v1336
    %2539 = vmatprep.subr.mxu0 %v1333
    %2540 = vmatpush1.msra.mxu0 %v1332
    %2541 = vmatprep.subr.mxu0 %v1329
    %2542 = vmatpush1.msra.mxu0 %v1328
    %2543 = vmatprep.subr.mxu0 %v1325
    %2544 = vmatpush1.msra.mxu0 %v1324
    %2545 = vmatprep.subr.mxu0 %v1321
    %2546 = vmatpush1.msra.mxu0 %v1320
    %2547 = vmatprep.subr.mxu0 %v1445
    %2548 = vmatpush2.msra.mxu0 %v1444
    %2549 = vmatprep.subr.mxu0 %v1441
    %2550 = vmatpush2.msra.mxu0 %v1440
    %2551 = vmatprep.subr.mxu0 %v1437
    %2552 = vmatpush2.msra.mxu0 %v1436
    %2553 = vmatprep.subr.mxu0 %v1433
    %2554 = vmatpush2.msra.mxu0 %v1432
    %2555 = vmatprep.subr.mxu0 %v1429
    %2556 = vmatpush2.msra.mxu0 %v1428
    %2557 = vmatprep.subr.mxu0 %v1425
    %2558 = vmatpush2.msra.mxu0 %v1424
    %2559 = vmatprep.subr.mxu0 %v1421
    %2560 = vmatpush2.msra.mxu0 %v1420
    %2561 = vmatprep.subr.mxu0 %v1417
    %2562 = vmatpush2.msra.mxu0 %v1416
    %2563 = vmatprep.subr.mxu0 %v1413
    %2564 = vmatpush2.msra.mxu0 %v1412
    %2565 = vmatprep.subr.mxu0 %v1409
    %2566 = vmatpush2.msra.mxu0 %v1408
    %2567 = vmatprep.subr.mxu0 %v1405
    %2568 = vmatpush2.msra.mxu0 %v1404
    %2569 = vmatprep.subr.mxu0 %v1401
    %2570 = vmatpush2.msra.mxu0 %v1400
    %2571 = vmatprep.subr.mxu0 %v1397
    %2572 = vmatpush2.msra.mxu0 %v1396
    %2573 = vmatprep.subr.mxu0 %v1393
    %2574 = vmatpush2.msra.mxu0 %v1392
    %2575 = vmatprep.subr.mxu0 %v1389
    %2576 = vmatpush2.msra.mxu0 %v1388
    %2577 = vmatprep.subr.mxu0 %v1385
    %2578 = vmatpush2.msra.mxu0 %v1384
    %2579 = vmatprep.mubr.f32.mxu0 %v1015
    %2580 = vmatmul.mubr.f32.gmra.mxu0 %v1014
    %v2581 = vpop.f32.mrf.mxu0
    %v2582 = vadd.f32 %v2469, %v2581
    %v2583 = vpop.f32.mrf.mxu0
    %v2584 = vadd.f32 %v2471, %v2583
    %2585 = vmatprep.mubr.f32.mxu0 %v1017
    %2586 = vmatmul.mubr.f32.gmra.mxu0 %v1016
    %v2587 = vpop.f32.mrf.mxu0
    %v2588 = vadd.f32 %v2475, %v2587
    %v2589 = vpop.f32.mrf.mxu0
    %v2590 = vadd.f32 %v2477, %v2589
    %2591 = vmatprep.mubr.f32.mxu0 %v1019
    %2592 = vmatmul.mubr.f32.gmra.mxu0 %v1018
    %v2593 = vpop.f32.mrf.mxu0
    %v2594 = vadd.f32 %v2481, %v2593
    %v2595 = vpop.f32.mrf.mxu0
    %v2596 = vadd.f32 %v2483, %v2595
    %2597 = vmatprep.mubr.f32.mxu0 %v1021
    %2598 = vmatmul.mubr.f32.gmra.mxu0 %v1020
    %v2599 = vpop.f32.mrf.mxu0
    %v2600 = vadd.f32 %v2487, %v2599
    %v2601 = vpop.f32.mrf.mxu0
    %v2602 = vadd.f32 %v2489, %v2601
    %2603 = vmatprep.mubr.f32.mxu0 %v1023
    %2604 = vmatmul.mubr.f32.gmra.mxu0 %v1022
    %v2605 = vpop.f32.mrf.mxu0
    %v2606 = vadd.f32 %v2493, %v2605
    %v2607 = vpop.f32.mrf.mxu0
    %v2608 = vadd.f32 %v2495, %v2607
    %2609 = vmatprep.mubr.f32.mxu0 %v1025
    %2610 = vmatmul.mubr.f32.gmra.mxu0 %v1024
    %v2611 = vpop.f32.mrf.mxu0
    %v2612 = vadd.f32 %v2499, %v2611
    %v2613 = vpop.f32.mrf.mxu0
    %v2614 = vadd.f32 %v2501, %v2613
    %2615 = vmatprep.mubr.f32.mxu0 %v1027
    %2616 = vmatmul.mubr.f32.gmra.mxu0 %v1026
    %v2617 = vpop.f32.mrf.mxu0
    %v2618 = vadd.f32 %v2505, %v2617
    %v2619 = vpop.f32.mrf.mxu0
    %v2620 = vadd.f32 %v2507, %v2619
    %2621 = vmatprep.mubr.f32.mxu0 %v1029
    %2622 = vmatmul.mubr.f32.gmra.mxu0 %v1028
    %v2623 = vpop.f32.mrf.mxu0
    %v2624 = vadd.f32 %v2511, %v2623
    %v2625 = vpop.f32.mrf.mxu0
    %v2626 = vadd.f32 %v2513, %v2625
    %2627 = vdwg.mxu0
    %2628 = vmatprep.subr.mxu0 %v1509
    %2629 = vmatpush1.msra.mxu0 %v1508
    %2630 = vmatprep.subr.mxu0 %v1505
    %2631 = vmatpush1.msra.mxu0 %v1504
    %2632 = vmatprep.subr.mxu0 %v1501
    %2633 = vmatpush1.msra.mxu0 %v1500
    %2634 = vmatprep.subr.mxu0 %v1497
    %2635 = vmatpush1.msra.mxu0 %v1496
    %2636 = vmatprep.subr.mxu0 %v1493
    %2637 = vmatpush1.msra.mxu0 %v1492
    %2638 = vmatprep.subr.mxu0 %v1489
    %2639 = vmatpush1.msra.mxu0 %v1488
    %2640 = vmatprep.subr.mxu0 %v1485
    %2641 = vmatpush1.msra.mxu0 %v1484
    %2642 = vmatprep.subr.mxu0 %v1481
    %2643 = vmatpush1.msra.mxu0 %v1480
    %2644 = vmatprep.subr.mxu0 %v1477
    %2645 = vmatpush1.msra.mxu0 %v1476
    %2646 = vmatprep.subr.mxu0 %v1473
    %2647 = vmatpush1.msra.mxu0 %v1472
    %2648 = vmatprep.subr.mxu0 %v1469
    %2649 = vmatpush1.msra.mxu0 %v1468
    %2650 = vmatprep.subr.mxu0 %v1465
    %2651 = vmatpush1.msra.mxu0 %v1464
    %2652 = vmatprep.subr.mxu0 %v1461
    %2653 = vmatpush1.msra.mxu0 %v1460
    %2654 = vmatprep.subr.mxu0 %v1457
    %2655 = vmatpush1.msra.mxu0 %v1456
    %2656 = vmatprep.subr.mxu0 %v1453
    %2657 = vmatpush1.msra.mxu0 %v1452
    %2658 = vmatprep.subr.mxu0 %v1449
    %2659 = vmatpush1.msra.mxu0 %v1448
    %2660 = vmatprep.subr.mxu0 %v1573
    %2661 = vmatpush2.msra.mxu0 %v1572
    %2662 = vmatprep.subr.mxu0 %v1569
    %2663 = vmatpush2.msra.mxu0 %v1568
    %2664 = vmatprep.subr.mxu0 %v1565
    %2665 = vmatpush2.msra.mxu0 %v1564
    %2666 = vmatprep.subr.mxu0 %v1561
    %2667 = vmatpush2.msra.mxu0 %v1560
    %2668 = vmatprep.subr.mxu0 %v1557
    %2669 = vmatpush2.msra.mxu0 %v1556
    %2670 = vmatprep.subr.mxu0 %v1553
    %2671 = vmatpush2.msra.mxu0 %v1552
    %2672 = vmatprep.subr.mxu0 %v1549
    %2673 = vmatpush2.msra.mxu0 %v1548
    %2674 = vmatprep.subr.mxu0 %v1545
    %2675 = vmatpush2.msra.mxu0 %v1544
    %2676 = vmatprep.subr.mxu0 %v1541
    %2677 = vmatpush2.msra.mxu0 %v1540
    %2678 = vmatprep.subr.mxu0 %v1537
    %2679 = vmatpush2.msra.mxu0 %v1536
    %2680 = vmatprep.subr.mxu0 %v1533
    %2681 = vmatpush2.msra.mxu0 %v1532
    %2682 = vmatprep.subr.mxu0 %v1529
    %2683 = vmatpush2.msra.mxu0 %v1528
    %2684 = vmatprep.subr.mxu0 %v1525
    %2685 = vmatpush2.msra.mxu0 %v1524
    %2686 = vmatprep.subr.mxu0 %v1521
    %2687 = vmatpush2.msra.mxu0 %v1520
    %2688 = vmatprep.subr.mxu0 %v1517
    %2689 = vmatpush2.msra.mxu0 %v1516
    %2690 = vmatprep.subr.mxu0 %v1513
    %2691 = vmatpush2.msra.mxu0 %v1512
    %2692 = vmatprep.mubr.f32.mxu0 %v1031
    %2693 = vmatmul.mubr.f32.gmra.mxu0 %v1030
    %v2694 = vpop.f32.mrf.mxu0
    %v2695 = vadd.f32 %v2582, %v2694
    %v2696 = vpop.f32.mrf.mxu0
    %v2697 = vadd.f32 %v2584, %v2696
    %2698 = vmatprep.mubr.f32.mxu0 %v1033
    %2699 = vmatmul.mubr.f32.gmra.mxu0 %v1032
    %v2700 = vpop.f32.mrf.mxu0
    %v2701 = vadd.f32 %v2588, %v2700
    %v2702 = vpop.f32.mrf.mxu0
    %v2703 = vadd.f32 %v2590, %v2702
    %2704 = vmatprep.mubr.f32.mxu0 %v1035
    %2705 = vmatmul.mubr.f32.gmra.mxu0 %v1034
    %v2706 = vpop.f32.mrf.mxu0
    %v2707 = vadd.f32 %v2594, %v2706
    %v2708 = vpop.f32.mrf.mxu0
    %v2709 = vadd.f32 %v2596, %v2708
    %2710 = vmatprep.mubr.f32.mxu0 %v1037
    %2711 = vmatmul.mubr.f32.gmra.mxu0 %v1036
    %v2712 = vpop.f32.mrf.mxu0
    %v2713 = vadd.f32 %v2600, %v2712
    %v2714 = vpop.f32.mrf.mxu0
    %v2715 = vadd.f32 %v2602, %v2714
    %2716 = vmatprep.mubr.f32.mxu0 %v1039
    %2717 = vmatmul.mubr.f32.gmra.mxu0 %v1038
    %v2718 = vpop.f32.mrf.mxu0
    %v2719 = vadd.f32 %v2606, %v2718
    %v2720 = vpop.f32.mrf.mxu0
    %v2721 = vadd.f32 %v2608, %v2720
    %2722 = vmatprep.mubr.f32.mxu0 %v1041
    %2723 = vmatmul.mubr.f32.gmra.mxu0 %v1040
    %v2724 = vpop.f32.mrf.mxu0
    %v2725 = vadd.f32 %v2612, %v2724
    %v2726 = vpop.f32.mrf.mxu0
    %v2727 = vadd.f32 %v2614, %v2726
    %2728 = vmatprep.mubr.f32.mxu0 %v1043
    %2729 = vmatmul.mubr.f32.gmra.mxu0 %v1042
    %v2730 = vpop.f32.mrf.mxu0
    %v2731 = vadd.f32 %v2618, %v2730
    %v2732 = vpop.f32.mrf.mxu0
    %v2733 = vadd.f32 %v2620, %v2732
    %2734 = vmatprep.mubr.f32.mxu0 %v1045
    %2735 = vmatmul.mubr.f32.gmra.mxu0 %v1044
    %v2736 = vpop.f32.mrf.mxu0
    %v2737 = vadd.f32 %v2624, %v2736
    %v2738 = vpop.f32.mrf.mxu0
    %v2739 = vadd.f32 %v2626, %v2738
    %2740 = vdwg.mxu0
    %2741 = vmatprep.subr.mxu0 %v1637
    %2742 = vmatpush1.msra.mxu0 %v1636
    %2743 = vmatprep.subr.mxu0 %v1633
    %2744 = vmatpush1.msra.mxu0 %v1632
    %2745 = vmatprep.subr.mxu0 %v1629
    %2746 = vmatpush1.msra.mxu0 %v1628
    %2747 = vmatprep.subr.mxu0 %v1625
    %2748 = vmatpush1.msra.mxu0 %v1624
    %2749 = vmatprep.subr.mxu0 %v1621
    %2750 = vmatpush1.msra.mxu0 %v1620
    %2751 = vmatprep.subr.mxu0 %v1617
    %2752 = vmatpush1.msra.mxu0 %v1616
    %2753 = vmatprep.subr.mxu0 %v1613
    %2754 = vmatpush1.msra.mxu0 %v1612
    %2755 = vmatprep.subr.mxu0 %v1609
    %2756 = vmatpush1.msra.mxu0 %v1608
    %2757 = vmatprep.subr.mxu0 %v1605
    %2758 = vmatpush1.msra.mxu0 %v1604
    %2759 = vmatprep.subr.mxu0 %v1601
    %2760 = vmatpush1.msra.mxu0 %v1600
    %2761 = vmatprep.subr.mxu0 %v1597
    %2762 = vmatpush1.msra.mxu0 %v1596
    %2763 = vmatprep.subr.mxu0 %v1593
    %2764 = vmatpush1.msra.mxu0 %v1592
    %2765 = vmatprep.subr.mxu0 %v1589
    %2766 = vmatpush1.msra.mxu0 %v1588
    %2767 = vmatprep.subr.mxu0 %v1585
    %2768 = vmatpush1.msra.mxu0 %v1584
    %2769 = vmatprep.subr.mxu0 %v1581
    %2770 = vmatpush1.msra.mxu0 %v1580
    %2771 = vmatprep.subr.mxu0 %v1577
    %2772 = vmatpush1.msra.mxu0 %v1576
    %2773 = vmatprep.subr.mxu0 %v1701
    %2774 = vmatpush2.msra.mxu0 %v1700
    %2775 = vmatprep.subr.mxu0 %v1697
    %2776 = vmatpush2.msra.mxu0 %v1696
    %2777 = vmatprep.subr.mxu0 %v1693
    %2778 = vmatpush2.msra.mxu0 %v1692
    %2779 = vmatprep.subr.mxu0 %v1689
    %2780 = vmatpush2.msra.mxu0 %v1688
    %2781 = vmatprep.subr.mxu0 %v1685
    %2782 = vmatpush2.msra.mxu0 %v1684
    %2783 = vmatprep.subr.mxu0 %v1681
    %2784 = vmatpush2.msra.mxu0 %v1680
    %2785 = vmatprep.subr.mxu0 %v1677
    %2786 = vmatpush2.msra.mxu0 %v1676
    %2787 = vmatprep.subr.mxu0 %v1673
    %2788 = vmatpush2.msra.mxu0 %v1672
    %2789 = vmatprep.subr.mxu0 %v1669
    %2790 = vmatpush2.msra.mxu0 %v1668
    %2791 = vmatprep.subr.mxu0 %v1665
    %2792 = vmatpush2.msra.mxu0 %v1664
    %2793 = vmatprep.subr.mxu0 %v1661
    %2794 = vmatpush2.msra.mxu0 %v1660
    %2795 = vmatprep.subr.mxu0 %v1657
    %2796 = vmatpush2.msra.mxu0 %v1656
    %2797 = vmatprep.subr.mxu0 %v1653
    %2798 = vmatpush2.msra.mxu0 %v1652
    %2799 = vmatprep.subr.mxu0 %v1649
    %2800 = vmatpush2.msra.mxu0 %v1648
    %2801 = vmatprep.subr.mxu0 %v1645
    %2802 = vmatpush2.msra.mxu0 %v1644
    %2803 = vmatprep.subr.mxu0 %v1641
    %2804 = vmatpush2.msra.mxu0 %v1640
    %2805 = vmatprep.mubr.f32.mxu0 %v1047
    %2806 = vmatmul.mubr.f32.gmra.mxu0 %v1046
    %v2807 = vpop.f32.mrf.mxu0
    %v2808 = vadd.f32 %v2695, %v2807
    %v2809 = vpop.f32.mrf.mxu0
    %v2810 = vadd.f32 %v2697, %v2809
    %2811 = vmatprep.mubr.f32.mxu0 %v1049
    %2812 = vmatmul.mubr.f32.gmra.mxu0 %v1048
    %v2813 = vpop.f32.mrf.mxu0
    %v2814 = vadd.f32 %v2701, %v2813
    %v2815 = vpop.f32.mrf.mxu0
    %v2816 = vadd.f32 %v2703, %v2815
    %2817 = vmatprep.mubr.f32.mxu0 %v1051
    %2818 = vmatmul.mubr.f32.gmra.mxu0 %v1050
    %v2819 = vpop.f32.mrf.mxu0
    %v2820 = vadd.f32 %v2707, %v2819
    %v2821 = vpop.f32.mrf.mxu0
    %v2822 = vadd.f32 %v2709, %v2821
    %2823 = vmatprep.mubr.f32.mxu0 %v1053
    %2824 = vmatmul.mubr.f32.gmra.mxu0 %v1052
    %v2825 = vpop.f32.mrf.mxu0
    %v2826 = vadd.f32 %v2713, %v2825
    %v2827 = vpop.f32.mrf.mxu0
    %v2828 = vadd.f32 %v2715, %v2827
    %2829 = vmatprep.mubr.f32.mxu0 %v1055
    %2830 = vmatmul.mubr.f32.gmra.mxu0 %v1054
    %v2831 = vpop.f32.mrf.mxu0
    %v2832 = vadd.f32 %v2719, %v2831
    %v2833 = vpop.f32.mrf.mxu0
    %v2834 = vadd.f32 %v2721, %v2833
    %2835 = vmatprep.mubr.f32.mxu0 %v1057
    %2836 = vmatmul.mubr.f32.gmra.mxu0 %v1056
    %v2837 = vpop.f32.mrf.mxu0
    %v2838 = vadd.f32 %v2725, %v2837
    %v2839 = vpop.f32.mrf.mxu0
    %v2840 = vadd.f32 %v2727, %v2839
    %2841 = vmatprep.mubr.f32.mxu0 %v1059
    %2842 = vmatmul.mubr.f32.gmra.mxu0 %v1058
    %v2843 = vpop.f32.mrf.mxu0
    %v2844 = vadd.f32 %v2731, %v2843
    %v2845 = vpop.f32.mrf.mxu0
    %v2846 = vadd.f32 %v2733, %v2845
    %2847 = vmatprep.mubr.f32.mxu0 %v1061
    %2848 = vmatmul.mubr.f32.gmra.mxu0 %v1060
    %v2849 = vpop.f32.mrf.mxu0
    %v2850 = vadd.f32 %v2737, %v2849
    %v2851 = vpop.f32.mrf.mxu0
    %v2852 = vadd.f32 %v2739, %v2851
    %2853 = vdwg.mxu0
    %v2854 = vmax.f32 %v2243, 0.0
    %v2855 = vmax.f32 %v2245, 0.0
    %v2856 = vmax.f32 %v2808, 0.0
    %v2857 = vmax.f32 %v2810, 0.0
    %v2858 = vmax.f32 %v2249, 0.0
    %v2859 = vmax.f32 %v2251, 0.0
    %v2860 = vmax.f32 %v2814, 0.0
    %v2861 = vmax.f32 %v2816, 0.0
    %v2862 = vmax.f32 %v2255, 0.0
    %v2863 = vmax.f32 %v2257, 0.0
    %v2864 = vmax.f32 %v2820, 0.0
    %v2865 = vmax.f32 %v2822, 0.0
    %v2866 = vmax.f32 %v2261, 0.0
    %v2867 = vmax.f32 %v2263, 0.0
    %v2868 = vmax.f32 %v2826, 0.0
    %v2869 = vmax.f32 %v2828, 0.0
    %v2870 = vmax.f32 %v2267, 0.0
    %v2871 = vmax.f32 %v2269, 0.0
    %v2872 = vmax.f32 %v2832, 0.0
    %v2873 = vmax.f32 %v2834, 0.0
    %v2874 = vmax.f32 %v2273, 0.0
    %v2875 = vmax.f32 %v2275, 0.0
    %v2876 = vmax.f32 %v2838, 0.0
    %v2877 = vmax.f32 %v2840, 0.0
    %v2878 = vmax.f32 %v2279, 0.0
    %v2879 = vmax.f32 %v2281, 0.0
    %v2880 = vmax.f32 %v2844, 0.0
    %v2881 = vmax.f32 %v2846, 0.0
    %v2882 = vmax.f32 %v2285, 0.0
    %v2883 = vmax.f32 %v2287, 0.0
    %v2884 = vmax.f32 %v2850, 0.0
    %v2885 = vmax.f32 %v2852, 0.0
    %v2886 = vmax.f32 %v2854, %v2858
    %v2887 = vmax.f32 %v2855, %v2859
    %v2888 = vmax.f32 %v2856, %v2860
    %v2889 = vmax.f32 %v2857, %v2861
    %v2890 = vmax.f32 %v2886, %v2888
    %v2891 = vmax.f32 %v2887, %v2889
    %v2892 = vmax.f32 %v2862, %v2866
    %v2893 = vmax.f32 %v2863, %v2867
    %v2894 = vmax.f32 %v2864, %v2868
    %v2895 = vmax.f32 %v2865, %v2869
    %v2896 = vmax.f32 %v2892, %v2894
    %v2897 = vmax.f32 %v2893, %v2895
    %v2898 = vmax.f32 %v2870, %v2874
    %v2899 = vmax.f32 %v2871, %v2875
    %v2900 = vmax.f32 %v2872, %v2876
    %v2901 = vmax.f32 %v2873, %v2877
    %v2902 = vmax.f32 %v2898, %v2900
    %v2903 = vmax.f32 %v2899, %v2901
    %v2904 = vmax.f32 %v2878, %v2882
    %v2905 = vmax.f32 %v2879, %v2883
    %v2906 = vmax.f32 %v2880, %v2884
    %v2907 = vmax.f32 %v2881, %v2885
    %v2908 = vmax.f32 %v2904, %v2906
    %v2909 = vmax.f32 %v2905, %v2907
    %v2910 = vld [vmem:[#allocation10] sm:$0xff]
    %v2911 = vld [vmem:[#allocation10 + $0x8] sm:$0xff]
    %v2912 = vld [vmem:[#allocation10 + $0x10] sm:$0xff]
    %v2913 = vld [vmem:[#allocation10 + $0x18] sm:$0xff]
    %v2914 = vld [vmem:[#allocation10 + $0x20] sm:$0xff]
    %v2915 = vld [vmem:[#allocation10 + $0x28] sm:$0xff]
    %v2916 = vld [vmem:[#allocation10 + $0x30] sm:$0xff]
    %v2917 = vld [vmem:[#allocation10 + $0x38] sm:$0xff]
    %v2918 = vld [vmem:[#allocation10 + $0x40] sm:$0xff]
    %v2919 = vld [vmem:[#allocation10 + $0x48] sm:$0xff]
    %v2920 = vld [vmem:[#allocation10 + $0x50] sm:$0xff]
    %v2921 = vld [vmem:[#allocation10 + $0x58] sm:$0xff]
    %v2922 = vld [vmem:[#allocation10 + $0x60] sm:$0xff]
    %v2923 = vld [vmem:[#allocation10 + $0x68] sm:$0xff]
    %v2924 = vld [vmem:[#allocation10 + $0x70] sm:$0xff]
    %v2925 = vld [vmem:[#allocation10 + $0x78] sm:$0xff]
    %v2926 = vld [vmem:[#allocation10 + $0x80] sm:$0xff]
    %v2927 = vld [vmem:[#allocation10 + $0x88] sm:$0xff]
    %v2928 = vld [vmem:[#allocation10 + $0x90] sm:$0xff]
    %v2929 = vld [vmem:[#allocation10 + $0x98] sm:$0xff]
    %v2930 = vld [vmem:[#allocation10 + $0xa0] sm:$0xff]
    %v2931 = vld [vmem:[#allocation10 + $0xa8] sm:$0xff]
    %v2932 = vld [vmem:[#allocation10 + $0xb0] sm:$0xff]
    %v2933 = vld [vmem:[#allocation10 + $0xb8] sm:$0xff]
    %v2934 = vld [vmem:[#allocation10 + $0xc0] sm:$0xff]
    %v2935 = vld [vmem:[#allocation10 + $0xc8] sm:$0xff]
    %v2936 = vld [vmem:[#allocation10 + $0xd0] sm:$0xff]
    %v2937 = vld [vmem:[#allocation10 + $0xd8] sm:$0xff]
    %v2938 = vld [vmem:[#allocation10 + $0xe0] sm:$0xff]
    %v2939 = vld [vmem:[#allocation10 + $0xe8] sm:$0xff]
    %v2940 = vld [vmem:[#allocation10 + $0xf0] sm:$0xff]
    %v2941 = vld [vmem:[#allocation10 + $0xf8] sm:$0xff]
    %v2942 = vld [vmem:[#allocation10 + $0x100] sm:$0xff]
    %v2943 = vld [vmem:[#allocation10 + $0x108] sm:$0xff]
    %v2944 = vld [vmem:[#allocation10 + $0x110] sm:$0xff]
    %v2945 = vld [vmem:[#allocation10 + $0x118] sm:$0xff]
    %v2946 = vld [vmem:[#allocation10 + $0x120] sm:$0xff]
    %v2947 = vld [vmem:[#allocation10 + $0x128] sm:$0xff]
    %v2948 = vld [vmem:[#allocation10 + $0x130] sm:$0xff]
    %v2949 = vld [vmem:[#allocation10 + $0x138] sm:$0xff]
    %v2950 = vld [vmem:[#allocation10 + $0x140] sm:$0xff]
    %v2951 = vld [vmem:[#allocation10 + $0x148] sm:$0xff]
    %v2952 = vld [vmem:[#allocation10 + $0x150] sm:$0xff]
    %v2953 = vld [vmem:[#allocation10 + $0x158] sm:$0xff]
    %v2954 = vld [vmem:[#allocation10 + $0x160] sm:$0xff]
    %v2955 = vld [vmem:[#allocation10 + $0x168] sm:$0xff]
    %v2956 = vld [vmem:[#allocation10 + $0x170] sm:$0xff]
    %v2957 = vld [vmem:[#allocation10 + $0x178] sm:$0xff]
    %v2958 = vld [vmem:[#allocation10 + $0x180] sm:$0xff]
    %v2959 = vld [vmem:[#allocation10 + $0x188] sm:$0xff]
    %v2960 = vld [vmem:[#allocation10 + $0x190] sm:$0xff]
    %v2961 = vld [vmem:[#allocation10 + $0x198] sm:$0xff]
    %v2962 = vld [vmem:[#allocation10 + $0x1a0] sm:$0xff]
    %v2963 = vld [vmem:[#allocation10 + $0x1a8] sm:$0xff]
    %v2964 = vld [vmem:[#allocation10 + $0x1b0] sm:$0xff]
    %v2965 = vld [vmem:[#allocation10 + $0x1b8] sm:$0xff]
    %v2966 = vld [vmem:[#allocation10 + $0x1c0] sm:$0xff]
    %v2967 = vld [vmem:[#allocation10 + $0x1c8] sm:$0xff]
    %v2968 = vld [vmem:[#allocation10 + $0x1d0] sm:$0xff]
    %v2969 = vld [vmem:[#allocation10 + $0x1d8] sm:$0xff]
    %v2970 = vld [vmem:[#allocation10 + $0x1e0] sm:$0xff]
    %v2971 = vld [vmem:[#allocation10 + $0x1e8] sm:$0xff]
    %v2972 = vld [vmem:[#allocation10 + $0x1f0] sm:$0xff]
    %v2973 = vld [vmem:[#allocation10 + $0x1f8] sm:$0xff]
    %v2974 = vld [vmem:[#allocation10 + $0x200] sm:$0xff]
    %v2975 = vld [vmem:[#allocation10 + $0x208] sm:$0xff]
    %v2976 = vld [vmem:[#allocation10 + $0x210] sm:$0xff]
    %v2977 = vld [vmem:[#allocation10 + $0x218] sm:$0xff]
    %v2978 = vld [vmem:[#allocation10 + $0x220] sm:$0xff]
    %v2979 = vld [vmem:[#allocation10 + $0x228] sm:$0xff]
    %v2980 = vld [vmem:[#allocation10 + $0x230] sm:$0xff]
    %v2981 = vld [vmem:[#allocation10 + $0x238] sm:$0xff]
    %v2982 = vld [vmem:[#allocation10 + $0x240] sm:$0xff]
    %v2983 = vld [vmem:[#allocation10 + $0x248] sm:$0xff]
    %v2984 = vld [vmem:[#allocation10 + $0x250] sm:$0xff]
    %v2985 = vld [vmem:[#allocation10 + $0x258] sm:$0xff]
    %v2986 = vld [vmem:[#allocation10 + $0x260] sm:$0xff]
    %v2987 = vld [vmem:[#allocation10 + $0x268] sm:$0xff]
    %v2988 = vld [vmem:[#allocation10 + $0x270] sm:$0xff]
    %v2989 = vld [vmem:[#allocation10 + $0x278] sm:$0xff]
    %v2990 = vld [vmem:[#allocation10 + $0x280] sm:$0xff]
    %v2991 = vld [vmem:[#allocation10 + $0x288] sm:$0xff]
    %v2992 = vld [vmem:[#allocation10 + $0x290] sm:$0xff]
    %v2993 = vld [vmem:[#allocation10 + $0x298] sm:$0xff]
    %v2994 = vld [vmem:[#allocation10 + $0x2a0] sm:$0xff]
    %v2995 = vld [vmem:[#allocation10 + $0x2a8] sm:$0xff]
    %v2996 = vld [vmem:[#allocation10 + $0x2b0] sm:$0xff]
    %v2997 = vld [vmem:[#allocation10 + $0x2b8] sm:$0xff]
    %v2998 = vld [vmem:[#allocation10 + $0x2c0] sm:$0xff]
    %v2999 = vld [vmem:[#allocation10 + $0x2c8] sm:$0xff]
    %v3000 = vld [vmem:[#allocation10 + $0x2d0] sm:$0xff]
    %v3001 = vld [vmem:[#allocation10 + $0x2d8] sm:$0xff]
    %v3002 = vld [vmem:[#allocation10 + $0x2e0] sm:$0xff]
    %v3003 = vld [vmem:[#allocation10 + $0x2e8] sm:$0xff]
    %v3004 = vld [vmem:[#allocation10 + $0x2f0] sm:$0xff]
    %v3005 = vld [vmem:[#allocation10 + $0x2f8] sm:$0xff]
    %v3006 = vld [vmem:[#allocation10 + $0x300] sm:$0xff]
    %v3007 = vld [vmem:[#allocation10 + $0x308] sm:$0xff]
    %v3008 = vld [vmem:[#allocation10 + $0x310] sm:$0xff]
    %v3009 = vld [vmem:[#allocation10 + $0x318] sm:$0xff]
    %v3010 = vld [vmem:[#allocation10 + $0x320] sm:$0xff]
    %v3011 = vld [vmem:[#allocation10 + $0x328] sm:$0xff]
    %v3012 = vld [vmem:[#allocation10 + $0x330] sm:$0xff]
    %v3013 = vld [vmem:[#allocation10 + $0x338] sm:$0xff]
    %v3014 = vld [vmem:[#allocation10 + $0x340] sm:$0xff]
    %v3015 = vld [vmem:[#allocation10 + $0x348] sm:$0xff]
    %v3016 = vld [vmem:[#allocation10 + $0x350] sm:$0xff]
    %v3017 = vld [vmem:[#allocation10 + $0x358] sm:$0xff]
    %v3018 = vld [vmem:[#allocation10 + $0x360] sm:$0xff]
    %v3019 = vld [vmem:[#allocation10 + $0x368] sm:$0xff]
    %v3020 = vld [vmem:[#allocation10 + $0x370] sm:$0xff]
    %v3021 = vld [vmem:[#allocation10 + $0x378] sm:$0xff]
    %v3022 = vld [vmem:[#allocation10 + $0x380] sm:$0xff]
    %v3023 = vld [vmem:[#allocation10 + $0x388] sm:$0xff]
    %v3024 = vld [vmem:[#allocation10 + $0x390] sm:$0xff]
    %v3025 = vld [vmem:[#allocation10 + $0x398] sm:$0xff]
    %v3026 = vld [vmem:[#allocation10 + $0x3a0] sm:$0xff]
    %v3027 = vld [vmem:[#allocation10 + $0x3a8] sm:$0xff]
    %v3028 = vld [vmem:[#allocation10 + $0x3b0] sm:$0xff]
    %v3029 = vld [vmem:[#allocation10 + $0x3b8] sm:$0xff]
    %v3030 = vld [vmem:[#allocation10 + $0x3c0] sm:$0xff]
    %v3031 = vld [vmem:[#allocation10 + $0x3c8] sm:$0xff]
    %v3032 = vld [vmem:[#allocation10 + $0x3d0] sm:$0xff]
    %v3033 = vld [vmem:[#allocation10 + $0x3d8] sm:$0xff]
    %v3034 = vld [vmem:[#allocation10 + $0x3e0] sm:$0xff]
    %v3035 = vld [vmem:[#allocation10 + $0x3e8] sm:$0xff]
    %v3036 = vld [vmem:[#allocation10 + $0x3f0] sm:$0xff]
    %v3037 = vld [vmem:[#allocation10 + $0x3f8] sm:$0xff]
    %v3038 = vld [vmem:[#allocation10 + $0x400] sm:$0xff]
    %v3039 = vld [vmem:[#allocation10 + $0x408] sm:$0xff]
    %v3040 = vld [vmem:[#allocation10 + $0x410] sm:$0xff]
    %v3041 = vld [vmem:[#allocation10 + $0x418] sm:$0xff]
    %v3042 = vld [vmem:[#allocation10 + $0x420] sm:$0xff]
    %v3043 = vld [vmem:[#allocation10 + $0x428] sm:$0xff]
    %v3044 = vld [vmem:[#allocation10 + $0x430] sm:$0xff]
    %v3045 = vld [vmem:[#allocation10 + $0x438] sm:$0xff]
    %v3046 = vld [vmem:[#allocation10 + $0x440] sm:$0xff]
    %v3047 = vld [vmem:[#allocation10 + $0x448] sm:$0xff]
    %v3048 = vld [vmem:[#allocation10 + $0x450] sm:$0xff]
    %v3049 = vld [vmem:[#allocation10 + $0x458] sm:$0xff]
    %v3050 = vld [vmem:[#allocation10 + $0x460] sm:$0xff]
    %v3051 = vld [vmem:[#allocation10 + $0x468] sm:$0xff]
    %v3052 = vld [vmem:[#allocation10 + $0x470] sm:$0xff]
    %v3053 = vld [vmem:[#allocation10 + $0x478] sm:$0xff]
    %v3054 = vld [vmem:[#allocation10 + $0x480] sm:$0xff]
    %v3055 = vld [vmem:[#allocation10 + $0x488] sm:$0xff]
    %v3056 = vld [vmem:[#allocation10 + $0x490] sm:$0xff]
    %v3057 = vld [vmem:[#allocation10 + $0x498] sm:$0xff]
    %v3058 = vld [vmem:[#allocation10 + $0x4a0] sm:$0xff]
    %v3059 = vld [vmem:[#allocation10 + $0x4a8] sm:$0xff]
    %v3060 = vld [vmem:[#allocation10 + $0x4b0] sm:$0xff]
    %v3061 = vld [vmem:[#allocation10 + $0x4b8] sm:$0xff]
    %v3062 = vld [vmem:[#allocation10 + $0x4c0] sm:$0xff]
    %v3063 = vld [vmem:[#allocation10 + $0x4c8] sm:$0xff]
    %v3064 = vld [vmem:[#allocation10 + $0x4d0] sm:$0xff]
    %v3065 = vld [vmem:[#allocation10 + $0x4d8] sm:$0xff]
    %v3066 = vld [vmem:[#allocation10 + $0x4e0] sm:$0xff]
    %v3067 = vld [vmem:[#allocation10 + $0x4e8] sm:$0xff]
    %v3068 = vld [vmem:[#allocation10 + $0x4f0] sm:$0xff]
    %v3069 = vld [vmem:[#allocation10 + $0x4f8] sm:$0xff]
    %v3070 = vld [vmem:[#allocation10 + $0x500] sm:$0xff]
    %v3071 = vld [vmem:[#allocation10 + $0x508] sm:$0xff]
    %v3072 = vld [vmem:[#allocation10 + $0x510] sm:$0xff]
    %v3073 = vld [vmem:[#allocation10 + $0x518] sm:$0xff]
    %v3074 = vld [vmem:[#allocation10 + $0x520] sm:$0xff]
    %v3075 = vld [vmem:[#allocation10 + $0x528] sm:$0xff]
    %v3076 = vld [vmem:[#allocation10 + $0x530] sm:$0xff]
    %v3077 = vld [vmem:[#allocation10 + $0x538] sm:$0xff]
    %v3078 = vld [vmem:[#allocation10 + $0x540] sm:$0xff]
    %v3079 = vld [vmem:[#allocation10 + $0x548] sm:$0xff]
    %v3080 = vld [vmem:[#allocation10 + $0x550] sm:$0xff]
    %v3081 = vld [vmem:[#allocation10 + $0x558] sm:$0xff]
    %v3082 = vld [vmem:[#allocation10 + $0x560] sm:$0xff]
    %v3083 = vld [vmem:[#allocation10 + $0x568] sm:$0xff]
    %v3084 = vld [vmem:[#allocation10 + $0x570] sm:$0xff]
    %v3085 = vld [vmem:[#allocation10 + $0x578] sm:$0xff]
    %v3086 = vld [vmem:[#allocation10 + $0x580] sm:$0xff]
    %v3087 = vld [vmem:[#allocation10 + $0x588] sm:$0xff]
    %v3088 = vld [vmem:[#allocation10 + $0x590] sm:$0xff]
    %v3089 = vld [vmem:[#allocation10 + $0x598] sm:$0xff]
    %v3090 = vld [vmem:[#allocation10 + $0x5a0] sm:$0xff]
    %v3091 = vld [vmem:[#allocation10 + $0x5a8] sm:$0xff]
    %v3092 = vld [vmem:[#allocation10 + $0x5b0] sm:$0xff]
    %v3093 = vld [vmem:[#allocation10 + $0x5b8] sm:$0xff]
    %v3094 = vld [vmem:[#allocation10 + $0x5c0] sm:$0xff]
    %v3095 = vld [vmem:[#allocation10 + $0x5c8] sm:$0xff]
    %v3096 = vld [vmem:[#allocation10 + $0x5d0] sm:$0xff]
    %v3097 = vld [vmem:[#allocation10 + $0x5d8] sm:$0xff]
    %v3098 = vld [vmem:[#allocation10 + $0x5e0] sm:$0xff]
    %v3099 = vld [vmem:[#allocation10 + $0x5e8] sm:$0xff]
    %v3100 = vld [vmem:[#allocation10 + $0x5f0] sm:$0xff]
    %v3101 = vld [vmem:[#allocation10 + $0x5f8] sm:$0xff]
    %v3102 = vld [vmem:[#allocation10 + $0x600] sm:$0xff]
    %v3103 = vld [vmem:[#allocation10 + $0x608] sm:$0xff]
    %v3104 = vld [vmem:[#allocation10 + $0x610] sm:$0xff]
    %v3105 = vld [vmem:[#allocation10 + $0x618] sm:$0xff]
    %v3106 = vld [vmem:[#allocation10 + $0x620] sm:$0xff]
    %v3107 = vld [vmem:[#allocation10 + $0x628] sm:$0xff]
    %v3108 = vld [vmem:[#allocation10 + $0x630] sm:$0xff]
    %v3109 = vld [vmem:[#allocation10 + $0x638] sm:$0xff]
    %v3110 = vld [vmem:[#allocation10 + $0x640] sm:$0xff]
    %v3111 = vld [vmem:[#allocation10 + $0x648] sm:$0xff]
    %v3112 = vld [vmem:[#allocation10 + $0x650] sm:$0xff]
    %v3113 = vld [vmem:[#allocation10 + $0x658] sm:$0xff]
    %v3114 = vld [vmem:[#allocation10 + $0x660] sm:$0xff]
    %v3115 = vld [vmem:[#allocation10 + $0x668] sm:$0xff]
    %v3116 = vld [vmem:[#allocation10 + $0x670] sm:$0xff]
    %v3117 = vld [vmem:[#allocation10 + $0x678] sm:$0xff]
    %v3118 = vld [vmem:[#allocation10 + $0x680] sm:$0xff]
    %v3119 = vld [vmem:[#allocation10 + $0x688] sm:$0xff]
    %v3120 = vld [vmem:[#allocation10 + $0x690] sm:$0xff]
    %v3121 = vld [vmem:[#allocation10 + $0x698] sm:$0xff]
    %v3122 = vld [vmem:[#allocation10 + $0x6a0] sm:$0xff]
    %v3123 = vld [vmem:[#allocation10 + $0x6a8] sm:$0xff]
    %v3124 = vld [vmem:[#allocation10 + $0x6b0] sm:$0xff]
    %v3125 = vld [vmem:[#allocation10 + $0x6b8] sm:$0xff]
    %v3126 = vld [vmem:[#allocation10 + $0x6c0] sm:$0xff]
    %v3127 = vld [vmem:[#allocation10 + $0x6c8] sm:$0xff]
    %v3128 = vld [vmem:[#allocation10 + $0x6d0] sm:$0xff]
    %v3129 = vld [vmem:[#allocation10 + $0x6d8] sm:$0xff]
    %v3130 = vld [vmem:[#allocation10 + $0x6e0] sm:$0xff]
    %v3131 = vld [vmem:[#allocation10 + $0x6e8] sm:$0xff]
    %v3132 = vld [vmem:[#allocation10 + $0x6f0] sm:$0xff]
    %v3133 = vld [vmem:[#allocation10 + $0x6f8] sm:$0xff]
    %v3134 = vld [vmem:[#allocation10 + $0x700] sm:$0xff]
    %v3135 = vld [vmem:[#allocation10 + $0x708] sm:$0xff]
    %v3136 = vld [vmem:[#allocation10 + $0x710] sm:$0xff]
    %v3137 = vld [vmem:[#allocation10 + $0x718] sm:$0xff]
    %v3138 = vld [vmem:[#allocation10 + $0x720] sm:$0xff]
    %v3139 = vld [vmem:[#allocation10 + $0x728] sm:$0xff]
    %v3140 = vld [vmem:[#allocation10 + $0x730] sm:$0xff]
    %v3141 = vld [vmem:[#allocation10 + $0x738] sm:$0xff]
    %v3142 = vld [vmem:[#allocation10 + $0x740] sm:$0xff]
    %v3143 = vld [vmem:[#allocation10 + $0x748] sm:$0xff]
    %v3144 = vld [vmem:[#allocation10 + $0x750] sm:$0xff]
    %v3145 = vld [vmem:[#allocation10 + $0x758] sm:$0xff]
    %v3146 = vld [vmem:[#allocation10 + $0x760] sm:$0xff]
    %v3147 = vld [vmem:[#allocation10 + $0x768] sm:$0xff]
    %v3148 = vld [vmem:[#allocation10 + $0x770] sm:$0xff]
    %v3149 = vld [vmem:[#allocation10 + $0x778] sm:$0xff]
    %v3150 = vld [vmem:[#allocation10 + $0x780] sm:$0xff]
    %v3151 = vld [vmem:[#allocation10 + $0x788] sm:$0xff]
    %v3152 = vld [vmem:[#allocation10 + $0x790] sm:$0xff]
    %v3153 = vld [vmem:[#allocation10 + $0x798] sm:$0xff]
    %v3154 = vld [vmem:[#allocation10 + $0x7a0] sm:$0xff]
    %v3155 = vld [vmem:[#allocation10 + $0x7a8] sm:$0xff]
    %v3156 = vld [vmem:[#allocation10 + $0x7b0] sm:$0xff]
    %v3157 = vld [vmem:[#allocation10 + $0x7b8] sm:$0xff]
    %v3158 = vld [vmem:[#allocation10 + $0x7c0] sm:$0xff]
    %v3159 = vld [vmem:[#allocation10 + $0x7c8] sm:$0xff]
    %v3160 = vld [vmem:[#allocation10 + $0x7d0] sm:$0xff]
    %v3161 = vld [vmem:[#allocation10 + $0x7d8] sm:$0xff]
    %v3162 = vld [vmem:[#allocation10 + $0x7e0] sm:$0xff]
    %v3163 = vld [vmem:[#allocation10 + $0x7e8] sm:$0xff]
    %v3164 = vld [vmem:[#allocation10 + $0x7f0] sm:$0xff]
    %v3165 = vld [vmem:[#allocation10 + $0x7f8] sm:$0xff]
    %v3166 = vld [vmem:[#allocation10 + $0x800] sm:$0xff]
    %v3167 = vld [vmem:[#allocation10 + $0x808] sm:$0xff]
    %v3168 = vld [vmem:[#allocation10 + $0x810] sm:$0xff]
    %v3169 = vld [vmem:[#allocation10 + $0x818] sm:$0xff]
    %v3170 = vld [vmem:[#allocation10 + $0x820] sm:$0xff]
    %v3171 = vld [vmem:[#allocation10 + $0x828] sm:$0xff]
    %v3172 = vld [vmem:[#allocation10 + $0x830] sm:$0xff]
    %v3173 = vld [vmem:[#allocation10 + $0x838] sm:$0xff]
    %v3174 = vld [vmem:[#allocation10 + $0x840] sm:$0xff]
    %v3175 = vld [vmem:[#allocation10 + $0x848] sm:$0xff]
    %v3176 = vld [vmem:[#allocation10 + $0x850] sm:$0xff]
    %v3177 = vld [vmem:[#allocation10 + $0x858] sm:$0xff]
    %v3178 = vld [vmem:[#allocation10 + $0x860] sm:$0xff]
    %v3179 = vld [vmem:[#allocation10 + $0x868] sm:$0xff]
    %v3180 = vld [vmem:[#allocation10 + $0x870] sm:$0xff]
    %v3181 = vld [vmem:[#allocation10 + $0x878] sm:$0xff]
    %v3182 = vld [vmem:[#allocation10 + $0x880] sm:$0xff]
    %v3183 = vld [vmem:[#allocation10 + $0x888] sm:$0xff]
    %v3184 = vld [vmem:[#allocation10 + $0x890] sm:$0xff]
    %v3185 = vld [vmem:[#allocation10 + $0x898] sm:$0xff]
    %v3186 = vld [vmem:[#allocation10 + $0x8a0] sm:$0xff]
    %v3187 = vld [vmem:[#allocation10 + $0x8a8] sm:$0xff]
    %v3188 = vld [vmem:[#allocation10 + $0x8b0] sm:$0xff]
    %v3189 = vld [vmem:[#allocation10 + $0x8b8] sm:$0xff]
    %v3190 = vld [vmem:[#allocation10 + $0x8c0] sm:$0xff]
    %v3191 = vld [vmem:[#allocation10 + $0x8c8] sm:$0xff]
    %v3192 = vld [vmem:[#allocation10 + $0x8d0] sm:$0xff]
    %v3193 = vld [vmem:[#allocation10 + $0x8d8] sm:$0xff]
    %v3194 = vld [vmem:[#allocation10 + $0x8e0] sm:$0xff]
    %v3195 = vld [vmem:[#allocation10 + $0x8e8] sm:$0xff]
    %v3196 = vld [vmem:[#allocation10 + $0x8f0] sm:$0xff]
    %v3197 = vld [vmem:[#allocation10 + $0x8f8] sm:$0xff]
    %v3198 = vld [vmem:[#allocation10 + $0x900] sm:$0xff]
    %v3199 = vld [vmem:[#allocation10 + $0x908] sm:$0xff]
    %v3200 = vld [vmem:[#allocation10 + $0x910] sm:$0xff]
    %v3201 = vld [vmem:[#allocation10 + $0x918] sm:$0xff]
    %v3202 = vld [vmem:[#allocation10 + $0x920] sm:$0xff]
    %v3203 = vld [vmem:[#allocation10 + $0x928] sm:$0xff]
    %v3204 = vld [vmem:[#allocation10 + $0x930] sm:$0xff]
    %v3205 = vld [vmem:[#allocation10 + $0x938] sm:$0xff]
    %v3206 = vld [vmem:[#allocation10 + $0x940] sm:$0xff]
    %v3207 = vld [vmem:[#allocation10 + $0x948] sm:$0xff]
    %v3208 = vld [vmem:[#allocation10 + $0x950] sm:$0xff]
    %v3209 = vld [vmem:[#allocation10 + $0x958] sm:$0xff]
    %v3210 = vld [vmem:[#allocation10 + $0x960] sm:$0xff]
    %v3211 = vld [vmem:[#allocation10 + $0x968] sm:$0xff]
    %v3212 = vld [vmem:[#allocation10 + $0x970] sm:$0xff]
    %v3213 = vld [vmem:[#allocation10 + $0x978] sm:$0xff]
    %v3214 = vld [vmem:[#allocation10 + $0x980] sm:$0xff]
    %v3215 = vld [vmem:[#allocation10 + $0x988] sm:$0xff]
    %v3216 = vld [vmem:[#allocation10 + $0x990] sm:$0xff]
    %v3217 = vld [vmem:[#allocation10 + $0x998] sm:$0xff]
    %v3218 = vld [vmem:[#allocation10 + $0x9a0] sm:$0xff]
    %v3219 = vld [vmem:[#allocation10 + $0x9a8] sm:$0xff]
    %v3220 = vld [vmem:[#allocation10 + $0x9b0] sm:$0xff]
    %v3221 = vld [vmem:[#allocation10 + $0x9b8] sm:$0xff]
    %v3222 = vld [vmem:[#allocation10 + $0x9c0] sm:$0xff]
    %v3223 = vld [vmem:[#allocation10 + $0x9c8] sm:$0xff]
    %v3224 = vld [vmem:[#allocation10 + $0x9d0] sm:$0xff]
    %v3225 = vld [vmem:[#allocation10 + $0x9d8] sm:$0xff]
    %v3226 = vld [vmem:[#allocation10 + $0x9e0] sm:$0xff]
    %v3227 = vld [vmem:[#allocation10 + $0x9e8] sm:$0xff]
    %v3228 = vld [vmem:[#allocation10 + $0x9f0] sm:$0xff]
    %v3229 = vld [vmem:[#allocation10 + $0x9f8] sm:$0xff]
    %v3230 = vld [vmem:[#allocation10 + $0xa00] sm:$0xff]
    %v3231 = vld [vmem:[#allocation10 + $0xa08] sm:$0xff]
    %v3232 = vld [vmem:[#allocation10 + $0xa10] sm:$0xff]
    %v3233 = vld [vmem:[#allocation10 + $0xa18] sm:$0xff]
    %v3234 = vld [vmem:[#allocation10 + $0xa20] sm:$0xff]
    %v3235 = vld [vmem:[#allocation10 + $0xa28] sm:$0xff]
    %v3236 = vld [vmem:[#allocation10 + $0xa30] sm:$0xff]
    %v3237 = vld [vmem:[#allocation10 + $0xa38] sm:$0xff]
    %v3238 = vld [vmem:[#allocation10 + $0xa40] sm:$0xff]
    %v3239 = vld [vmem:[#allocation10 + $0xa48] sm:$0xff]
    %v3240 = vld [vmem:[#allocation10 + $0xa50] sm:$0xff]
    %v3241 = vld [vmem:[#allocation10 + $0xa58] sm:$0xff]
    %v3242 = vld [vmem:[#allocation10 + $0xa60] sm:$0xff]
    %v3243 = vld [vmem:[#allocation10 + $0xa68] sm:$0xff]
    %v3244 = vld [vmem:[#allocation10 + $0xa70] sm:$0xff]
    %v3245 = vld [vmem:[#allocation10 + $0xa78] sm:$0xff]
    %v3246 = vld [vmem:[#allocation10 + $0xa80] sm:$0xff]
    %v3247 = vld [vmem:[#allocation10 + $0xa88] sm:$0xff]
    %v3248 = vld [vmem:[#allocation10 + $0xa90] sm:$0xff]
    %v3249 = vld [vmem:[#allocation10 + $0xa98] sm:$0xff]
    %v3250 = vld [vmem:[#allocation10 + $0xaa0] sm:$0xff]
    %v3251 = vld [vmem:[#allocation10 + $0xaa8] sm:$0xff]
    %v3252 = vld [vmem:[#allocation10 + $0xab0] sm:$0xff]
    %v3253 = vld [vmem:[#allocation10 + $0xab8] sm:$0xff]
    %v3254 = vld [vmem:[#allocation10 + $0xac0] sm:$0xff]
    %v3255 = vld [vmem:[#allocation10 + $0xac8] sm:$0xff]
    %v3256 = vld [vmem:[#allocation10 + $0xad0] sm:$0xff]
    %v3257 = vld [vmem:[#allocation10 + $0xad8] sm:$0xff]
    %v3258 = vld [vmem:[#allocation10 + $0xae0] sm:$0xff]
    %v3259 = vld [vmem:[#allocation10 + $0xae8] sm:$0xff]
    %v3260 = vld [vmem:[#allocation10 + $0xaf0] sm:$0xff]
    %v3261 = vld [vmem:[#allocation10 + $0xaf8] sm:$0xff]
    %v3262 = vld [vmem:[#allocation10 + $0xb00] sm:$0xff]
    %v3263 = vld [vmem:[#allocation10 + $0xb08] sm:$0xff]
    %v3264 = vld [vmem:[#allocation10 + $0xb10] sm:$0xff]
    %v3265 = vld [vmem:[#allocation10 + $0xb18] sm:$0xff]
    %v3266 = vld [vmem:[#allocation10 + $0xb20] sm:$0xff]
    %v3267 = vld [vmem:[#allocation10 + $0xb28] sm:$0xff]
    %v3268 = vld [vmem:[#allocation10 + $0xb30] sm:$0xff]
    %v3269 = vld [vmem:[#allocation10 + $0xb38] sm:$0xff]
    %v3270 = vld [vmem:[#allocation10 + $0xb40] sm:$0xff]
    %v3271 = vld [vmem:[#allocation10 + $0xb48] sm:$0xff]
    %v3272 = vld [vmem:[#allocation10 + $0xb50] sm:$0xff]
    %v3273 = vld [vmem:[#allocation10 + $0xb58] sm:$0xff]
    %v3274 = vld [vmem:[#allocation10 + $0xb60] sm:$0xff]
    %v3275 = vld [vmem:[#allocation10 + $0xb68] sm:$0xff]
    %v3276 = vld [vmem:[#allocation10 + $0xb70] sm:$0xff]
    %v3277 = vld [vmem:[#allocation10 + $0xb78] sm:$0xff]
    %v3278 = vld [vmem:[#allocation10 + $0xb80] sm:$0xff]
    %v3279 = vld [vmem:[#allocation10 + $0xb88] sm:$0xff]
    %v3280 = vld [vmem:[#allocation10 + $0xb90] sm:$0xff]
    %v3281 = vld [vmem:[#allocation10 + $0xb98] sm:$0xff]
    %v3282 = vld [vmem:[#allocation10 + $0xba0] sm:$0xff]
    %v3283 = vld [vmem:[#allocation10 + $0xba8] sm:$0xff]
    %v3284 = vld [vmem:[#allocation10 + $0xbb0] sm:$0xff]
    %v3285 = vld [vmem:[#allocation10 + $0xbb8] sm:$0xff]
    %v3286 = vld [vmem:[#allocation10 + $0xbc0] sm:$0xff]
    %v3287 = vld [vmem:[#allocation10 + $0xbc8] sm:$0xff]
    %v3288 = vld [vmem:[#allocation10 + $0xbd0] sm:$0xff]
    %v3289 = vld [vmem:[#allocation10 + $0xbd8] sm:$0xff]
    %v3290 = vld [vmem:[#allocation10 + $0xbe0] sm:$0xff]
    %v3291 = vld [vmem:[#allocation10 + $0xbe8] sm:$0xff]
    %v3292 = vld [vmem:[#allocation10 + $0xbf0] sm:$0xff]
    %v3293 = vld [vmem:[#allocation10 + $0xbf8] sm:$0xff]
    %v3294 = vld [vmem:[#allocation10 + $0xc00] sm:$0xff]
    %v3295 = vld [vmem:[#allocation10 + $0xc08] sm:$0xff]
    %v3296 = vld [vmem:[#allocation10 + $0xc10] sm:$0xff]
    %v3297 = vld [vmem:[#allocation10 + $0xc18] sm:$0xff]
    %v3298 = vld [vmem:[#allocation10 + $0xc20] sm:$0xff]
    %v3299 = vld [vmem:[#allocation10 + $0xc28] sm:$0xff]
    %v3300 = vld [vmem:[#allocation10 + $0xc30] sm:$0xff]
    %v3301 = vld [vmem:[#allocation10 + $0xc38] sm:$0xff]
    %v3302 = vld [vmem:[#allocation10 + $0xc40] sm:$0xff]
    %v3303 = vld [vmem:[#allocation10 + $0xc48] sm:$0xff]
    %v3304 = vld [vmem:[#allocation10 + $0xc50] sm:$0xff]
    %v3305 = vld [vmem:[#allocation10 + $0xc58] sm:$0xff]
    %v3306 = vld [vmem:[#allocation10 + $0xc60] sm:$0xff]
    %v3307 = vld [vmem:[#allocation10 + $0xc68] sm:$0xff]
    %v3308 = vld [vmem:[#allocation10 + $0xc70] sm:$0xff]
    %v3309 = vld [vmem:[#allocation10 + $0xc78] sm:$0xff]
    %v3310 = vld [vmem:[#allocation10 + $0xc80] sm:$0xff]
    %v3311 = vld [vmem:[#allocation10 + $0xc88] sm:$0xff]
    %v3312 = vld [vmem:[#allocation10 + $0xc90] sm:$0xff]
    %v3313 = vld [vmem:[#allocation10 + $0xc98] sm:$0xff]
    %v3314 = vld [vmem:[#allocation10 + $0xca0] sm:$0xff]
    %v3315 = vld [vmem:[#allocation10 + $0xca8] sm:$0xff]
    %v3316 = vld [vmem:[#allocation10 + $0xcb0] sm:$0xff]
    %v3317 = vld [vmem:[#allocation10 + $0xcb8] sm:$0xff]
    %v3318 = vld [vmem:[#allocation10 + $0xcc0] sm:$0xff]
    %v3319 = vld [vmem:[#allocation10 + $0xcc8] sm:$0xff]
    %v3320 = vld [vmem:[#allocation10 + $0xcd0] sm:$0xff]
    %v3321 = vld [vmem:[#allocation10 + $0xcd8] sm:$0xff]
    %v3322 = vld [vmem:[#allocation10 + $0xce0] sm:$0xff]
    %v3323 = vld [vmem:[#allocation10 + $0xce8] sm:$0xff]
    %v3324 = vld [vmem:[#allocation10 + $0xcf0] sm:$0xff]
    %v3325 = vld [vmem:[#allocation10 + $0xcf8] sm:$0xff]
    %v3326 = vld [vmem:[#allocation10 + $0xd00] sm:$0xff]
    %v3327 = vld [vmem:[#allocation10 + $0xd08] sm:$0xff]
    %v3328 = vld [vmem:[#allocation10 + $0xd10] sm:$0xff]
    %v3329 = vld [vmem:[#allocation10 + $0xd18] sm:$0xff]
    %v3330 = vld [vmem:[#allocation10 + $0xd20] sm:$0xff]
    %v3331 = vld [vmem:[#allocation10 + $0xd28] sm:$0xff]
    %v3332 = vld [vmem:[#allocation10 + $0xd30] sm:$0xff]
    %v3333 = vld [vmem:[#allocation10 + $0xd38] sm:$0xff]
    %v3334 = vld [vmem:[#allocation10 + $0xd40] sm:$0xff]
    %v3335 = vld [vmem:[#allocation10 + $0xd48] sm:$0xff]
    %v3336 = vld [vmem:[#allocation10 + $0xd50] sm:$0xff]
    %v3337 = vld [vmem:[#allocation10 + $0xd58] sm:$0xff]
    %v3338 = vld [vmem:[#allocation10 + $0xd60] sm:$0xff]
    %v3339 = vld [vmem:[#allocation10 + $0xd68] sm:$0xff]
    %v3340 = vld [vmem:[#allocation10 + $0xd70] sm:$0xff]
    %v3341 = vld [vmem:[#allocation10 + $0xd78] sm:$0xff]
    %v3342 = vld [vmem:[#allocation10 + $0xd80] sm:$0xff]
    %v3343 = vld [vmem:[#allocation10 + $0xd88] sm:$0xff]
    %v3344 = vld [vmem:[#allocation10 + $0xd90] sm:$0xff]
    %v3345 = vld [vmem:[#allocation10 + $0xd98] sm:$0xff]
    %v3346 = vld [vmem:[#allocation10 + $0xda0] sm:$0xff]
    %v3347 = vld [vmem:[#allocation10 + $0xda8] sm:$0xff]
    %v3348 = vld [vmem:[#allocation10 + $0xdb0] sm:$0xff]
    %v3349 = vld [vmem:[#allocation10 + $0xdb8] sm:$0xff]
    %v3350 = vld [vmem:[#allocation10 + $0xdc0] sm:$0xff]
    %v3351 = vld [vmem:[#allocation10 + $0xdc8] sm:$0xff]
    %v3352 = vld [vmem:[#allocation10 + $0xdd0] sm:$0xff]
    %v3353 = vld [vmem:[#allocation10 + $0xdd8] sm:$0xff]
    %v3354 = vld [vmem:[#allocation10 + $0xde0] sm:$0xff]
    %v3355 = vld [vmem:[#allocation10 + $0xde8] sm:$0xff]
    %v3356 = vld [vmem:[#allocation10 + $0xdf0] sm:$0xff]
    %v3357 = vld [vmem:[#allocation10 + $0xdf8] sm:$0xff]
    %v3358 = vld [vmem:[#allocation10 + $0xe00] sm:$0xff]
    %v3359 = vld [vmem:[#allocation10 + $0xe08] sm:$0xff]
    %v3360 = vld [vmem:[#allocation10 + $0xe10] sm:$0xff]
    %v3361 = vld [vmem:[#allocation10 + $0xe18] sm:$0xff]
    %v3362 = vld [vmem:[#allocation10 + $0xe20] sm:$0xff]
    %v3363 = vld [vmem:[#allocation10 + $0xe28] sm:$0xff]
    %v3364 = vld [vmem:[#allocation10 + $0xe30] sm:$0xff]
    %v3365 = vld [vmem:[#allocation10 + $0xe38] sm:$0xff]
    %v3366 = vld [vmem:[#allocation10 + $0xe40] sm:$0xff]
    %v3367 = vld [vmem:[#allocation10 + $0xe48] sm:$0xff]
    %v3368 = vld [vmem:[#allocation10 + $0xe50] sm:$0xff]
    %v3369 = vld [vmem:[#allocation10 + $0xe58] sm:$0xff]
    %v3370 = vld [vmem:[#allocation10 + $0xe60] sm:$0xff]
    %v3371 = vld [vmem:[#allocation10 + $0xe68] sm:$0xff]
    %v3372 = vld [vmem:[#allocation10 + $0xe70] sm:$0xff]
    %v3373 = vld [vmem:[#allocation10 + $0xe78] sm:$0xff]
    %v3374 = vld [vmem:[#allocation10 + $0xe80] sm:$0xff]
    %v3375 = vld [vmem:[#allocation10 + $0xe88] sm:$0xff]
    %v3376 = vld [vmem:[#allocation10 + $0xe90] sm:$0xff]
    %v3377 = vld [vmem:[#allocation10 + $0xe98] sm:$0xff]
    %v3378 = vld [vmem:[#allocation10 + $0xea0] sm:$0xff]
    %v3379 = vld [vmem:[#allocation10 + $0xea8] sm:$0xff]
    %v3380 = vld [vmem:[#allocation10 + $0xeb0] sm:$0xff]
    %v3381 = vld [vmem:[#allocation10 + $0xeb8] sm:$0xff]
    %v3382 = vld [vmem:[#allocation10 + $0xec0] sm:$0xff]
    %v3383 = vld [vmem:[#allocation10 + $0xec8] sm:$0xff]
    %v3384 = vld [vmem:[#allocation10 + $0xed0] sm:$0xff]
    %v3385 = vld [vmem:[#allocation10 + $0xed8] sm:$0xff]
    %v3386 = vld [vmem:[#allocation10 + $0xee0] sm:$0xff]
    %v3387 = vld [vmem:[#allocation10 + $0xee8] sm:$0xff]
    %v3388 = vld [vmem:[#allocation10 + $0xef0] sm:$0xff]
    %v3389 = vld [vmem:[#allocation10 + $0xef8] sm:$0xff]
    %v3390 = vld [vmem:[#allocation10 + $0xf00] sm:$0xff]
    %v3391 = vld [vmem:[#allocation10 + $0xf08] sm:$0xff]
    %v3392 = vld [vmem:[#allocation10 + $0xf10] sm:$0xff]
    %v3393 = vld [vmem:[#allocation10 + $0xf18] sm:$0xff]
    %v3394 = vld [vmem:[#allocation10 + $0xf20] sm:$0xff]
    %v3395 = vld [vmem:[#allocation10 + $0xf28] sm:$0xff]
    %v3396 = vld [vmem:[#allocation10 + $0xf30] sm:$0xff]
    %v3397 = vld [vmem:[#allocation10 + $0xf38] sm:$0xff]
    %v3398 = vld [vmem:[#allocation10 + $0xf40] sm:$0xff]
    %v3399 = vld [vmem:[#allocation10 + $0xf48] sm:$0xff]
    %v3400 = vld [vmem:[#allocation10 + $0xf50] sm:$0xff]
    %v3401 = vld [vmem:[#allocation10 + $0xf58] sm:$0xff]
    %v3402 = vld [vmem:[#allocation10 + $0xf60] sm:$0xff]
    %v3403 = vld [vmem:[#allocation10 + $0xf68] sm:$0xff]
    %v3404 = vld [vmem:[#allocation10 + $0xf70] sm:$0xff]
    %v3405 = vld [vmem:[#allocation10 + $0xf78] sm:$0xff]
    %v3406 = vld [vmem:[#allocation10 + $0xf80] sm:$0xff]
    %v3407 = vld [vmem:[#allocation10 + $0xf88] sm:$0xff]
    %v3408 = vld [vmem:[#allocation10 + $0xf90] sm:$0xff]
    %v3409 = vld [vmem:[#allocation10 + $0xf98] sm:$0xff]
    %v3410 = vld [vmem:[#allocation10 + $0xfa0] sm:$0xff]
    %v3411 = vld [vmem:[#allocation10 + $0xfa8] sm:$0xff]
    %v3412 = vld [vmem:[#allocation10 + $0xfb0] sm:$0xff]
    %v3413 = vld [vmem:[#allocation10 + $0xfb8] sm:$0xff]
    %v3414 = vld [vmem:[#allocation10 + $0xfc0] sm:$0xff]
    %v3415 = vld [vmem:[#allocation10 + $0xfc8] sm:$0xff]
    %v3416 = vld [vmem:[#allocation10 + $0xfd0] sm:$0xff]
    %v3417 = vld [vmem:[#allocation10 + $0xfd8] sm:$0xff]
    %v3418 = vld [vmem:[#allocation10 + $0xfe0] sm:$0xff]
    %v3419 = vld [vmem:[#allocation10 + $0xfe8] sm:$0xff]
    %v3420 = vld [vmem:[#allocation10 + $0xff0] sm:$0xff]
    %v3421 = vld [vmem:[#allocation10 + $0xff8] sm:$0xff]
    %v3422 = vld [vmem:[#allocation11] sm:$0xf]
    %v3424 = vlaneseq
    %v3425 = vshrl.u32 %v3424, 7
    %v3426 = vsub.s32 0, %v3425
    %v3427 = vrot.slane %v3422, %v3426
    %v3428 = vlaneseq
    %v3429 = vshrl.u32 %v3428, 7
    %v3430 = vsub.s32 1, %v3429
    %v3431 = vrot.slane %v3422, %v3430
    %v3432 = vlaneseq
    %v3433 = vshrl.u32 %v3432, 7
    %v3434 = vsub.s32 2, %v3433
    %v3435 = vrot.slane %v3422, %v3434
    %v3436 = vlaneseq
    %v3437 = vshrl.u32 %v3436, 7
    %v3438 = vsub.s32 3, %v3437
    %v3439 = vrot.slane %v3422, %v3438
    %3444 = vmatprep.subr.mxu0 %v2971
    %3445 = vmatpush1.msra.mxu0 %v2970
    %3446 = vmatprep.subr.mxu0 %v2967
    %3447 = vmatpush1.msra.mxu0 %v2966
    %3448 = vmatprep.subr.mxu0 %v2963
    %3449 = vmatpush1.msra.mxu0 %v2962
    %3450 = vmatprep.subr.mxu0 %v2959
    %3451 = vmatpush1.msra.mxu0 %v2958
    %3452 = vmatprep.subr.mxu0 %v2955
    %3453 = vmatpush1.msra.mxu0 %v2954
    %3454 = vmatprep.subr.mxu0 %v2951
    %3455 = vmatpush1.msra.mxu0 %v2950
    %3456 = vmatprep.subr.mxu0 %v2947
    %3457 = vmatpush1.msra.mxu0 %v2946
    %3458 = vmatprep.subr.mxu0 %v2943
    %3459 = vmatpush1.msra.mxu0 %v2942
    %3460 = vmatprep.subr.mxu0 %v2939
    %3461 = vmatpush1.msra.mxu0 %v2938
    %3462 = vmatprep.subr.mxu0 %v2935
    %3463 = vmatpush1.msra.mxu0 %v2934
    %3464 = vmatprep.subr.mxu0 %v2931
    %3465 = vmatpush1.msra.mxu0 %v2930
    %3466 = vmatprep.subr.mxu0 %v2927
    %3467 = vmatpush1.msra.mxu0 %v2926
    %3468 = vmatprep.subr.mxu0 %v2923
    %3469 = vmatpush1.msra.mxu0 %v2922
    %3470 = vmatprep.subr.mxu0 %v2919
    %3471 = vmatpush1.msra.mxu0 %v2918
    %3472 = vmatprep.subr.mxu0 %v2915
    %3473 = vmatpush1.msra.mxu0 %v2914
    %3474 = vmatprep.subr.mxu0 %v2911
    %3475 = vmatpush1.msra.mxu0 %v2910
    %3476 = vmatprep.subr.mxu0 %v3035
    %3477 = vmatpush2.msra.mxu0 %v3034
    %3478 = vmatprep.subr.mxu0 %v3031
    %3479 = vmatpush2.msra.mxu0 %v3030
    %3480 = vmatprep.subr.mxu0 %v3027
    %3481 = vmatpush2.msra.mxu0 %v3026
    %3482 = vmatprep.subr.mxu0 %v3023
    %3483 = vmatpush2.msra.mxu0 %v3022
    %3484 = vmatprep.subr.mxu0 %v3019
    %3485 = vmatpush2.msra.mxu0 %v3018
    %3486 = vmatprep.subr.mxu0 %v3015
    %3487 = vmatpush2.msra.mxu0 %v3014
    %3488 = vmatprep.subr.mxu0 %v3011
    %3489 = vmatpush2.msra.mxu0 %v3010
    %3490 = vmatprep.subr.mxu0 %v3007
    %3491 = vmatpush2.msra.mxu0 %v3006
    %3492 = vmatprep.subr.mxu0 %v3003
    %3493 = vmatpush2.msra.mxu0 %v3002
    %3494 = vmatprep.subr.mxu0 %v2999
    %3495 = vmatpush2.msra.mxu0 %v2998
    %3496 = vmatprep.subr.mxu0 %v2995
    %3497 = vmatpush2.msra.mxu0 %v2994
    %3498 = vmatprep.subr.mxu0 %v2991
    %3499 = vmatpush2.msra.mxu0 %v2990
    %3500 = vmatprep.subr.mxu0 %v2987
    %3501 = vmatpush2.msra.mxu0 %v2986
    %3502 = vmatprep.subr.mxu0 %v2983
    %3503 = vmatpush2.msra.mxu0 %v2982
    %3504 = vmatprep.subr.mxu0 %v2979
    %3505 = vmatpush2.msra.mxu0 %v2978
    %3506 = vmatprep.subr.mxu0 %v2975
    %3507 = vmatpush2.msra.mxu0 %v2974
    %3508 = vmatprep.mubr.f32.mxu0 %v2891
    %3509 = vmatmul.mubr.f32.gmra.mxu0 %v2890
    %v3510 = vpop.f32.mrf.mxu0
    %v3511 = vadd.f32 %v3427, %v3510
    %v3512 = vpop.f32.mrf.mxu0
    %v3513 = vadd.f32 %v3431, %v3512
    %3514 = vdwg.mxu0
    %3515 = vmatprep.subr.mxu0 %v3099
    %3516 = vmatpush1.msra.mxu0 %v3098
    %3517 = vmatprep.subr.mxu0 %v3095
    %3518 = vmatpush1.msra.mxu0 %v3094
    %3519 = vmatprep.subr.mxu0 %v3091
    %3520 = vmatpush1.msra.mxu0 %v3090
    %3521 = vmatprep.subr.mxu0 %v3087
    %3522 = vmatpush1.msra.mxu0 %v3086
    %3523 = vmatprep.subr.mxu0 %v3083
    %3524 = vmatpush1.msra.mxu0 %v3082
    %3525 = vmatprep.subr.mxu0 %v3079
    %3526 = vmatpush1.msra.mxu0 %v3078
    %3527 = vmatprep.subr.mxu0 %v3075
    %3528 = vmatpush1.msra.mxu0 %v3074
    %3529 = vmatprep.subr.mxu0 %v3071
    %3530 = vmatpush1.msra.mxu0 %v3070
    %3531 = vmatprep.subr.mxu0 %v3067
    %3532 = vmatpush1.msra.mxu0 %v3066
    %3533 = vmatprep.subr.mxu0 %v3063
    %3534 = vmatpush1.msra.mxu0 %v3062
    %3535 = vmatprep.subr.mxu0 %v3059
    %3536 = vmatpush1.msra.mxu0 %v3058
    %3537 = vmatprep.subr.mxu0 %v3055
    %3538 = vmatpush1.msra.mxu0 %v3054
    %3539 = vmatprep.subr.mxu0 %v3051
    %3540 = vmatpush1.msra.mxu0 %v3050
    %3541 = vmatprep.subr.mxu0 %v3047
    %3542 = vmatpush1.msra.mxu0 %v3046
    %3543 = vmatprep.subr.mxu0 %v3043
    %3544 = vmatpush1.msra.mxu0 %v3042
    %3545 = vmatprep.subr.mxu0 %v3039
    %3546 = vmatpush1.msra.mxu0 %v3038
    %3547 = vmatprep.subr.mxu0 %v3163
    %3548 = vmatpush2.msra.mxu0 %v3162
    %3549 = vmatprep.subr.mxu0 %v3159
    %3550 = vmatpush2.msra.mxu0 %v3158
    %3551 = vmatprep.subr.mxu0 %v3155
    %3552 = vmatpush2.msra.mxu0 %v3154
    %3553 = vmatprep.subr.mxu0 %v3151
    %3554 = vmatpush2.msra.mxu0 %v3150
    %3555 = vmatprep.subr.mxu0 %v3147
    %3556 = vmatpush2.msra.mxu0 %v3146
    %3557 = vmatprep.subr.mxu0 %v3143
    %3558 = vmatpush2.msra.mxu0 %v3142
    %3559 = vmatprep.subr.mxu0 %v3139
    %3560 = vmatpush2.msra.mxu0 %v3138
    %3561 = vmatprep.subr.mxu0 %v3135
    %3562 = vmatpush2.msra.mxu0 %v3134
    %3563 = vmatprep.subr.mxu0 %v3131
    %3564 = vmatpush2.msra.mxu0 %v3130
    %3565 = vmatprep.subr.mxu0 %v3127
    %3566 = vmatpush2.msra.mxu0 %v3126
    %3567 = vmatprep.subr.mxu0 %v3123
    %3568 = vmatpush2.msra.mxu0 %v3122
    %3569 = vmatprep.subr.mxu0 %v3119
    %3570 = vmatpush2.msra.mxu0 %v3118
    %3571 = vmatprep.subr.mxu0 %v3115
    %3572 = vmatpush2.msra.mxu0 %v3114
    %3573 = vmatprep.subr.mxu0 %v3111
    %3574 = vmatpush2.msra.mxu0 %v3110
    %3575 = vmatprep.subr.mxu0 %v3107
    %3576 = vmatpush2.msra.mxu0 %v3106
    %3577 = vmatprep.subr.mxu0 %v3103
    %3578 = vmatpush2.msra.mxu0 %v3102
    %3579 = vmatprep.mubr.f32.mxu0 %v2897
    %3580 = vmatmul.mubr.f32.gmra.mxu0 %v2896
    %v3581 = vpop.f32.mrf.mxu0
    %v3582 = vadd.f32 %v3511, %v3581
    %v3583 = vpop.f32.mrf.mxu0
    %v3584 = vadd.f32 %v3513, %v3583
    %3585 = vdwg.mxu0
    %3586 = vmatprep.subr.mxu0 %v3227
    %3587 = vmatpush1.msra.mxu0 %v3226
    %3588 = vmatprep.subr.mxu0 %v3223
    %3589 = vmatpush1.msra.mxu0 %v3222
    %3590 = vmatprep.subr.mxu0 %v3219
    %3591 = vmatpush1.msra.mxu0 %v3218
    %3592 = vmatprep.subr.mxu0 %v3215
    %3593 = vmatpush1.msra.mxu0 %v3214
    %3594 = vmatprep.subr.mxu0 %v3211
    %3595 = vmatpush1.msra.mxu0 %v3210
    %3596 = vmatprep.subr.mxu0 %v3207
    %3597 = vmatpush1.msra.mxu0 %v3206
    %3598 = vmatprep.subr.mxu0 %v3203
    %3599 = vmatpush1.msra.mxu0 %v3202
    %3600 = vmatprep.subr.mxu0 %v3199
    %3601 = vmatpush1.msra.mxu0 %v3198
    %3602 = vmatprep.subr.mxu0 %v3195
    %3603 = vmatpush1.msra.mxu0 %v3194
    %3604 = vmatprep.subr.mxu0 %v3191
    %3605 = vmatpush1.msra.mxu0 %v3190
    %3606 = vmatprep.subr.mxu0 %v3187
    %3607 = vmatpush1.msra.mxu0 %v3186
    %3608 = vmatprep.subr.mxu0 %v3183
    %3609 = vmatpush1.msra.mxu0 %v3182
    %3610 = vmatprep.subr.mxu0 %v3179
    %3611 = vmatpush1.msra.mxu0 %v3178
    %3612 = vmatprep.subr.mxu0 %v3175
    %3613 = vmatpush1.msra.mxu0 %v3174
    %3614 = vmatprep.subr.mxu0 %v3171
    %3615 = vmatpush1.msra.mxu0 %v3170
    %3616 = vmatprep.subr.mxu0 %v3167
    %3617 = vmatpush1.msra.mxu0 %v3166
    %3618 = vmatprep.subr.mxu0 %v3291
    %3619 = vmatpush2.msra.mxu0 %v3290
    %3620 = vmatprep.subr.mxu0 %v3287
    %3621 = vmatpush2.msra.mxu0 %v3286
    %3622 = vmatprep.subr.mxu0 %v3283
    %3623 = vmatpush2.msra.mxu0 %v3282
    %3624 = vmatprep.subr.mxu0 %v3279
    %3625 = vmatpush2.msra.mxu0 %v3278
    %3626 = vmatprep.subr.mxu0 %v3275
    %3627 = vmatpush2.msra.mxu0 %v3274
    %3628 = vmatprep.subr.mxu0 %v3271
    %3629 = vmatpush2.msra.mxu0 %v3270
    %3630 = vmatprep.subr.mxu0 %v3267
    %3631 = vmatpush2.msra.mxu0 %v3266
    %3632 = vmatprep.subr.mxu0 %v3263
    %3633 = vmatpush2.msra.mxu0 %v3262
    %3634 = vmatprep.subr.mxu0 %v3259
    %3635 = vmatpush2.msra.mxu0 %v3258
    %3636 = vmatprep.subr.mxu0 %v3255
    %3637 = vmatpush2.msra.mxu0 %v3254
    %3638 = vmatprep.subr.mxu0 %v3251
    %3639 = vmatpush2.msra.mxu0 %v3250
    %3640 = vmatprep.subr.mxu0 %v3247
    %3641 = vmatpush2.msra.mxu0 %v3246
    %3642 = vmatprep.subr.mxu0 %v3243
    %3643 = vmatpush2.msra.mxu0 %v3242
    %3644 = vmatprep.subr.mxu0 %v3239
    %3645 = vmatpush2.msra.mxu0 %v3238
    %3646 = vmatprep.subr.mxu0 %v3235
    %3647 = vmatpush2.msra.mxu0 %v3234
    %3648 = vmatprep.subr.mxu0 %v3231
    %3649 = vmatpush2.msra.mxu0 %v3230
    %3650 = vmatprep.mubr.f32.mxu0 %v2903
    %3651 = vmatmul.mubr.f32.gmra.mxu0 %v2902
    %v3652 = vpop.f32.mrf.mxu0
    %v3653 = vadd.f32 %v3582, %v3652
    %v3654 = vpop.f32.mrf.mxu0
    %v3655 = vadd.f32 %v3584, %v3654
    %3656 = vdwg.mxu0
    %3657 = vmatprep.subr.mxu0 %v3355
    %3658 = vmatpush1.msra.mxu0 %v3354
    %3659 = vmatprep.subr.mxu0 %v3351
    %3660 = vmatpush1.msra.mxu0 %v3350
    %3661 = vmatprep.subr.mxu0 %v3347
    %3662 = vmatpush1.msra.mxu0 %v3346
    %3663 = vmatprep.subr.mxu0 %v3343
    %3664 = vmatpush1.msra.mxu0 %v3342
    %3665 = vmatprep.subr.mxu0 %v3339
    %3666 = vmatpush1.msra.mxu0 %v3338
    %3667 = vmatprep.subr.mxu0 %v3335
    %3668 = vmatpush1.msra.mxu0 %v3334
    %3669 = vmatprep.subr.mxu0 %v3331
    %3670 = vmatpush1.msra.mxu0 %v3330
    %3671 = vmatprep.subr.mxu0 %v3327
    %3672 = vmatpush1.msra.mxu0 %v3326
    %3673 = vmatprep.subr.mxu0 %v3323
    %3674 = vmatpush1.msra.mxu0 %v3322
    %3675 = vmatprep.subr.mxu0 %v3319
    %3676 = vmatpush1.msra.mxu0 %v3318
    %3677 = vmatprep.subr.mxu0 %v3315
    %3678 = vmatpush1.msra.mxu0 %v3314
    %3679 = vmatprep.subr.mxu0 %v3311
    %3680 = vmatpush1.msra.mxu0 %v3310
    %3681 = vmatprep.subr.mxu0 %v3307
    %3682 = vmatpush1.msra.mxu0 %v3306
    %3683 = vmatprep.subr.mxu0 %v3303
    %3684 = vmatpush1.msra.mxu0 %v3302
    %3685 = vmatprep.subr.mxu0 %v3299
    %3686 = vmatpush1.msra.mxu0 %v3298
    %3687 = vmatprep.subr.mxu0 %v3295
    %3688 = vmatpush1.msra.mxu0 %v3294
    %3689 = vmatprep.subr.mxu0 %v3419
    %3690 = vmatpush2.msra.mxu0 %v3418
    %3691 = vmatprep.subr.mxu0 %v3415
    %3692 = vmatpush2.msra.mxu0 %v3414
    %3693 = vmatprep.subr.mxu0 %v3411
    %3694 = vmatpush2.msra.mxu0 %v3410
    %3695 = vmatprep.subr.mxu0 %v3407
    %3696 = vmatpush2.msra.mxu0 %v3406
    %3697 = vmatprep.subr.mxu0 %v3403
    %3698 = vmatpush2.msra.mxu0 %v3402
    %3699 = vmatprep.subr.mxu0 %v3399
    %3700 = vmatpush2.msra.mxu0 %v3398
    %3701 = vmatprep.subr.mxu0 %v3395
    %3702 = vmatpush2.msra.mxu0 %v3394
    %3703 = vmatprep.subr.mxu0 %v3391
    %3704 = vmatpush2.msra.mxu0 %v3390
    %3705 = vmatprep.subr.mxu0 %v3387
    %3706 = vmatpush2.msra.mxu0 %v3386
    %3707 = vmatprep.subr.mxu0 %v3383
    %3708 = vmatpush2.msra.mxu0 %v3382
    %3709 = vmatprep.subr.mxu0 %v3379
    %3710 = vmatpush2.msra.mxu0 %v3378
    %3711 = vmatprep.subr.mxu0 %v3375
    %3712 = vmatpush2.msra.mxu0 %v3374
    %3713 = vmatprep.subr.mxu0 %v3371
    %3714 = vmatpush2.msra.mxu0 %v3370
    %3715 = vmatprep.subr.mxu0 %v3367
    %3716 = vmatpush2.msra.mxu0 %v3366
    %3717 = vmatprep.subr.mxu0 %v3363
    %3718 = vmatpush2.msra.mxu0 %v3362
    %3719 = vmatprep.subr.mxu0 %v3359
    %3720 = vmatpush2.msra.mxu0 %v3358
    %3721 = vmatprep.mubr.f32.mxu0 %v2909
    %3722 = vmatmul.mubr.f32.gmra.mxu0 %v2908
    %v3723 = vpop.f32.mrf.mxu0
    %v3724 = vadd.f32 %v3653, %v3723
    %v3725 = vpop.f32.mrf.mxu0
    %v3726 = vadd.f32 %v3655, %v3725
    %3727 = vdwg.mxu0
    %3728 = vmatprep.subr.mxu0 %v2973
    %3729 = vmatpush1.msra.mxu0 %v2972
    %3730 = vmatprep.subr.mxu0 %v2969
    %3731 = vmatpush1.msra.mxu0 %v2968
    %3732 = vmatprep.subr.mxu0 %v2965
    %3733 = vmatpush1.msra.mxu0 %v2964
    %3734 = vmatprep.subr.mxu0 %v2961
    %3735 = vmatpush1.msra.mxu0 %v2960
    %3736 = vmatprep.subr.mxu0 %v2957
    %3737 = vmatpush1.msra.mxu0 %v2956
    %3738 = vmatprep.subr.mxu0 %v2953
    %3739 = vmatpush1.msra.mxu0 %v2952
    %3740 = vmatprep.subr.mxu0 %v2949
    %3741 = vmatpush1.msra.mxu0 %v2948
    %3742 = vmatprep.subr.mxu0 %v2945
    %3743 = vmatpush1.msra.mxu0 %v2944
    %3744 = vmatprep.subr.mxu0 %v2941
    %3745 = vmatpush1.msra.mxu0 %v2940
    %3746 = vmatprep.subr.mxu0 %v2937
    %3747 = vmatpush1.msra.mxu0 %v2936
    %3748 = vmatprep.subr.mxu0 %v2933
    %3749 = vmatpush1.msra.mxu0 %v2932
    %3750 = vmatprep.subr.mxu0 %v2929
    %3751 = vmatpush1.msra.mxu0 %v2928
    %3752 = vmatprep.subr.mxu0 %v2925
    %3753 = vmatpush1.msra.mxu0 %v2924
    %3754 = vmatprep.subr.mxu0 %v2921
    %3755 = vmatpush1.msra.mxu0 %v2920
    %3756 = vmatprep.subr.mxu0 %v2917
    %3757 = vmatpush1.msra.mxu0 %v2916
    %3758 = vmatprep.subr.mxu0 %v2913
    %3759 = vmatpush1.msra.mxu0 %v2912
    %3760 = vmatprep.subr.mxu0 %v3037
    %3761 = vmatpush2.msra.mxu0 %v3036
    %3762 = vmatprep.subr.mxu0 %v3033
    %3763 = vmatpush2.msra.mxu0 %v3032
    %3764 = vmatprep.subr.mxu0 %v3029
    %3765 = vmatpush2.msra.mxu0 %v3028
    %3766 = vmatprep.subr.mxu0 %v3025
    %3767 = vmatpush2.msra.mxu0 %v3024
    %3768 = vmatprep.subr.mxu0 %v3021
    %3769 = vmatpush2.msra.mxu0 %v3020
    %3770 = vmatprep.subr.mxu0 %v3017
    %3771 = vmatpush2.msra.mxu0 %v3016
    %3772 = vmatprep.subr.mxu0 %v3013
    %3773 = vmatpush2.msra.mxu0 %v3012
    %3774 = vmatprep.subr.mxu0 %v3009
    %3775 = vmatpush2.msra.mxu0 %v3008
    %3776 = vmatprep.subr.mxu0 %v3005
    %3777 = vmatpush2.msra.mxu0 %v3004
    %3778 = vmatprep.subr.mxu0 %v3001
    %3779 = vmatpush2.msra.mxu0 %v3000
    %3780 = vmatprep.subr.mxu0 %v2997
    %3781 = vmatpush2.msra.mxu0 %v2996
    %3782 = vmatprep.subr.mxu0 %v2993
    %3783 = vmatpush2.msra.mxu0 %v2992
    %3784 = vmatprep.subr.mxu0 %v2989
    %3785 = vmatpush2.msra.mxu0 %v2988
    %3786 = vmatprep.subr.mxu0 %v2985
    %3787 = vmatpush2.msra.mxu0 %v2984
    %3788 = vmatprep.subr.mxu0 %v2981
    %3789 = vmatpush2.msra.mxu0 %v2980
    %3790 = vmatprep.subr.mxu0 %v2977
    %3791 = vmatpush2.msra.mxu0 %v2976
    %3792 = vmatprep.mubr.f32.mxu0 %v2891
    %3793 = vmatmul.mubr.f32.gmra.mxu0 %v2890
    %v3794 = vpop.f32.mrf.mxu0
    %v3795 = vadd.f32 %v3435, %v3794
    %v3796 = vpop.f32.mrf.mxu0
    %v3797 = vadd.f32 %v3439, %v3796
    %3798 = vdwg.mxu0
    %3799 = vmatprep.subr.mxu0 %v3101
    %3800 = vmatpush1.msra.mxu0 %v3100
    %3801 = vmatprep.subr.mxu0 %v3097
    %3802 = vmatpush1.msra.mxu0 %v3096
    %3803 = vmatprep.subr.mxu0 %v3093
    %3804 = vmatpush1.msra.mxu0 %v3092
    %3805 = vmatprep.subr.mxu0 %v3089
    %3806 = vmatpush1.msra.mxu0 %v3088
    %3807 = vmatprep.subr.mxu0 %v3085
    %3808 = vmatpush1.msra.mxu0 %v3084
    %3809 = vmatprep.subr.mxu0 %v3081
    %3810 = vmatpush1.msra.mxu0 %v3080
    %3811 = vmatprep.subr.mxu0 %v3077
    %3812 = vmatpush1.msra.mxu0 %v3076
    %3813 = vmatprep.subr.mxu0 %v3073
    %3814 = vmatpush1.msra.mxu0 %v3072
    %3815 = vmatprep.subr.mxu0 %v3069
    %3816 = vmatpush1.msra.mxu0 %v3068
    %3817 = vmatprep.subr.mxu0 %v3065
    %3818 = vmatpush1.msra.mxu0 %v3064
    %3819 = vmatprep.subr.mxu0 %v3061
    %3820 = vmatpush1.msra.mxu0 %v3060
    %3821 = vmatprep.subr.mxu0 %v3057
    %3822 = vmatpush1.msra.mxu0 %v3056
    %3823 = vmatprep.subr.mxu0 %v3053
    %3824 = vmatpush1.msra.mxu0 %v3052
    %3825 = vmatprep.subr.mxu0 %v3049
    %3826 = vmatpush1.msra.mxu0 %v3048
    %3827 = vmatprep.subr.mxu0 %v3045
    %3828 = vmatpush1.msra.mxu0 %v3044
    %3829 = vmatprep.subr.mxu0 %v3041
    %3830 = vmatpush1.msra.mxu0 %v3040
    %3831 = vmatprep.subr.mxu0 %v3165
    %3832 = vmatpush2.msra.mxu0 %v3164
    %3833 = vmatprep.subr.mxu0 %v3161
    %3834 = vmatpush2.msra.mxu0 %v3160
    %3835 = vmatprep.subr.mxu0 %v3157
    %3836 = vmatpush2.msra.mxu0 %v3156
    %3837 = vmatprep.subr.mxu0 %v3153
    %3838 = vmatpush2.msra.mxu0 %v3152
    %3839 = vmatprep.subr.mxu0 %v3149
    %3840 = vmatpush2.msra.mxu0 %v3148
    %3841 = vmatprep.subr.mxu0 %v3145
    %3842 = vmatpush2.msra.mxu0 %v3144
    %3843 = vmatprep.subr.mxu0 %v3141
    %3844 = vmatpush2.msra.mxu0 %v3140
    %3845 = vmatprep.subr.mxu0 %v3137
    %3846 = vmatpush2.msra.mxu0 %v3136
    %3847 = vmatprep.subr.mxu0 %v3133
    %3848 = vmatpush2.msra.mxu0 %v3132
    %3849 = vmatprep.subr.mxu0 %v3129
    %3850 = vmatpush2.msra.mxu0 %v3128
    %3851 = vmatprep.subr.mxu0 %v3125
    %3852 = vmatpush2.msra.mxu0 %v3124
    %3853 = vmatprep.subr.mxu0 %v3121
    %3854 = vmatpush2.msra.mxu0 %v3120
    %3855 = vmatprep.subr.mxu0 %v3117
    %3856 = vmatpush2.msra.mxu0 %v3116
    %3857 = vmatprep.subr.mxu0 %v3113
    %3858 = vmatpush2.msra.mxu0 %v3112
    %3859 = vmatprep.subr.mxu0 %v3109
    %3860 = vmatpush2.msra.mxu0 %v3108
    %3861 = vmatprep.subr.mxu0 %v3105
    %3862 = vmatpush2.msra.mxu0 %v3104
    %3863 = vmatprep.mubr.f32.mxu0 %v2897
    %3864 = vmatmul.mubr.f32.gmra.mxu0 %v2896
    %v3865 = vpop.f32.mrf.mxu0
    %v3866 = vadd.f32 %v3795, %v3865
    %v3867 = vpop.f32.mrf.mxu0
    %v3868 = vadd.f32 %v3797, %v3867
    %3869 = vdwg.mxu0
    %3870 = vmatprep.subr.mxu0 %v3229
    %3871 = vmatpush1.msra.mxu0 %v3228
    %3872 = vmatprep.subr.mxu0 %v3225
    %3873 = vmatpush1.msra.mxu0 %v3224
    %3874 = vmatprep.subr.mxu0 %v3221
    %3875 = vmatpush1.msra.mxu0 %v3220
    %3876 = vmatprep.subr.mxu0 %v3217
    %3877 = vmatpush1.msra.mxu0 %v3216
    %3878 = vmatprep.subr.mxu0 %v3213
    %3879 = vmatpush1.msra.mxu0 %v3212
    %3880 = vmatprep.subr.mxu0 %v3209
    %3881 = vmatpush1.msra.mxu0 %v3208
    %3882 = vmatprep.subr.mxu0 %v3205
    %3883 = vmatpush1.msra.mxu0 %v3204
    %3884 = vmatprep.subr.mxu0 %v3201
    %3885 = vmatpush1.msra.mxu0 %v3200
    %3886 = vmatprep.subr.mxu0 %v3197
    %3887 = vmatpush1.msra.mxu0 %v3196
    %3888 = vmatprep.subr.mxu0 %v3193
    %3889 = vmatpush1.msra.mxu0 %v3192
    %3890 = vmatprep.subr.mxu0 %v3189
    %3891 = vmatpush1.msra.mxu0 %v3188
    %3892 = vmatprep.subr.mxu0 %v3185
    %3893 = vmatpush1.msra.mxu0 %v3184
    %3894 = vmatprep.subr.mxu0 %v3181
    %3895 = vmatpush1.msra.mxu0 %v3180
    %3896 = vmatprep.subr.mxu0 %v3177
    %3897 = vmatpush1.msra.mxu0 %v3176
    %3898 = vmatprep.subr.mxu0 %v3173
    %3899 = vmatpush1.msra.mxu0 %v3172
    %3900 = vmatprep.subr.mxu0 %v3169
    %3901 = vmatpush1.msra.mxu0 %v3168
    %3902 = vmatprep.subr.mxu0 %v3293
    %3903 = vmatpush2.msra.mxu0 %v3292
    %3904 = vmatprep.subr.mxu0 %v3289
    %3905 = vmatpush2.msra.mxu0 %v3288
    %3906 = vmatprep.subr.mxu0 %v3285
    %3907 = vmatpush2.msra.mxu0 %v3284
    %3908 = vmatprep.subr.mxu0 %v3281
    %3909 = vmatpush2.msra.mxu0 %v3280
    %3910 = vmatprep.subr.mxu0 %v3277
    %3911 = vmatpush2.msra.mxu0 %v3276
    %3912 = vmatprep.subr.mxu0 %v3273
    %3913 = vmatpush2.msra.mxu0 %v3272
    %3914 = vmatprep.subr.mxu0 %v3269
    %3915 = vmatpush2.msra.mxu0 %v3268
    %3916 = vmatprep.subr.mxu0 %v3265
    %3917 = vmatpush2.msra.mxu0 %v3264
    %3918 = vmatprep.subr.mxu0 %v3261
    %3919 = vmatpush2.msra.mxu0 %v3260
    %3920 = vmatprep.subr.mxu0 %v3257
    %3921 = vmatpush2.msra.mxu0 %v3256
    %3922 = vmatprep.subr.mxu0 %v3253
    %3923 = vmatpush2.msra.mxu0 %v3252
    %3924 = vmatprep.subr.mxu0 %v3249
    %3925 = vmatpush2.msra.mxu0 %v3248
    %3926 = vmatprep.subr.mxu0 %v3245
    %3927 = vmatpush2.msra.mxu0 %v3244
    %3928 = vmatprep.subr.mxu0 %v3241
    %3929 = vmatpush2.msra.mxu0 %v3240
    %3930 = vmatprep.subr.mxu0 %v3237
    %3931 = vmatpush2.msra.mxu0 %v3236
    %3932 = vmatprep.subr.mxu0 %v3233
    %3933 = vmatpush2.msra.mxu0 %v3232
    %3934 = vmatprep.mubr.f32.mxu0 %v2903
    %3935 = vmatmul.mubr.f32.gmra.mxu0 %v2902
    %v3936 = vpop.f32.mrf.mxu0
    %v3937 = vadd.f32 %v3866, %v3936
    %v3938 = vpop.f32.mrf.mxu0
    %v3939 = vadd.f32 %v3868, %v3938
    %3940 = vdwg.mxu0
    %3941 = vmatprep.subr.mxu0 %v3357
    %3942 = vmatpush1.msra.mxu0 %v3356
    %3943 = vmatprep.subr.mxu0 %v3353
    %3944 = vmatpush1.msra.mxu0 %v3352
    %3945 = vmatprep.subr.mxu0 %v3349
    %3946 = vmatpush1.msra.mxu0 %v3348
    %3947 = vmatprep.subr.mxu0 %v3345
    %3948 = vmatpush1.msra.mxu0 %v3344
    %3949 = vmatprep.subr.mxu0 %v3341
    %3950 = vmatpush1.msra.mxu0 %v3340
    %3951 = vmatprep.subr.mxu0 %v3337
    %3952 = vmatpush1.msra.mxu0 %v3336
    %3953 = vmatprep.subr.mxu0 %v3333
    %3954 = vmatpush1.msra.mxu0 %v3332
    %3955 = vmatprep.subr.mxu0 %v3329
    %3956 = vmatpush1.msra.mxu0 %v3328
    %3957 = vmatprep.subr.mxu0 %v3325
    %3958 = vmatpush1.msra.mxu0 %v3324
    %3959 = vmatprep.subr.mxu0 %v3321
    %3960 = vmatpush1.msra.mxu0 %v3320
    %3961 = vmatprep.subr.mxu0 %v3317
    %3962 = vmatpush1.msra.mxu0 %v3316
    %3963 = vmatprep.subr.mxu0 %v3313
    %3964 = vmatpush1.msra.mxu0 %v3312
    %3965 = vmatprep.subr.mxu0 %v3309
    %3966 = vmatpush1.msra.mxu0 %v3308
    %3967 = vmatprep.subr.mxu0 %v3305
    %3968 = vmatpush1.msra.mxu0 %v3304
    %3969 = vmatprep.subr.mxu0 %v3301
    %3970 = vmatpush1.msra.mxu0 %v3300
    %3971 = vmatprep.subr.mxu0 %v3297
    %3972 = vmatpush1.msra.mxu0 %v3296
    %3973 = vmatprep.subr.mxu0 %v3421
    %3974 = vmatpush2.msra.mxu0 %v3420
    %3975 = vmatprep.subr.mxu0 %v3417
    %3976 = vmatpush2.msra.mxu0 %v3416
    %3977 = vmatprep.subr.mxu0 %v3413
    %3978 = vmatpush2.msra.mxu0 %v3412
    %3979 = vmatprep.subr.mxu0 %v3409
    %3980 = vmatpush2.msra.mxu0 %v3408
    %3981 = vmatprep.subr.mxu0 %v3405
    %3982 = vmatpush2.msra.mxu0 %v3404
    %3983 = vmatprep.subr.mxu0 %v3401
    %3984 = vmatpush2.msra.mxu0 %v3400
    %3985 = vmatprep.subr.mxu0 %v3397
    %3986 = vmatpush2.msra.mxu0 %v3396
    %3987 = vmatprep.subr.mxu0 %v3393
    %3988 = vmatpush2.msra.mxu0 %v3392
    %3989 = vmatprep.subr.mxu0 %v3389
    %3990 = vmatpush2.msra.mxu0 %v3388
    %3991 = vmatprep.subr.mxu0 %v3385
    %3992 = vmatpush2.msra.mxu0 %v3384
    %3993 = vmatprep.subr.mxu0 %v3381
    %3994 = vmatpush2.msra.mxu0 %v3380
    %3995 = vmatprep.subr.mxu0 %v3377
    %3996 = vmatpush2.msra.mxu0 %v3376
    %3997 = vmatprep.subr.mxu0 %v3373
    %3998 = vmatpush2.msra.mxu0 %v3372
    %3999 = vmatprep.subr.mxu0 %v3369
    %4000 = vmatpush2.msra.mxu0 %v3368
    %4001 = vmatprep.subr.mxu0 %v3365
    %4002 = vmatpush2.msra.mxu0 %v3364
    %4003 = vmatprep.subr.mxu0 %v3361
    %4004 = vmatpush2.msra.mxu0 %v3360
    %4005 = vmatprep.mubr.f32.mxu0 %v2909
    %4006 = vmatmul.mubr.f32.gmra.mxu0 %v2908
    %v4007 = vpop.f32.mrf.mxu0
    %v4008 = vadd.f32 %v3937, %v4007
    %v4009 = vpop.f32.mrf.mxu0
    %v4010 = vadd.f32 %v3939, %v4009
    %4011 = vdwg.mxu0
    %v4012 = vmax.f32 %v3724, 0.0
    %v4013 = vmax.f32 %v3726, 0.0
    %v4014 = vmax.f32 %v4008, 0.0
    %v4015 = vmax.f32 %v4010, 0.0
    %v4016 = vld [vmem:[#allocation13] sm:$0xff]
    %v4017 = vld [vmem:[#allocation13 + $0x8] sm:$0xff]
    %v4018 = vld [vmem:[#allocation13 + $0x10] sm:$0xff]
    %v4019 = vld [vmem:[#allocation13 + $0x18] sm:$0xff]
    %v4020 = vld [vmem:[#allocation13 + $0x20] sm:$0xff]
    %v4021 = vld [vmem:[#allocation13 + $0x28] sm:$0xff]
    %v4022 = vld [vmem:[#allocation13 + $0x30] sm:$0xff]
    %v4023 = vld [vmem:[#allocation13 + $0x38] sm:$0xff]
    %v4024 = vld [vmem:[#allocation13 + $0x40] sm:$0xff]
    %v4025 = vld [vmem:[#allocation13 + $0x48] sm:$0xff]
    %v4026 = vld [vmem:[#allocation13 + $0x50] sm:$0xff]
    %v4027 = vld [vmem:[#allocation13 + $0x58] sm:$0xff]
    %v4028 = vld [vmem:[#allocation13 + $0x60] sm:$0xff]
    %v4029 = vld [vmem:[#allocation13 + $0x68] sm:$0xff]
    %v4030 = vld [vmem:[#allocation13 + $0x70] sm:$0xff]
    %v4031 = vld [vmem:[#allocation13 + $0x78] sm:$0xff]
    %v4032 = vld [vmem:[#allocation13 + $0x80] sm:$0xff]
    %v4033 = vld [vmem:[#allocation13 + $0x88] sm:$0xff]
    %v4034 = vld [vmem:[#allocation13 + $0x90] sm:$0xff]
    %v4035 = vld [vmem:[#allocation13 + $0x98] sm:$0xff]
    %v4036 = vld [vmem:[#allocation13 + $0xa0] sm:$0xff]
    %v4037 = vld [vmem:[#allocation13 + $0xa8] sm:$0xff]
    %v4038 = vld [vmem:[#allocation13 + $0xb0] sm:$0xff]
    %v4039 = vld [vmem:[#allocation13 + $0xb8] sm:$0xff]
    %v4040 = vld [vmem:[#allocation13 + $0xc0] sm:$0xff]
    %v4041 = vld [vmem:[#allocation13 + $0xc8] sm:$0xff]
    %v4042 = vld [vmem:[#allocation13 + $0xd0] sm:$0xff]
    %v4043 = vld [vmem:[#allocation13 + $0xd8] sm:$0xff]
    %v4044 = vld [vmem:[#allocation13 + $0xe0] sm:$0xff]
    %v4045 = vld [vmem:[#allocation13 + $0xe8] sm:$0xff]
    %v4046 = vld [vmem:[#allocation13 + $0xf0] sm:$0xff]
    %v4047 = vld [vmem:[#allocation13 + $0xf8] sm:$0xff]
    %v4048 = vld [vmem:[#allocation13 + $0x100] sm:$0xff]
    %v4049 = vld [vmem:[#allocation13 + $0x108] sm:$0xff]
    %v4050 = vld [vmem:[#allocation13 + $0x110] sm:$0xff]
    %v4051 = vld [vmem:[#allocation13 + $0x118] sm:$0xff]
    %v4052 = vld [vmem:[#allocation13 + $0x120] sm:$0xff]
    %v4053 = vld [vmem:[#allocation13 + $0x128] sm:$0xff]
    %v4054 = vld [vmem:[#allocation13 + $0x130] sm:$0xff]
    %v4055 = vld [vmem:[#allocation13 + $0x138] sm:$0xff]
    %v4056 = vld [vmem:[#allocation13 + $0x140] sm:$0xff]
    %v4057 = vld [vmem:[#allocation13 + $0x148] sm:$0xff]
    %v4058 = vld [vmem:[#allocation13 + $0x150] sm:$0xff]
    %v4059 = vld [vmem:[#allocation13 + $0x158] sm:$0xff]
    %v4060 = vld [vmem:[#allocation13 + $0x160] sm:$0xff]
    %v4061 = vld [vmem:[#allocation13 + $0x168] sm:$0xff]
    %v4062 = vld [vmem:[#allocation13 + $0x170] sm:$0xff]
    %v4063 = vld [vmem:[#allocation13 + $0x178] sm:$0xff]
    %v4064 = vld [vmem:[#allocation13 + $0x180] sm:$0xff]
    %v4065 = vld [vmem:[#allocation13 + $0x188] sm:$0xff]
    %v4066 = vld [vmem:[#allocation13 + $0x190] sm:$0xff]
    %v4067 = vld [vmem:[#allocation13 + $0x198] sm:$0xff]
    %v4068 = vld [vmem:[#allocation13 + $0x1a0] sm:$0xff]
    %v4069 = vld [vmem:[#allocation13 + $0x1a8] sm:$0xff]
    %v4070 = vld [vmem:[#allocation13 + $0x1b0] sm:$0xff]
    %v4071 = vld [vmem:[#allocation13 + $0x1b8] sm:$0xff]
    %v4072 = vld [vmem:[#allocation13 + $0x1c0] sm:$0xff]
    %v4073 = vld [vmem:[#allocation13 + $0x1c8] sm:$0xff]
    %v4074 = vld [vmem:[#allocation13 + $0x1d0] sm:$0xff]
    %v4075 = vld [vmem:[#allocation13 + $0x1d8] sm:$0xff]
    %v4076 = vld [vmem:[#allocation13 + $0x1e0] sm:$0xff]
    %v4077 = vld [vmem:[#allocation13 + $0x1e8] sm:$0xff]
    %v4078 = vld [vmem:[#allocation13 + $0x1f0] sm:$0xff]
    %v4079 = vld [vmem:[#allocation13 + $0x1f8] sm:$0xff]
    %v4080 = vld [vmem:[#allocation14] sm:$0x1]
    %v4082 = vlaneseq
    %v4083 = vshrl.u32 %v4082, 7
    %v4084 = vsub.s32 0, %v4083
    %v4085 = vrot.slane %v4080, %v4084
    %4087 = vmatprep.subr.mxu0 0.0
    %4088 = vmatpush1.msra.mxu0 %v4031
    %4089 = vmatprep.subr.mxu0 0.0
    %4090 = vmatpush1.msra.mxu0 %v4030
    %4091 = vmatprep.subr.mxu0 0.0
    %4092 = vmatpush1.msra.mxu0 %v4029
    %4093 = vmatprep.subr.mxu0 0.0
    %4094 = vmatpush1.msra.mxu0 %v4028
    %4095 = vmatprep.subr.mxu0 0.0
    %4096 = vmatpush1.msra.mxu0 %v4027
    %4097 = vmatprep.subr.mxu0 0.0
    %4098 = vmatpush1.msra.mxu0 %v4026
    %4099 = vmatprep.subr.mxu0 0.0
    %4100 = vmatpush1.msra.mxu0 %v4025
    %4101 = vmatprep.subr.mxu0 0.0
    %4102 = vmatpush1.msra.mxu0 %v4024
    %4103 = vmatprep.subr.mxu0 0.0
    %4104 = vmatpush1.msra.mxu0 %v4023
    %4105 = vmatprep.subr.mxu0 0.0
    %4106 = vmatpush1.msra.mxu0 %v4022
    %4107 = vmatprep.subr.mxu0 0.0
    %4108 = vmatpush1.msra.mxu0 %v4021
    %4109 = vmatprep.subr.mxu0 0.0
    %4110 = vmatpush1.msra.mxu0 %v4020
    %4111 = vmatprep.subr.mxu0 0.0
    %4112 = vmatpush1.msra.mxu0 %v4019
    %4113 = vmatprep.subr.mxu0 0.0
    %4114 = vmatpush1.msra.mxu0 %v4018
    %4115 = vmatprep.subr.mxu0 0.0
    %4116 = vmatpush1.msra.mxu0 %v4017
    %4117 = vmatprep.subr.mxu0 0.0
    %4118 = vmatpush1.msra.mxu0 %v4016
    %4119 = vmatprep.subr.mxu0 0.0
    %4120 = vmatpush2.msra.mxu0 %v4047
    %4121 = vmatprep.subr.mxu0 0.0
    %4122 = vmatpush2.msra.mxu0 %v4046
    %4123 = vmatprep.subr.mxu0 0.0
    %4124 = vmatpush2.msra.mxu0 %v4045
    %4125 = vmatprep.subr.mxu0 0.0
    %4126 = vmatpush2.msra.mxu0 %v4044
    %4127 = vmatprep.subr.mxu0 0.0
    %4128 = vmatpush2.msra.mxu0 %v4043
    %4129 = vmatprep.subr.mxu0 0.0
    %4130 = vmatpush2.msra.mxu0 %v4042
    %4131 = vmatprep.subr.mxu0 0.0
    %4132 = vmatpush2.msra.mxu0 %v4041
    %4133 = vmatprep.subr.mxu0 0.0
    %4134 = vmatpush2.msra.mxu0 %v4040
    %4135 = vmatprep.subr.mxu0 0.0
    %4136 = vmatpush2.msra.mxu0 %v4039
    %4137 = vmatprep.subr.mxu0 0.0
    %4138 = vmatpush2.msra.mxu0 %v4038
    %4139 = vmatprep.subr.mxu0 0.0
    %4140 = vmatpush2.msra.mxu0 %v4037
    %4141 = vmatprep.subr.mxu0 0.0
    %4142 = vmatpush2.msra.mxu0 %v4036
    %4143 = vmatprep.subr.mxu0 0.0
    %4144 = vmatpush2.msra.mxu0 %v4035
    %4145 = vmatprep.subr.mxu0 0.0
    %4146 = vmatpush2.msra.mxu0 %v4034
    %4147 = vmatprep.subr.mxu0 0.0
    %4148 = vmatpush2.msra.mxu0 %v4033
    %4149 = vmatprep.subr.mxu0 0.0
    %4150 = vmatpush2.msra.mxu0 %v4032
    %4151 = vmatprep.mubr.f32.mxu0 %v4013
    %4152 = vmatmul.mubr.f32.gmra.mxu0 %v4012
    %v4153 = vpop.f32.mrf.mxu0
    %v4154 = vadd.f32 %v4085, %v4153
    %v4155 = vpop.f32.mrf.mxu0
    %4156 = vdwg.mxu0
    %4157 = vmatprep.subr.mxu0 0.0
    %4158 = vmatpush1.msra.mxu0 %v4063
    %4159 = vmatprep.subr.mxu0 0.0
    %4160 = vmatpush1.msra.mxu0 %v4062
    %4161 = vmatprep.subr.mxu0 0.0
    %4162 = vmatpush1.msra.mxu0 %v4061
    %4163 = vmatprep.subr.mxu0 0.0
    %4164 = vmatpush1.msra.mxu0 %v4060
    %4165 = vmatprep.subr.mxu0 0.0
    %4166 = vmatpush1.msra.mxu0 %v4059
    %4167 = vmatprep.subr.mxu0 0.0
    %4168 = vmatpush1.msra.mxu0 %v4058
    %4169 = vmatprep.subr.mxu0 0.0
    %4170 = vmatpush1.msra.mxu0 %v4057
    %4171 = vmatprep.subr.mxu0 0.0
    %4172 = vmatpush1.msra.mxu0 %v4056
    %4173 = vmatprep.subr.mxu0 0.0
    %4174 = vmatpush1.msra.mxu0 %v4055
    %4175 = vmatprep.subr.mxu0 0.0
    %4176 = vmatpush1.msra.mxu0 %v4054
    %4177 = vmatprep.subr.mxu0 0.0
    %4178 = vmatpush1.msra.mxu0 %v4053
    %4179 = vmatprep.subr.mxu0 0.0
    %4180 = vmatpush1.msra.mxu0 %v4052
    %4181 = vmatprep.subr.mxu0 0.0
    %4182 = vmatpush1.msra.mxu0 %v4051
    %4183 = vmatprep.subr.mxu0 0.0
    %4184 = vmatpush1.msra.mxu0 %v4050
    %4185 = vmatprep.subr.mxu0 0.0
    %4186 = vmatpush1.msra.mxu0 %v4049
    %4187 = vmatprep.subr.mxu0 0.0
    %4188 = vmatpush1.msra.mxu0 %v4048
    %4189 = vmatprep.subr.mxu0 0.0
    %4190 = vmatpush2.msra.mxu0 %v4079
    %4191 = vmatprep.subr.mxu0 0.0
    %4192 = vmatpush2.msra.mxu0 %v4078
    %4193 = vmatprep.subr.mxu0 0.0
    %4194 = vmatpush2.msra.mxu0 %v4077
    %4195 = vmatprep.subr.mxu0 0.0
    %4196 = vmatpush2.msra.mxu0 %v4076
    %4197 = vmatprep.subr.mxu0 0.0
    %4198 = vmatpush2.msra.mxu0 %v4075
    %4199 = vmatprep.subr.mxu0 0.0
    %4200 = vmatpush2.msra.mxu0 %v4074
    %4201 = vmatprep.subr.mxu0 0.0
    %4202 = vmatpush2.msra.mxu0 %v4073
    %4203 = vmatprep.subr.mxu0 0.0
    %4204 = vmatpush2.msra.mxu0 %v4072
    %4205 = vmatprep.subr.mxu0 0.0
    %4206 = vmatpush2.msra.mxu0 %v4071
    %4207 = vmatprep.subr.mxu0 0.0
    %4208 = vmatpush2.msra.mxu0 %v4070
    %4209 = vmatprep.subr.mxu0 0.0
    %4210 = vmatpush2.msra.mxu0 %v4069
    %4211 = vmatprep.subr.mxu0 0.0
    %4212 = vmatpush2.msra.mxu0 %v4068
    %4213 = vmatprep.subr.mxu0 0.0
    %4214 = vmatpush2.msra.mxu0 %v4067
    %4215 = vmatprep.subr.mxu0 0.0
    %4216 = vmatpush2.msra.mxu0 %v4066
    %4217 = vmatprep.subr.mxu0 0.0
    %4218 = vmatpush2.msra.mxu0 %v4065
    %4219 = vmatprep.subr.mxu0 0.0
    %4220 = vmatpush2.msra.mxu0 %v4064
    %4221 = vmatprep.mubr.f32.mxu0 %v4015
    %4222 = vmatmul.mubr.f32.gmra.mxu0 %v4014
    %v4223 = vpop.f32.mrf.mxu0
    %v4224 = vadd.f32 %v4154, %v4223
    %v4225 = vpop.f32.mrf.mxu0
    %4226 = vdwg.mxu0
    %vm4227 = vcmask 80896
    %v4228 = vsel %vm4227, %v4224, -inf
    %4229 = vmax.xlane.f32.xlu0 %v4228
    %v4230 = vpop.xlane.xlu0 %4229
    %v4231 = vsub.f32 %v4224, %v4230
    %v4232 = vmul.f32 %v4231, 1.442695
    %v4233 = vpow.pop %v4232
    %v4234 = vsel %vm4227, %v4233, 0.0
    %4235 = vadd.xlane.f32.xlu0 %v4234
    %v4236 = vpop.xlane.xlu0 %4235
    %v4237 = vlog2.pop %v4236
    %v4238 = vmul.f32 %v4237, 0.6931472
    %v4239 = vadd.f32 %v4230, %v4238
    %v4240 = vsub.f32 %v4224, %v4239
    %4241 = vst [vmem:[%s9] sm:$0xff] %v4240
    // Predicated region
    $region70: #{simplenet_forward.1} parent=1 // pred_check
      _
    $region71: #{simplenet_forward.1} parent=1 // pred_check_branch
      %4243 = sbr.rel (0) target = $region73
    $region72: #{simplenet_forward.1} parent=1 // pred_region
      _
    $region73: #{simplenet_forward.1} parent=1 // pred_fallthru
      _
    // Predicated region
    $region74: #{simplenet_forward.1} parent=1 // pred_check
      _
    $region75: #{simplenet_forward.1} parent=1 // pred_check_branch
      %4245 = sbr.rel (0) target = $region77
    $region76: #{simplenet_forward.1} parent=1 // pred_region
      _
    $region77: #{simplenet_forward.1} parent=1 // pred_fallthru
      _
    %4246 = vsyncpa [#allocation4], 1
    %4247 = vsyncpa [#allocation6], 1
    %4248 = vsyncpa [#allocation9], 1
    %4249 = vsyncpa [#allocation12], 1
    %4250 = vsyncpa [#allocation15], 1

</llo_original>
